<compile_context>
chip_gen: v6e
topology: v6e:2x2x1
jax: 0.10.0
libtpu: 0.0.40
codegen_flags: <defaults>
</compile_context>

<pallas_src>
import jax
import jax.numpy as jnp
from jax import lax
from jax.experimental import pallas as pl
from jax.experimental.pallas import tpu as pltpu


# ----------------------------------------------------------------------------
# small helpers
# ----------------------------------------------------------------------------
def _round_up(x, m):
    return ((x + m - 1) // m) * m


def _pad_to(x, shape):
    return jnp.pad(x, [(0, s - d) for d, s in zip(x.shape, shape)])


def _vmem_limit_bytes():
    """Per-core VMEM limit to request (with headroom); generation aware."""
    cap = 64 * 1024 * 1024                      # conservative fallback (v7x)
    try:
        info = pltpu.get_tpu_info()
        cap = int(getattr(info, "vmem_capacity_bytes", cap)) or cap
    except Exception:
        pass
    return int(min(cap * 7 // 8, 112 * 1024 * 1024))


def _resident_weight_bytes(arrs):
    # worst case: every resident weight is double-buffered by the pipeline
    return 2 * sum(int(a.size) * a.dtype.itemsize for a in arrs)


def _pick_block_rows(n, budget, per_row, fixed, cap=512):
    """Largest multiple-of-8 batch block that fits the VMEM byte budget,
    capped so the parallel grid axis has >= 2 steps (megacore) when n allows."""
    avail = max(int(budget) - int(fixed), 8 * per_row)
    blk = (avail // per_row) // 8 * 8
    blk = max(8, min(int(blk), cap))
    n8 = _round_up(n, 8)
    if n8 >= 16:
        blk = min(blk, max(8, (n8 // 2) // 8 * 8))
    return int(min(blk, n8))


def _hint_mult(x, m):
    """Alignment hint for dynamic slice starts (no-op on static ints)."""
    if isinstance(x, int):
        return x
    return pl.multiple_of(x, m & (-m))          # largest pow2 divisor of m (>= 8)


def _run_recurrence(T, step_fn, init, max_unroll=4):
    """LSTM time loop: fully unrolled when short, else fori_loop with a
    python-unrolled body of U steps (keeps LLO scheduling visibility)."""
    if T <= max_unroll:
        carry = init
        for s in range(T):
            carry = step_fn(s, carry)
        return carry
    U = next(u for u in range(max_unroll, 0, -1) if T % u == 0)

    def body(i, carry):
        for u in range(U):
            carry = step_fn(i * U + u, carry)
        return carry

    return lax.fori_loop(0, T // U, body, init)


def _lstm_cell(gates, c, G):
    """PyTorch gate order i, f, g, o; gates is (rows, 4*G) f32."""
    i = jax.nn.sigmoid(gates[:, 0 * G:1 * G])
    f = jax.nn.sigmoid(gates[:, 1 * G:2 * G])
    g = jnp.tanh(gates[:, 2 * G:3 * G])
    o = jax.nn.sigmoid(gates[:, 3 * G:4 * G])
    c_new = f * c + i * g
    return o * jnp.tanh(c_new), c_new


# ----------------------------------------------------------------------------
# Kernel A: path BiLSTM + fused pathlinear epilogue
# ----------------------------------------------------------------------------
def _path_bilstm_kernel(x_ref, wihf_ref, wihb_ref, bf_ref, bb_ref,
                        whf_ref, whb_ref, wep_ref, bp_ref,
                        out_ref, xpf_ref, xpb_ref):
    T, NB, E = x_ref.shape
    G = whf_ref.shape[0]                 # padded hidden width
    KP = out_ref.shape[1]                # padded pathlinear output width

    # Hoisted per-direction input projection with the fused bias folded in once
    # (the per-step bias broadcast is gone).  Row t*NB + n == (time t, batch n).
    x2d = x_ref[...].reshape(T * NB, E)
    xpf_ref[...] = (jnp.dot(x2d, wihf_ref[...], preferred_element_type=jnp.float32)
                    + bf_ref[...])
    xpb_ref[...] = (jnp.dot(x2d, wihb_ref[...], preferred_element_type=jnp.float32)
                    + bb_ref[...])

    hoist = G <= 64                      # avoid vreg spills for large weights
    whf_v = whf_ref[...] if hoist else None
    whb_v = whb_ref[...] if hoist else None

    def step(t, carry):
        hf, cf, hb, cb, acc = carry
        tt = T - 1 - t
        xp_f = xpf_ref[pl.ds(_hint_mult(t * NB, NB), NB), :]
        xp_b = xpb_ref[pl.ds(_hint_mult(tt * NB, NB), NB), :]
        whf = whf_v if hoist else whf_ref[...]
        whb = whb_v if hoist else whb_ref[...]
        gates_f = xp_f + jnp.dot(hf.astype(jnp.bfloat16), whf,
                                 preferred_element_type=jnp.float32)
        gates_b = xp_b + jnp.dot(hb.astype(jnp.bfloat16), whb,
                                 preferred_element_type=jnp.float32)
        hf, cf = _lstm_cell(gates_f, cf, G)
        hb, cb = _lstm_cell(gates_b, cb, G)
        # Fused pathlinear epilogue: ONE matmul per step,
        # wep[t] = [W_fwd[t]; W_bwd[T-1-t]] stacked at prep time.
        hcat = jnp.concatenate([hf, hb], axis=1).astype(jnp.bfloat16)
        acc = acc + jnp.dot(hcat, wep_ref[t], preferred_element_type=jnp.float32)
        return hf, cf, hb, cb, acc

    zh = jnp.zeros((NB, G), jnp.float32)
    zacc = jnp.zeros((NB, KP), jnp.float32)
    unroll = 8 if G <= 64 else 4
    *_, acc = _run_recurrence(T, step, (zh, zh, zh, zh, zacc), max_unroll=unroll)
    out_ref[...] = (acc + bp_ref[...]).astype(out_ref.dtype)


def path_branch(x_tm, kp, vmem_limit):
    """x_tm: (T, N, e) bf16 time-major, N = c*b.
    Returns (N, KP) bf16 = pathlinear(BiLSTM(x))."""
    T, N, E = x_tm.shape
    G = kp["path_whh_f"].shape[0]
    KP = kp["path_bout"].shape[1]

    weights = [kp[n] for n in ("path_wih_f", "path_wih_b", "path_b_f", "path_b_b",
                               "path_whh_f", "path_whh_b", "path_wep", "path_bout")]
    # bytes that scale with one batch row: f32 scratch (+ matmul temp) + 2x
    # double-buffered bf16 input + 2x bf16 output block
    per_row = T * (12 * G * 4 + 2 * E * 2) + 2 * KP * 2
    NB = _pick_block_rows(N, budget=int(vmem_limit * 0.6), per_row=per_row,
                          fixed=_resident_weight_bytes(weights))
    Npad = _round_up(N, NB)
    if Npad != N:
        x_tm = jnp.pad(x_tm, ((0, 0), (0, Npad - N), (0, 0)))

    out = pl.pallas_call(
        _path_bilstm_kernel,
        out_shape=jax.ShapeDtypeStruct((Npad, KP), jnp.bfloat16),
        grid_spec=pltpu.PrefetchScalarGridSpec(
            num_scalar_prefetch=0,
            grid=(Npad // NB,),
            in_specs=[
                pl.BlockSpec((T, NB, E), lambda i: (0, i, 0)),
                pl.BlockSpec(kp["path_wih_f"].shape, lambda i: (0, 0)),
                pl.BlockSpec(kp["path_wih_b"].shape, lambda i: (0, 0)),
                pl.BlockSpec(kp["path_b_f"].shape, lambda i: (0, 0)),
                pl.BlockSpec(kp["path_b_b"].shape, lambda i: (0, 0)),
                pl.BlockSpec(kp["path_whh_f"].shape, lambda i: (0, 0)),
                pl.BlockSpec(kp["path_whh_b"].shape, lambda i: (0, 0)),
                pl.BlockSpec(kp["path_wep"].shape, lambda i: (0, 0, 0)),
                pl.BlockSpec(kp["path_bout"].shape, lambda i: (0, 0)),
            ],
            out_specs=pl.BlockSpec((NB, KP), lambda i: (i, 0)),
            scratch_shapes=[pltpu.VMEM((T * NB, 4 * G), jnp.float32),
                            pltpu.VMEM((T * NB, 4 * G), jnp.float32)],
        ),
        compiler_params=pltpu.CompilerParams(
            dimension_semantics=("parallel",),
            vmem_limit_bytes=vmem_limit),
    )(x_tm, kp["path_wih_f"], kp["path_wih_b"], kp["path_b_f"], kp["path_b_b"],
      kp["path_whh_f"], kp["path_whh_b"], kp["path_wep"], kp["path_bout"])
    return out[:N] if Npad != N else out


# ----------------------------------------------------------------------------
# Kernel B: tokenfc(tanh) + context BiLSTM + fused outputfc epilogue
# ----------------------------------------------------------------------------
def _context_bilstm_kernel(path_ref, tok_ref, wtok_ref, btok_ref,
                           wihpf_ref, wihpb_ref, wihtf_ref, wihtb_ref,
                           whf_ref, whb_ref, bf_ref, bb_ref,
                           wep_ref, bo_ref, out_ref, xpf_ref, xpb_ref):
    C, BB, KP = path_ref.shape
    G = whf_ref.shape[0]                 # padded context hidden (2h)
    EP = out_ref.shape[1]                # padded output embedding width

    # Fused tokenfc + tanh (never touches HBM).
    path2d = path_ref[...].reshape(C * BB, KP)
    tok2d = tok_ref[...].reshape(C * BB, tok_ref.shape[2])
    tokfc = jnp.tanh(
        jnp.dot(tok2d, wtok_ref[...], preferred_element_type=jnp.float32)
        + btok_ref[...]).astype(jnp.bfloat16)

    # Hoisted per-direction input projection of the concatenated context,
    # expressed as path/token matmuls (no (b,c,2k) concat), biases folded once.
    xpf_ref[...] = (
        jnp.dot(path2d, wihpf_ref[...], preferred_element_type=jnp.float32)
        + jnp.dot(tokfc, wihtf_ref[...], preferred_element_type=jnp.float32)
        + bf_ref[...])
    xpb_ref[...] = (
        jnp.dot(path2d, wihpb_ref[...], preferred_element_type=jnp.float32)
        + jnp.dot(tokfc, wihtb_ref[...], preferred_element_type=jnp.float32)
        + bb_ref[...])

    hoist = G <= 64
    whf_v = whf_ref[...] if hoist else None
    whb_v = whb_ref[...] if hoist else None

    def step(t, carry):
        hf, cf, hb, cb, acc = carry
        tt = C - 1 - t
        xp_f = xpf_ref[pl.ds(_hint_mult(t * BB, BB), BB), :]
        xp_b = xpb_ref[pl.ds(_hint_mult(tt * BB, BB), BB), :]
        whf = whf_v if hoist else whf_ref[...]
        whb = whb_v if hoist else whb_ref[...]
        gates_f = xp_f + jnp.dot(hf.astype(jnp.bfloat16), whf,
                                 preferred_element_type=jnp.float32)
        gates_b = xp_b + jnp.dot(hb.astype(jnp.bfloat16), whb,
                                 preferred_element_type=jnp.float32)
        hf, cf = _lstm_cell(gates_f, cf, G)
        hb, cb = _lstm_cell(gates_b, cb, G)
        # Fused outputfc epilogue (one matmul per step).
        hcat = jnp.concatenate([hf, hb], axis=1).astype(jnp.bfloat16)
        acc = acc + jnp.dot(hcat, wep_ref[t], preferred_element_type=jnp.float32)
        return hf, cf, hb, cb, acc

    zh = jnp.zeros((BB, G), jnp.float32)
    zacc = jnp.zeros((BB, EP), jnp.float32)
    unroll = 8 if G <= 64 else 4
    *_, acc = _run_recurrence(C, step, (zh, zh, zh, zh, zacc), max_unroll=unroll)
    out_ref[...] = (acc + bo_ref[...]).astype(out_ref.dtype)


def context_branch(path_tm, tok_tm, kp, vmem_limit):
    """path_tm: (c, b, KP) bf16, tok_tm: (c, b, TE) bf16 (time(=c)-major).
    Returns (b, EP) f32 with outputfc already applied."""
    C, B, KP = path_tm.shape
    TE = tok_tm.shape[2]
    G = kp["ctx_whh_f"].shape[0]
    EP = kp["ctx_bout"].shape[1]

    wnames = ("tok_w", "tok_b", "ctx_wih_path_f", "ctx_wih_path_b",
              "ctx_wih_tok_f", "ctx_wih_tok_b", "ctx_whh_f", "ctx_whh_b",
              "ctx_b_f", "ctx_b_b", "ctx_wep", "ctx_bout")
    weights = [kp[n] for n in wnames]
    per_row = C * (12 * G * 4 + KP * 4 + 2 * (KP + TE) * 2) + 2 * EP * 4
    BB = _pick_block_rows(B, budget=int(vmem_limit * 0.6), per_row=per_row,
                          fixed=_resident_weight_bytes(weights))
    Bpad = _round_up(B, BB)
    if Bpad != B:                         # sublane-align the batch rows
        path_tm = jnp.pad(path_tm, ((0, 0), (0, Bpad - B), (0, 0)))
        tok_tm = jnp.pad(tok_tm, ((0, 0), (0, Bpad - B), (0, 0)))

    out = pl.pallas_call(
        _context_bilstm_kernel,
        out_shape=jax.ShapeDtypeStruct((Bpad, EP), jnp.float32),
        grid_spec=pltpu.PrefetchScalarGridSpec(
            num_scalar_prefetch=0,
            grid=(Bpad // BB,),
            in_specs=[
                pl.BlockSpec((C, BB, KP), lambda i: (0, i, 0)),
                pl.BlockSpec((C, BB, TE), lambda i: (0, i, 0)),
                pl.BlockSpec(kp["tok_w"].shape, lambda i: (0, 0)),
                pl.BlockSpec(kp["tok_b"].shape, lambda i: (0, 0)),
                pl.BlockSpec(kp["ctx_wih_path_f"].shape, lambda i: (0, 0)),
                pl.BlockSpec(kp["ctx_wih_path_b"].shape, lambda i: (0, 0)),
                pl.BlockSpec(kp["ctx_wih_tok_f"].shape, lambda i: (0, 0)),
                pl.BlockSpec(kp["ctx_wih_tok_b"].shape, lambda i: (0, 0)),
                pl.BlockSpec(kp["ctx_whh_f"].shape, lambda i: (0, 0)),
                pl.BlockSpec(kp["ctx_whh_b"].shape, lambda i: (0, 0)),
                pl.BlockSpec(kp["ctx_b_f"].shape, lambda i: (0, 0)),
                pl.BlockSpec(kp["ctx_b_b"].shape, lambda i: (0, 0)),
                pl.BlockSpec(kp["ctx_wep"].shape, lambda i: (0, 0, 0)),
                pl.BlockSpec(kp["ctx_bout"].shape, lambda i: (0, 0)),
            ],
            out_specs=pl.BlockSpec((BB, EP), lambda i: (i, 0)),
            scratch_shapes=[pltpu.VMEM((C * BB, 4 * G), jnp.float32),
                            pltpu.VMEM((C * BB, 4 * G), jnp.float32)],
        ),
        compiler_params=pltpu.CompilerParams(
            dimension_semantics=("parallel",),
            vmem_limit_bytes=vmem_limit),
    )(path_tm, tok_tm, *weights)
    return out[:B]


# ----------------------------------------------------------------------------
# Full forward pass
# ----------------------------------------------------------------------------
def crosscode2vec_lack_atten(astvector, kp):
    b, c, _ = astvector.shape
    e = kp["token_vocab"].shape[1]
    TE = kp["tok_w"].shape[0]            # padded t*2*e
    token_ids = astvector[:, :, :4]      # (b, c, 4)
    path_ids = astvector[:, :, 4:]       # (b, c, 32)
    T = path_ids.shape[-1]

    vmem_limit = _vmem_limit_bytes()

    # Time-major embedding gathers (transpose the tiny int index arrays, not
    # the embedded activations).  Batch rows are (c-major, b-minor) so the path
    # branch output feeds the context LSTM time-major with zero transposes.
    path_tm_ids = jnp.transpose(path_ids, (2, 1, 0)).reshape(T, c * b)
    x_path = jnp.take(kp["node_vocab"], path_tm_ids, axis=0)        # (T, c*b, e)

    tok_tm_ids = jnp.transpose(token_ids, (1, 0, 2)).reshape(c * b, 4)
    tok_emb = jnp.take(kp["token_vocab"], tok_tm_ids, axis=0)       # (c*b, 4, e)
    tok_flat = tok_emb.reshape(c, b, 4 * e)
    if TE != 4 * e:
        tok_flat = jnp.pad(tok_flat, ((0, 0), (0, 0), (0, TE - 4 * e)))

    path_out = path_branch(x_path, kp, vmem_limit)                   # (c*b, KP)
    path_3d = path_out.reshape(c, b, -1)                             # (c, b, KP)

    out_pad = context_branch(path_3d, tok_flat, kp, vmem_limit)      # (b, EP)
    return out_pad[:, :e]


# ----------------------------------------------------------------------------
# Parameters: PyTorch-layout init + padded / transposed / bf16 kernel params
# ----------------------------------------------------------------------------
def init_raw_params(key, *, p, t, e, c, k, h, vocab_tok, vocab_node):
    ks = iter(jax.random.split(key, 40))

    def u(shape, scale=0.1):
        return jax.random.uniform(next(ks), shape, jnp.float32, -scale, scale)

    H2 = 2 * h
    return {
        "token_vocab_weight": u((vocab_tok, e)),
        "node_vocab_weight": u((vocab_node, e)),
        # nn.LSTM(e, h, bidirectional=True), per direction (gate order i,f,g,o)
        "blstm": {d: {"w_ih": u((4 * h, e)), "w_hh": u((4 * h, h)),
                      "b_ih": u((4 * h,)), "b_hh": u((4 * h,))}
                  for d in ("fwd", "bwd")},
        # nn.Linear(t*2*e, k)
        "tokenfc": {"w": u((k, t * 2 * e)), "b": u((k,))},
        # nn.Linear(p*h*2, k)
        "pathlinear": {"w": u((k, p * h * 2)), "b": u((k,))},
        # nn.LSTM(2k, 2h, bidirectional=True)
        "lstm2": {d: {"w_ih": u((4 * H2, 2 * k)), "w_hh": u((4 * H2, H2)),
                      "b_ih": u((4 * H2,)), "b_hh": u((4 * H2,))}
                  for d in ("fwd", "bwd")},
        # nn.Linear(h*4*c, e)
        "outputfc": {"w": u((e, h * 4 * c)), "b": u((e,))},
    }


def prepare_params(raw, *, p, t, e, c, k, h):
    H1, H2 = h, 2 * h
    G1 = _round_up(H1, 32)        # padded path-LSTM hidden  (4*G1 mult of 128)
    G2 = _round_up(H2, 32)        # padded context-LSTM hidden
    KP = _round_up(k, 128)        # lane-dense path/token projection width
    EP = _round_up(e, 128)        # lane-dense final output width
    TE = _round_up(t * 2 * e, 128)
    bf16 = lambda x: x.astype(jnp.bfloat16)

    def lstm_dir(d, H, G):
        wih = d["w_ih"].T                           # (in, 4H), gate-major cols
        whh = d["w_hh"].T                           # (H, 4H)
        bias = d["b_ih"] + d["b_hh"]                # fused bias (4H,)
        E_in = wih.shape[0]
        wih = _pad_to(wih.reshape(E_in, 4, H), (E_in, 4, G)).reshape(E_in, 4 * G)
        whh = _pad_to(whh.reshape(H, 4, H), (G, 4, G)).reshape(G, 4 * G)
        bias = _pad_to(bias.reshape(4, H), (4, G)).reshape(1, 4 * G)
        return wih, whh, bias

    # ---- path BiLSTM (hidden h) + fused pathlinear epilogue ------------------
    wih_f, whh_f, b_f = lstm_dir(raw["blstm"]["fwd"], H1, G1)
    wih_b, whh_b, b_b = lstm_dir(raw["blstm"]["bwd"], H1, G1)
    wpl = raw["pathlinear"]["w"].T.reshape(p, 2, H1, k)   # row = t*2H + dir*H + j
    wpf = _pad_to(wpl[:, 0], (p, G1, KP))
    wpb = _pad_to(wpl[:, 1], (p, G1, KP))
    kp = {
        "path_wih_f": bf16(wih_f), "path_wih_b": bf16(wih_b),
        "path_whh_f": bf16(whh_f), "path_whh_b": bf16(whh_b),
        "path_b_f": b_f, "path_b_b": b_b,
        # fused epilogue weight: wep[t] = [W_fwd[t]; W_bwd[T-1-t]]
        "path_wep": bf16(jnp.concatenate([wpf, wpb[::-1]], axis=1)),  # (p,2G1,KP)
        "path_bout": _pad_to(raw["pathlinear"]["b"].reshape(1, k), (1, KP)),
    }

    # ---- tokenfc --------------------------------------------------------------
    kp["tok_w"] = bf16(_pad_to(raw["tokenfc"]["w"].T, (TE, KP)))
    kp["tok_b"] = _pad_to(raw["tokenfc"]["b"].reshape(1, k), (1, KP))

    # ---- context BiLSTM (hidden 2h) + fused outputfc epilogue -----------------
    wih2_f, whh2_f, b2_f = lstm_dir(raw["lstm2"]["fwd"], H2, G2)
    wih2_b, whh2_b, b2_b = lstm_dir(raw["lstm2"]["bwd"], H2, G2)
    # split input rows [path k | token k]; pad each to the lane-dense KP
    kp.update({
        "ctx_wih_path_f": bf16(_pad_to(wih2_f[:k], (KP, 4 * G2))),
        "ctx_wih_path_b": bf16(_pad_to(wih2_b[:k], (KP, 4 * G2))),
        "ctx_wih_tok_f": bf16(_pad_to(wih2_f[k:], (KP, 4 * G2))),
        "ctx_wih_tok_b": bf16(_pad_to(wih2_b[k:], (KP, 4 * G2))),
        "ctx_whh_f": bf16(whh2_f), "ctx_whh_b": bf16(whh2_b),
        "ctx_b_f": b2_f, "ctx_b_b": b2_b,
    })
    wo = raw["outputfc"]["w"].T.reshape(c, 2, H2, e)      # row = c*4h + dir*2h + j
    wof = _pad_to(wo[:, 0], (c, G2, EP))
    wob = _pad_to(wo[:, 1], (c, G2, EP))
    kp.update({
        "ctx_wep": bf16(jnp.concatenate([wof, wob[::-1]], axis=1)),   # (c,2G2,EP)
        "ctx_bout": _pad_to(raw["outputfc"]["b"].reshape(1, e), (1, EP)),
        # vocab tables in bf16 so gathers emit MXU-ready activations
        "token_vocab": bf16(raw["token_vocab_weight"]),
        "node_vocab": bf16(raw["node_vocab_weight"]),
    })
    return kp


if __name__ == "__main__":
    # Small shapes consistent with the module: token split=4 => t=2; path split=32 => p=32.
    b, c = 2, 4
    e, h, k = 16, 16, 32
    p, t = 32, 2
    vocab_tok, vocab_node = 50, 60

    key = jax.random.PRNGKey(0)
    pkey, tkey, nkey = jax.random.split(key, 3)
    raw = init_raw_params(pkey, p=p, t=t, e=e, c=c, k=k, h=h,
                          vocab_tok=vocab_tok, vocab_node=vocab_node)
    kparams = prepare_params(raw, p=p, t=t, e=e, c=c, k=k, h=h)

    token_idx = jax.random.randint(tkey, (b, c, 4), 0, vocab_tok, dtype=jnp.int32)
    path_idx = jax.random.randint(nkey, (b, c, 32), 0, vocab_node, dtype=jnp.int32)
    astvector = jnp.concatenate([token_idx, path_idx], axis=2)   # (b, c, 36) int32

    out = jax.jit(crosscode2vec_lack_atten)(astvector, kparams)
    out = jax.block_until_ready(out)
    assert out.shape == (b, e), out.shape
    assert bool(jnp.all(jnp.isfinite(out)))
    print("KERNEL_OK")
</pallas_src>

<mosaic_0001>
module attributes {stable_mosaic.version = 11 : i64} {
  func.func @_path_bilstm_kernel(%arg0: i32, %arg1: memref<32x8x16xbf16, #tpu.memory_space<vmem>>, %arg2: memref<16x128xbf16, #tpu.memory_space<vmem>>, %arg3: memref<16x128xbf16, #tpu.memory_space<vmem>>, %arg4: memref<1x128xf32, #tpu.memory_space<vmem>>, %arg5: memref<1x128xf32, #tpu.memory_space<vmem>>, %arg6: memref<32x128xbf16, #tpu.memory_space<vmem>>, %arg7: memref<32x128xbf16, #tpu.memory_space<vmem>>, %arg8: memref<32x64x128xbf16, #tpu.memory_space<vmem>>, %arg9: memref<1x128xf32, #tpu.memory_space<vmem>>, %arg10: memref<8x128xbf16, #tpu.memory_space<vmem>>, %arg11: memref<256x128xf32, #tpu.memory_space<vmem>>, %arg12: memref<256x128xf32, #tpu.memory_space<vmem>>) attributes {dimension_semantics = [#tpu.dimension_semantics<parallel>], iteration_bounds = array<i64: 1>, scalar_prefetch = 0 : i64, scratch_operands = 2 : i64, tpu.core_type = #tpu.core_type<tc>, window_params = [{transform_indices = @transform_0, window_bounds = array<i64: 32, 8, 16>}, {pipeline_mode = #tpu.pipeline_mode<synchronous>, transform_indices = @transform_1, window_bounds = array<i64: 16, 128>}, {pipeline_mode = #tpu.pipeline_mode<synchronous>, transform_indices = @transform_2, window_bounds = array<i64: 16, 128>}, {pipeline_mode = #tpu.pipeline_mode<synchronous>, transform_indices = @transform_3, window_bounds = array<i64: 1, 128>}, {pipeline_mode = #tpu.pipeline_mode<synchronous>, transform_indices = @transform_4, window_bounds = array<i64: 1, 128>}, {pipeline_mode = #tpu.pipeline_mode<synchronous>, transform_indices = @transform_5, window_bounds = array<i64: 32, 128>}, {pipeline_mode = #tpu.pipeline_mode<synchronous>, transform_indices = @transform_6, window_bounds = array<i64: 32, 128>}, {pipeline_mode = #tpu.pipeline_mode<synchronous>, transform_indices = @transform_7, window_bounds = array<i64: 32, 64, 128>}, {pipeline_mode = #tpu.pipeline_mode<synchronous>, transform_indices = @transform_8, window_bounds = array<i64: 1, 128>}, {transform_indices = @transform_9, window_bounds = array<i64: 8, 128>}]} {
    %c0 = arith.constant 0 : index
    %c0_0 = arith.constant 0 : index
    %c0_1 = arith.constant 0 : index
    %0 = vector.load %arg1[%c0, %c0_0, %c0_1] : memref<32x8x16xbf16, #tpu.memory_space<vmem>>, vector<32x8x16xbf16>
    %1 = vector.shape_cast %0 : vector<32x8x16xbf16> to vector<256x16xbf16>
    %c0_2 = arith.constant 0 : index
    %c0_3 = arith.constant 0 : index
    %2 = vector.load %arg2[%c0_2, %c0_3] : memref<16x128xbf16, #tpu.memory_space<vmem>>, vector<16x128xbf16>
    %cst = arith.constant dense<0.000000e+00> : vector<256x128xf32>
    %3 = tpu.matmul %1, %2, %cst {dimension_numbers = #tpu.dot_dimension_numbers<[1], [0], [0], [1], [0, 0, 1, 1], [], []>} : vector<256x16xbf16>, vector<16x128xbf16>, vector<256x128xf32> -> vector<256x128xf32>
    %c0_4 = arith.constant 0 : index
    %c0_5 = arith.constant 0 : index
    %4 = vector.load %arg4[%c0_4, %c0_5] : memref<1x128xf32, #tpu.memory_space<vmem>>, vector<1x128xf32>
    %5 = vector.broadcast %4 : vector<1x128xf32> to vector<256x128xf32>
    %6 = arith.addf %3, %5 : vector<256x128xf32>
    %c0_6 = arith.constant 0 : index
    %c0_7 = arith.constant 0 : index
    %7 = vector.load %arg11[%c0_6, %c0_7] : memref<256x128xf32, #tpu.memory_space<vmem>>, vector<256x128xf32>
    tpu.vector_store %arg11[%c0_6, %c0_7], %6 {strides = array<i32>} : memref<256x128xf32, #tpu.memory_space<vmem>>, vector<256x128xf32>,
    %c0_8 = arith.constant 0 : index
    %c0_9 = arith.constant 0 : index
    %8 = vector.load %arg3[%c0_8, %c0_9] : memref<16x128xbf16, #tpu.memory_space<vmem>>, vector<16x128xbf16>
    %cst_10 = arith.constant dense<0.000000e+00> : vector<256x128xf32>
    %9 = tpu.matmul %1, %8, %cst_10 {dimension_numbers = #tpu.dot_dimension_numbers<[1], [0], [0], [1], [0, 0, 1, 1], [], []>} : vector<256x16xbf16>, vector<16x128xbf16>, vector<256x128xf32> -> vector<256x128xf32>
    %c0_11 = arith.constant 0 : index
    %c0_12 = arith.constant 0 : index
    %10 = vector.load %arg5[%c0_11, %c0_12] : memref<1x128xf32, #tpu.memory_space<vmem>>, vector<1x128xf32>
    %11 = vector.broadcast %10 : vector<1x128xf32> to vector<256x128xf32>
    %12 = arith.addf %9, %11 : vector<256x128xf32>
    %c0_13 = arith.constant 0 : index
    %c0_14 = arith.constant 0 : index
    %13 = vector.load %arg12[%c0_13, %c0_14] : memref<256x128xf32, #tpu.memory_space<vmem>>, vector<256x128xf32>
    tpu.vector_store %arg12[%c0_13, %c0_14], %12 {strides = array<i32>} : memref<256x128xf32, #tpu.memory_space<vmem>>, vector<256x128xf32>,
    %c0_15 = arith.constant 0 : index
    %c0_16 = arith.constant 0 : index
    %14 = vector.load %arg6[%c0_15, %c0_16] : memref<32x128xbf16, #tpu.memory_space<vmem>>, vector<32x128xbf16>
    %c0_17 = arith.constant 0 : index
    %c0_18 = arith.constant 0 : index
    %15 = vector.load %arg7[%c0_17, %c0_18] : memref<32x128xbf16, #tpu.memory_space<vmem>>, vector<32x128xbf16>
    %cst_19 = arith.constant 0.000000e+00 : f32
    %16 = vector.broadcast %cst_19 : f32 to vector<8x32xf32>
    %cst_20 = arith.constant 0.000000e+00 : f32
    %17 = vector.broadcast %cst_20 : f32 to vector<8x128xf32>
    %c0_i32 = arith.constant 0 : i32
    %c4_i32 = arith.constant 4 : i32
    %18 = arith.addi %c0_i32, %c4_i32 : i32
    %c1_i32 = arith.constant 1 : i32
    %19:5 = scf.for %arg13 = %c0_i32 to %18 step %c1_i32 iter_args(%arg14 = %16, %arg15 = %16, %arg16 = %16, %arg17 = %16, %arg18 = %17) -> (vector<8x32xf32>, vector<8x32xf32>, vector<8x32xf32>, vector<8x32xf32>, vector<8x128xf32>)  : i32 {
      %c8_i32 = arith.constant 8 : i32
      %25 = arith.muli %arg13, %c8_i32 : i32
      %c0_i32_26 = arith.constant 0 : i32
      %26 = arith.addi %25, %c0_i32_26 : i32
      %c31_i32 = arith.constant 31 : i32
      %27 = arith.subi %c31_i32, %26 : i32
      %c8_i32_27 = arith.constant 8 : i32
      %28 = arith.muli %26, %c8_i32_27 : i32
      %29 = tpu.assume_multiple %28, 8 : i32
      %30 = arith.index_cast %29 : i32 to index
      %c0_28 = arith.constant 0 : index
      %31 = vector.load %arg11[%30, %c0_28] : memref<256x128xf32, #tpu.memory_space<vmem>>, vector<8x128xf32>
      %c8_i32_29 = arith.constant 8 : i32
      %32 = arith.muli %27, %c8_i32_29 : i32
      %33 = tpu.assume_multiple %32, 8 : i32
      %34 = arith.index_cast %33 : i32 to index
      %c0_30 = arith.constant 0 : index
      %35 = vector.load %arg12[%34, %c0_30] : memref<256x128xf32, #tpu.memory_space<vmem>>, vector<8x128xf32>
      %36 = arith.truncf %arg14 : vector<8x32xf32> to vector<8x32xbf16>
      %cst_31 = arith.constant dense<0.000000e+00> : vector<8x128xf32>
      %37 = tpu.matmul %36, %14, %cst_31 {dimension_numbers = #tpu.dot_dimension_numbers<[1], [0], [0], [1], [0, 0, 1, 1], [], []>} : vector<8x32xbf16>, vector<32x128xbf16>, vector<8x128xf32> -> vector<8x128xf32>
      %38 = arith.addf %31, %37 : vector<8x128xf32>
      %39 = arith.truncf %arg16 : vector<8x32xf32> to vector<8x32xbf16>
      %cst_32 = arith.constant dense<0.000000e+00> : vector<8x128xf32>
      %40 = tpu.matmul %39, %15, %cst_32 {dimension_numbers = #tpu.dot_dimension_numbers<[1], [0], [0], [1], [0, 0, 1, 1], [], []>} : vector<8x32xbf16>, vector<32x128xbf16>, vector<8x128xf32> -> vector<8x128xf32>
      %41 = arith.addf %35, %40 : vector<8x128xf32>
      %42 = vector.extract_strided_slice %38 {offsets = [0, 0], sizes = [8, 32], strides = [1, 1]} : vector<8x128xf32> to vector<8x32xf32>
      %43 = arith.negf %42 : vector<8x32xf32>
      %44 = math.exp %43 : vector<8x32xf32>
      %cst_33 = arith.constant 1.000000e+00 : f32
      %45 = vector.broadcast %cst_33 : f32 to vector<8x32xf32>
      %46 = arith.addf %45, %44 : vector<8x32xf32>
      %47 = arith.divf %45, %46 : vector<8x32xf32>
      %48 = vector.extract_strided_slice %38 {offsets = [0, 32], sizes = [8, 32], strides = [1, 1]} : vector<8x128xf32> to vector<8x32xf32>
      %49 = arith.negf %48 : vector<8x32xf32>
      %50 = math.exp %49 : vector<8x32xf32>
      %cst_34 = arith.constant 1.000000e+00 : f32
      %51 = vector.broadcast %cst_34 : f32 to vector<8x32xf32>
      %52 = arith.addf %51, %50 : vector<8x32xf32>
      %53 = arith.divf %51, %52 : vector<8x32xf32>
      %54 = vector.extract_strided_slice %38 {offsets = [0, 64], sizes = [8, 32], strides = [1, 1]} : vector<8x128xf32> to vector<8x32xf32>
      %55 = math.tanh %54 : vector<8x32xf32>
      %56 = vector.extract_strided_slice %38 {offsets = [0, 96], sizes = [8, 32], strides = [1, 1]} : vector<8x128xf32> to vector<8x32xf32>
      %57 = arith.negf %56 : vector<8x32xf32>
      %58 = math.exp %57 : vector<8x32xf32>
      %cst_35 = arith.constant 1.000000e+00 : f32
      %59 = vector.broadcast %cst_35 : f32 to vector<8x32xf32>
      %60 = arith.addf %59, %58 : vector<8x32xf32>
      %61 = arith.divf %59, %60 : vector<8x32xf32>
      %62 = arith.mulf %53, %arg15 : vector<8x32xf32>
      %63 = arith.mulf %47, %55 : vector<8x32xf32>
      %64 = arith.addf %62, %63 : vector<8x32xf32>
      %65 = math.tanh %64 : vector<8x32xf32>
      %66 = arith.mulf %61, %65 : vector<8x32xf32>
      %67 = vector.extract_strided_slice %41 {offsets = [0, 0], sizes = [8, 32], strides = [1, 1]} : vector<8x128xf32> to vector<8x32xf32>
      %68 = arith.negf %67 : vector<8x32xf32>
      %69 = math.exp %68 : vector<8x32xf32>
      %cst_36 = arith.constant 1.000000e+00 : f32
      %70 = vector.broadcast %cst_36 : f32 to vector<8x32xf32>
      %71 = arith.addf %70, %69 : vector<8x32xf32>
      %72 = arith.divf %70, %71 : vector<8x32xf32>
      %73 = vector.extract_strided_slice %41 {offsets = [0, 32], sizes = [8, 32], strides = [1, 1]} : vector<8x128xf32> to vector<8x32xf32>
      %74 = arith.negf %73 : vector<8x32xf32>
      %75 = math.exp %74 : vector<8x32xf32>
      %cst_37 = arith.constant 1.000000e+00 : f32
      %76 = vector.broadcast %cst_37 : f32 to vector<8x32xf32>
      %77 = arith.addf %76, %75 : vector<8x32xf32>
      %78 = arith.divf %76, %77 : vector<8x32xf32>
      %79 = vector.extract_strided_slice %41 {offsets = [0, 64], sizes = [8, 32], strides = [1, 1]} : vector<8x128xf32> to vector<8x32xf32>
      %80 = math.tanh %79 : vector<8x32xf32>
      %81 = vector.extract_strided_slice %41 {offsets = [0, 96], sizes = [8, 32], strides = [1, 1]} : vector<8x128xf32> to vector<8x32xf32>
      %82 = arith.negf %81 : vector<8x32xf32>
      %83 = math.exp %82 : vector<8x32xf32>
      %cst_38 = arith.constant 1.000000e+00 : f32
      %84 = vector.broadcast %cst_38 : f32 to vector<8x32xf32>
      %85 = arith.addf %84, %83 : vector<8x32xf32>
      %86 = arith.divf %84, %85 : vector<8x32xf32>
      %87 = arith.mulf %78, %arg17 : vector<8x32xf32>
      %88 = arith.mulf %72, %80 : vector<8x32xf32>
      %89 = arith.addf %87, %88 : vector<8x32xf32>
      %90 = math.tanh %89 : vector<8x32xf32>
      %91 = arith.mulf %86, %90 : vector<8x32xf32>
      %92 = tpu.concatenate %66, %91 in 1 : vector<8x32xf32>, vector<8x32xf32> -> vector<8x64xf32>
      %93 = arith.truncf %92 : vector<8x64xf32> to vector<8x64xbf16>
      %94 = arith.index_cast %26 : i32 to index
      %c0_39 = arith.constant 0 : index
      %c0_40 = arith.constant 0 : index
      %95 = vector.load %arg8[%94, %c0_39, %c0_40] : memref<32x64x128xbf16, #tpu.memory_space<vmem>>, vector<1x64x128xbf16>
      %96 = vector.shape_cast %95 : vector<1x64x128xbf16> to vector<64x128xbf16>
      %cst_41 = arith.constant dense<0.000000e+00> : vector<8x128xf32>
      %97 = tpu.matmul %93, %96, %cst_41 {dimension_numbers = #tpu.dot_dimension_numbers<[1], [0], [0], [1], [0, 0, 1, 1], [], []>} : vector<8x64xbf16>, vector<64x128xbf16>, vector<8x128xf32> -> vector<8x128xf32>
      %98 = arith.addf %arg18, %97 : vector<8x128xf32>
      %c8_i32_42 = arith.constant 8 : i32
      %99 = arith.muli %arg13, %c8_i32_42 : i32
      %c1_i32_43 = arith.constant 1 : i32
      %100 = arith.addi %99, %c1_i32_43 : i32
      %c31_i32_44 = arith.constant 31 : i32
      %101 = arith.subi %c31_i32_44, %100 : i32
      %c8_i32_45 = arith.constant 8 : i32
      %102 = arith.muli %100, %c8_i32_45 : i32
      %103 = tpu.assume_multiple %102, 8 : i32
      %104 = arith.index_cast %103 : i32 to index
      %c0_46 = arith.constant 0 : index
      %105 = vector.load %arg11[%104, %c0_46] : memref<256x128xf32, #tpu.memory_space<vmem>>, vector<8x128xf32>
      %c8_i32_47 = arith.constant 8 : i32
      %106 = arith.muli %101, %c8_i32_47 : i32
      %107 = tpu.assume_multiple %106, 8 : i32
      %108 = arith.index_cast %107 : i32 to index
      %c0_48 = arith.constant 0 : index
      %109 = vector.load %arg12[%108, %c0_48] : memref<256x128xf32, #tpu.memory_space<vmem>>, vector<8x128xf32>
      %110 = arith.truncf %66 : vector<8x32xf32> to vector<8x32xbf16>
      %cst_49 = arith.constant dense<0.000000e+00> : vector<8x128xf32>
      %111 = tpu.matmul %110, %14, %cst_49 {dimension_numbers = #tpu.dot_dimension_numbers<[1], [0], [0], [1], [0, 0, 1, 1], [], []>} : vector<8x32xbf16>, vector<32x128xbf16>, vector<8x128xf32> -> vector<8x128xf32>
      %112 = arith.addf %105, %111 : vector<8x128xf32>
      %113 = arith.truncf %91 : vector<8x32xf32> to vector<8x32xbf16>
      %cst_50 = arith.constant dense<0.000000e+00> : vector<8x128xf32>
      %114 = tpu.matmul %113, %15, %cst_50 {dimension_numbers = #tpu.dot_dimension_numbers<[1], [0], [0], [1], [0, 0, 1, 1], [], []>} : vector<8x32xbf16>, vector<32x128xbf16>, vector<8x128xf32> -> vector<8x128xf32>
      %115 = arith.addf %109, %114 : vector<8x128xf32>
      %116 = vector.extract_strided_slice %112 {offsets = [0, 0], sizes = [8, 32], strides = [1, 1]} : vector<8x128xf32> to vector<8x32xf32>
      %117 = arith.negf %116 : vector<8x32xf32>
      %118 = math.exp %117 : vector<8x32xf32>
      %cst_51 = arith.constant 1.000000e+00 : f32
      %119 = vector.broadcast %cst_51 : f32 to vector<8x32xf32>
      %120 = arith.addf %119, %118 : vector<8x32xf32>
      %121 = arith.divf %119, %120 : vector<8x32xf32>
      %122 = vector.extract_strided_slice %112 {offsets = [0, 32], sizes = [8, 32], strides = [1, 1]} : vector<8x128xf32> to vector<8x32xf32>
      %123 = arith.negf %122 : vector<8x32xf32>
      %124 = math.exp %123 : vector<8x32xf32>
      %cst_52 = arith.constant 1.000000e+00 : f32
      %125 = vector.broadcast %cst_52 : f32 to vector<8x32xf32>
      %126 = arith.addf %125, %124 : vector<8x32xf32>
      %127 = arith.divf %125, %126 : vector<8x32xf32>
      %128 = vector.extract_strided_slice %112 {offsets = [0, 64], sizes = [8, 32], strides = [1, 1]} : vector<8x128xf32> to vector<8x32xf32>
      %129 = math.tanh %128 : vector<8x32xf32>
      %130 = vector.extract_strided_slice %112 {offsets = [0, 96], sizes = [8, 32], strides = [1, 1]} : vector<8x128xf32> to vector<8x32xf32>
      %131 = arith.negf %130 : vector<8x32xf32>
      %132 = math.exp %131 : vector<8x32xf32>
      %cst_53 = arith.constant 1.000000e+00 : f32
      %133 = vector.broadcast %cst_53 : f32 to vector<8x32xf32>
      %134 = arith.addf %133, %132 : vector<8x32xf32>
      %135 = arith.divf %133, %134 : vector<8x32xf32>
      %136 = arith.mulf %127, %64 : vector<8x32xf32>
      %137 = arith.mulf %121, %129 : vector<8x32xf32>
      %138 = arith.addf %136, %137 : vector<8x32xf32>
      %139 = math.tanh %138 : vector<8x32xf32>
      %140 = arith.mulf %135, %139 : vector<8x32xf32>
      %141 = vector.extract_strided_slice %115 {offsets = [0, 0], sizes = [8, 32], strides = [1, 1]} : vector<8x128xf32> to vector<8x32xf32>
      %142 = arith.negf %141 : vector<8x32xf32>
      %143 = math.exp %142 : vector<8x32xf32>
      %cst_54 = arith.constant 1.000000e+00 : f32
      %144 = vector.broadcast %cst_54 : f32 to vector<8x32xf32>
      %145 = arith.addf %144, %143 : vector<8x32xf32>
      %146 = arith.divf %144, %145 : vector<8x32xf32>
      %147 = vector.extract_strided_slice %115 {offsets = [0, 32], sizes = [8, 32], strides = [1, 1]} : vector<8x128xf32> to vector<8x32xf32>
      %148 = arith.negf %147 : vector<8x32xf32>
      %149 = math.exp %148 : vector<8x32xf32>
      %cst_55 = arith.constant 1.000000e+00 : f32
      %150 = vector.broadcast %cst_55 : f32 to vector<8x32xf32>
      %151 = arith.addf %150, %149 : vector<8x32xf32>
      %152 = arith.divf %150, %151 : vector<8x32xf32>
      %153 = vector.extract_strided_slice %115 {offsets = [0, 64], sizes = [8, 32], strides = [1, 1]} : vector<8x128xf32> to vector<8x32xf32>
      %154 = math.tanh %153 : vector<8x32xf32>
      %155 = vector.extract_strided_slice %115 {offsets = [0, 96], sizes = [8, 32], strides = [1, 1]} : vector<8x128xf32> to vector<8x32xf32>
      %156 = arith.negf %155 : vector<8x32xf32>
      %157 = math.exp %156 : vector<8x32xf32>
      %cst_56 = arith.constant 1.000000e+00 : f32
      %158 = vector.broadcast %cst_56 : f32 to vector<8x32xf32>
      %159 = arith.addf %158, %157 : vector<8x32xf32>
      %160 = arith.divf %158, %159 : vector<8x32xf32>
      %161 = arith.mulf %152, %89 : vector<8x32xf32>
      %162 = arith.mulf %146, %154 : vector<8x32xf32>
      %163 = arith.addf %161, %162 : vector<8x32xf32>
      %164 = math.tanh %163 : vector<8x32xf32>
      %165 = arith.mulf %160, %164 : vector<8x32xf32>
      %166 = tpu.concatenate %140, %165 in 1 : vector<8x32xf32>, vector<8x32xf32> -> vector<8x64xf32>
      %167 = arith.truncf %166 : vector<8x64xf32> to vector<8x64xbf16>
      %168 = arith.index_cast %100 : i32 to index
      %c0_57 = arith.constant 0 : index
      %c0_58 = arith.constant 0 : index
      %169 = vector.load %arg8[%168, %c0_57, %c0_58] : memref<32x64x128xbf16, #tpu.memory_space<vmem>>, vector<1x64x128xbf16>
      %170 = vector.shape_cast %169 : vector<1x64x128xbf16> to vector<64x128xbf16>
      %cst_59 = arith.constant dense<0.000000e+00> : vector<8x128xf32>
      %171 = tpu.matmul %167, %170, %cst_59 {dimension_numbers = #tpu.dot_dimension_numbers<[1], [0], [0], [1], [0, 0, 1, 1], [], []>} : vector<8x64xbf16>, vector<64x128xbf16>, vector<8x128xf32> -> vector<8x128xf32>
      %172 = arith.addf %98, %171 : vector<8x128xf32>
      %c8_i32_60 = arith.constant 8 : i32
      %173 = arith.muli %arg13, %c8_i32_60 : i32
      %c2_i32 = arith.constant 2 : i32
      %174 = arith.addi %173, %c2_i32 : i32
      %c31_i32_61 = arith.constant 31 : i32
      %175 = arith.subi %c31_i32_61, %174 : i32
      %c8_i32_62 = arith.constant 8 : i32
      %176 = arith.muli %174, %c8_i32_62 : i32
      %177 = tpu.assume_multiple %176, 8 : i32
      %178 = arith.index_cast %177 : i32 to index
      %c0_63 = arith.constant 0 : index
      %179 = vector.load %arg11[%178, %c0_63] : memref<256x128xf32, #tpu.memory_space<vmem>>, vector<8x128xf32>
      %c8_i32_64 = arith.constant 8 : i32
      %180 = arith.muli %175, %c8_i32_64 : i32
      %181 = tpu.assume_multiple %180, 8 : i32
      %182 = arith.index_cast %181 : i32 to index
      %c0_65 = arith.constant 0 : index
      %183 = vector.load %arg12[%182, %c0_65] : memref<256x128xf32, #tpu.memory_space<vmem>>, vector<8x128xf32>
      %184 = arith.truncf %140 : vector<8x32xf32> to vector<8x32xbf16>
      %cst_66 = arith.constant dense<0.000000e+00> : vector<8x128xf32>
      %185 = tpu.matmul %184, %14, %cst_66 {dimension_numbers = #tpu.dot_dimension_numbers<[1], [0], [0], [1], [0, 0, 1, 1], [], []>} : vector<8x32xbf16>, vector<32x128xbf16>, vector<8x128xf32> -> vector<8x128xf32>
      %186 = arith.addf %179, %185 : vector<8x128xf32>
      %187 = arith.truncf %165 : vector<8x32xf32> to vector<8x32xbf16>
      %cst_67 = arith.constant dense<0.000000e+00> : vector<8x128xf32>
      %188 = tpu.matmul %187, %15, %cst_67 {dimension_numbers = #tpu.dot_dimension_numbers<[1], [0], [0], [1], [0, 0, 1, 1], [], []>} : vector<8x32xbf16>, vector<32x128xbf16>, vector<8x128xf32> -> vector<8x128xf32>
      %189 = arith.addf %183, %188 : vector<8x128xf32>
      %190 = vector.extract_strided_slice %186 {offsets = [0, 0], sizes = [8, 32], strides = [1, 1]} : vector<8x128xf32> to vector<8x32xf32>
      %191 = arith.negf %190 : vector<8x32xf32>
      %192 = math.exp %191 : vector<8x32xf32>
      %cst_68 = arith.constant 1.000000e+00 : f32
      %193 = vector.broadcast %cst_68 : f32 to vector<8x32xf32>
      %194 = arith.addf %193, %192 : vector<8x32xf32>
      %195 = arith.divf %193, %194 : vector<8x32xf32>
      %196 = vector.extract_strided_slice %186 {offsets = [0, 32], sizes = [8, 32], strides = [1, 1]} : vector<8x128xf32> to vector<8x32xf32>
      %197 = arith.negf %196 : vector<8x32xf32>
      %198 = math.exp %197 : vector<8x32xf32>
      %cst_69 = arith.constant 1.000000e+00 : f32
      %199 = vector.broadcast %cst_69 : f32 to vector<8x32xf32>
      %200 = arith.addf %199, %198 : vector<8x32xf32>
      %201 = arith.divf %199, %200 : vector<8x32xf32>
      %202 = vector.extract_strided_slice %186 {offsets = [0, 64], sizes = [8, 32], strides = [1, 1]} : vector<8x128xf32> to vector<8x32xf32>
      %203 = math.tanh %202 : vector<8x32xf32>
      %204 = vector.extract_strided_slice %186 {offsets = [0, 96], sizes = [8, 32], strides = [1, 1]} : vector<8x128xf32> to vector<8x32xf32>
      %205 = arith.negf %204 : vector<8x32xf32>
      %206 = math.exp %205 : vector<8x32xf32>
      %cst_70 = arith.constant 1.000000e+00 : f32
      %207 = vector.broadcast %cst_70 : f32 to vector<8x32xf32>
      %208 = arith.addf %207, %206 : vector<8x32xf32>
      %209 = arith.divf %207, %208 : vector<8x32xf32>
      %210 = arith.mulf %201, %138 : vector<8x32xf32>
      %211 = arith.mulf %195, %203 : vector<8x32xf32>
      %212 = arith.addf %210, %211 : vector<8x32xf32>
      %213 = math.tanh %212 : vector<8x32xf32>
      %214 = arith.mulf %209, %213 : vector<8x32xf32>
      %215 = vector.extract_strided_slice %189 {offsets = [0, 0], sizes = [8, 32], strides = [1, 1]} : vector<8x128xf32> to vector<8x32xf32>
      %216 = arith.negf %215 : vector<8x32xf32>
      %217 = math.exp %216 : vector<8x32xf32>
      %cst_71 = arith.constant 1.000000e+00 : f32
      %218 = vector.broadcast %cst_71 : f32 to vector<8x32xf32>
      %219 = arith.addf %218, %217 : vector<8x32xf32>
      %220 = arith.divf %218, %219 : vector<8x32xf32>
      %221 = vector.extract_strided_slice %189 {offsets = [0, 32], sizes = [8, 32], strides = [1, 1]} : vector<8x128xf32> to vector<8x32xf32>
      %222 = arith.negf %221 : vector<8x32xf32>
      %223 = math.exp %222 : vector<8x32xf32>
      %cst_72 = arith.constant 1.000000e+00 : f32
      %224 = vector.broadcast %cst_72 : f32 to vector<8x32xf32>
      %225 = arith.addf %224, %223 : vector<8x32xf32>
      %226 = arith.divf %224, %225 : vector<8x32xf32>
      %227 = vector.extract_strided_slice %189 {offsets = [0, 64], sizes = [8, 32], strides = [1, 1]} : vector<8x128xf32> to vector<8x32xf32>
      %228 = math.tanh %227 : vector<8x32xf32>
      %229 = vector.extract_strided_slice %189 {offsets = [0, 96], sizes = [8, 32], strides = [1, 1]} : vector<8x128xf32> to vector<8x32xf32>
      %230 = arith.negf %229 : vector<8x32xf32>
      %231 = math.exp %230 : vector<8x32xf32>
      %cst_73 = arith.constant 1.000000e+00 : f32
      %232 = vector.broadcast %cst_73 : f32 to vector<8x32xf32>
      %233 = arith.addf %232, %231 : vector<8x32xf32>
      %234 = arith.divf %232, %233 : vector<8x32xf32>
      %235 = arith.mulf %226, %163 : vector<8x32xf32>
      %236 = arith.mulf %220, %228 : vector<8x32xf32>
      %237 = arith.addf %235, %236 : vector<8x32xf32>
      %238 = math.tanh %237 : vector<8x32xf32>
      %239 = arith.mulf %234, %238 : vector<8x32xf32>
      %240 = tpu.concatenate %214, %239 in 1 : vector<8x32xf32>, vector<8x32xf32> -> vector<8x64xf32>
      %241 = arith.truncf %240 : vector<8x64xf32> to vector<8x64xbf16>
      %242 = arith.index_cast %174 : i32 to index
      %c0_74 = arith.constant 0 : index
      %c0_75 = arith.constant 0 : index
      %243 = vector.load %arg8[%242, %c0_74, %c0_75] : memref<32x64x128xbf16, #tpu.memory_space<vmem>>, vector<1x64x128xbf16>
      %244 = vector.shape_cast %243 : vector<1x64x128xbf16> to vector<64x128xbf16>
      %cst_76 = arith.constant dense<0.000000e+00> : vector<8x128xf32>
      %245 = tpu.matmul %241, %244, %cst_76 {dimension_numbers = #tpu.dot_dimension_numbers<[1], [0], [0], [1], [0, 0, 1, 1], [], []>} : vector<8x64xbf16>, vector<64x128xbf16>, vector<8x128xf32> -> vector<8x128xf32>
      %246 = arith.addf %172, %245 : vector<8x128xf32>
      %c8_i32_77 = arith.constant 8 : i32
      %247 = arith.muli %arg13, %c8_i32_77 : i32
      %c3_i32 = arith.constant 3 : i32
      %248 = arith.addi %247, %c3_i32 : i32
      %c31_i32_78 = arith.constant 31 : i32
      %249 = arith.subi %c31_i32_78, %248 : i32
      %c8_i32_79 = arith.constant 8 : i32
      %250 = arith.muli %248, %c8_i32_79 : i32
      %251 = tpu.assume_multiple %250, 8 : i32
      %252 = arith.index_cast %251 : i32 to index
      %c0_80 = arith.constant 0 : index
      %253 = vector.load %arg11[%252, %c0_80] : memref<256x128xf32, #tpu.memory_space<vmem>>, vector<8x128xf32>
      %c8_i32_81 = arith.constant 8 : i32
      %254 = arith.muli %249, %c8_i32_81 : i32
      %255 = tpu.assume_multiple %254, 8 : i32
      %256 = arith.index_cast %255 : i32 to index
      %c0_82 = arith.constant 0 : index
      %257 = vector.load %arg12[%256, %c0_82] : memref<256x128xf32, #tpu.memory_space<vmem>>, vector<8x128xf32>
      %258 = arith.truncf %214 : vector<8x32xf32> to vector<8x32xbf16>
      %cst_83 = arith.constant dense<0.000000e+00> : vector<8x128xf32>
      %259 = tpu.matmul %258, %14, %cst_83 {dimension_numbers = #tpu.dot_dimension_numbers<[1], [0], [0], [1], [0, 0, 1, 1], [], []>} : vector<8x32xbf16>, vector<32x128xbf16>, vector<8x128xf32> -> vector<8x128xf32>
      %260 = arith.addf %253, %259 : vector<8x128xf32>
      %261 = arith.truncf %239 : vector<8x32xf32> to vector<8x32xbf16>
      %cst_84 = arith.constant dense<0.000000e+00> : vector<8x128xf32>
      %262 = tpu.matmul %261, %15, %cst_84 {dimension_numbers = #tpu.dot_dimension_numbers<[1], [0], [0], [1], [0, 0, 1, 1], [], []>} : vector<8x32xbf16>, vector<32x128xbf16>, vector<8x128xf32> -> vector<8x128xf32>
      %263 = arith.addf %257, %262 : vector<8x128xf32>
      %264 = vector.extract_strided_slice %260 {offsets = [0, 0], sizes = [8, 32], strides = [1, 1]} : vector<8x128xf32> to vector<8x32xf32>
      %265 = arith.negf %264 : vector<8x32xf32>
      %266 = math.exp %265 : vector<8x32xf32>
      %cst_85 = arith.constant 1.000000e+00 : f32
      %267 = vector.broadcast %cst_85 : f32 to vector<8x32xf32>
      %268 = arith.addf %267, %266 : vector<8x32xf32>
      %269 = arith.divf %267, %268 : vector<8x32xf32>
      %270 = vector.extract_strided_slice %260 {offsets = [0, 32], sizes = [8, 32], strides = [1, 1]} : vector<8x128xf32> to vector<8x32xf32>
      %271 = arith.negf %270 : vector<8x32xf32>
      %272 = math.exp %271 : vector<8x32xf32>
      %cst_86 = arith.constant 1.000000e+00 : f32
      %273 = vector.broadcast %cst_86 : f32 to vector<8x32xf32>
      %274 = arith.addf %273, %272 : vector<8x32xf32>
      %275 = arith.divf %273, %274 : vector<8x32xf32>
      %276 = vector.extract_strided_slice %260 {offsets = [0, 64], sizes = [8, 32], strides = [1, 1]} : vector<8x128xf32> to vector<8x32xf32>
      %277 = math.tanh %276 : vector<8x32xf32>
      %278 = vector.extract_strided_slice %260 {offsets = [0, 96], sizes = [8, 32], strides = [1, 1]} : vector<8x128xf32> to vector<8x32xf32>
      %279 = arith.negf %278 : vector<8x32xf32>
      %280 = math.exp %279 : vector<8x32xf32>
      %cst_87 = arith.constant 1.000000e+00 : f32
      %281 = vector.broadcast %cst_87 : f32 to vector<8x32xf32>
      %282 = arith.addf %281, %280 : vector<8x32xf32>
      %283 = arith.divf %281, %282 : vector<8x32xf32>
      %284 = arith.mulf %275, %212 : vector<8x32xf32>
      %285 = arith.mulf %269, %277 : vector<8x32xf32>
      %286 = arith.addf %284, %285 : vector<8x32xf32>
      %287 = math.tanh %286 : vector<8x32xf32>
      %288 = arith.mulf %283, %287 : vector<8x32xf32>
      %289 = vector.extract_strided_slice %263 {offsets = [0, 0], sizes = [8, 32], strides = [1, 1]} : vector<8x128xf32> to vector<8x32xf32>
      %290 = arith.negf %289 : vector<8x32xf32>
      %291 = math.exp %290 : vector<8x32xf32>
      %cst_88 = arith.constant 1.000000e+00 : f32
      %292 = vector.broadcast %cst_88 : f32 to vector<8x32xf32>
      %293 = arith.addf %292, %291 : vector<8x32xf32>
      %294 = arith.divf %292, %293 : vector<8x32xf32>
      %295 = vector.extract_strided_slice %263 {offsets = [0, 32], sizes = [8, 32], strides = [1, 1]} : vector<8x128xf32> to vector<8x32xf32>
      %296 = arith.negf %295 : vector<8x32xf32>
      %297 = math.exp %296 : vector<8x32xf32>
      %cst_89 = arith.constant 1.000000e+00 : f32
      %298 = vector.broadcast %cst_89 : f32 to vector<8x32xf32>
      %299 = arith.addf %298, %297 : vector<8x32xf32>
      %300 = arith.divf %298, %299 : vector<8x32xf32>
      %301 = vector.extract_strided_slice %263 {offsets = [0, 64], sizes = [8, 32], strides = [1, 1]} : vector<8x128xf32> to vector<8x32xf32>
      %302 = math.tanh %301 : vector<8x32xf32>
      %303 = vector.extract_strided_slice %263 {offsets = [0, 96], sizes = [8, 32], strides = [1, 1]} : vector<8x128xf32> to vector<8x32xf32>
      %304 = arith.negf %303 : vector<8x32xf32>
      %305 = math.exp %304 : vector<8x32xf32>
      %cst_90 = arith.constant 1.000000e+00 : f32
      %306 = vector.broadcast %cst_90 : f32 to vector<8x32xf32>
      %307 = arith.addf %306, %305 : vector<8x32xf32>
      %308 = arith.divf %306, %307 : vector<8x32xf32>
      %309 = arith.mulf %300, %237 : vector<8x32xf32>
      %310 = arith.mulf %294, %302 : vector<8x32xf32>
      %311 = arith.addf %309, %310 : vector<8x32xf32>
      %312 = math.tanh %311 : vector<8x32xf32>
      %313 = arith.mulf %308, %312 : vector<8x32xf32>
      %314 = tpu.concatenate %288, %313 in 1 : vector<8x32xf32>, vector<8x32xf32> -> vector<8x64xf32>
      %315 = arith.truncf %314 : vector<8x64xf32> to vector<8x64xbf16>
      %316 = arith.index_cast %248 : i32 to index
      %c0_91 = arith.constant 0 : index
      %c0_92 = arith.constant 0 : index
      %317 = vector.load %arg8[%316, %c0_91, %c0_92] : memref<32x64x128xbf16, #tpu.memory_space<vmem>>, vector<1x64x128xbf16>
      %318 = vector.shape_cast %317 : vector<1x64x128xbf16> to vector<64x128xbf16>
      %cst_93 = arith.constant dense<0.000000e+00> : vector<8x128xf32>
      %319 = tpu.matmul %315, %318, %cst_93 {dimension_numbers = #tpu.dot_dimension_numbers<[1], [0], [0], [1], [0, 0, 1, 1], [], []>} : vector<8x64xbf16>, vector<64x128xbf16>, vector<8x128xf32> -> vector<8x128xf32>
      %320 = arith.addf %246, %319 : vector<8x128xf32>
      %c8_i32_94 = arith.constant 8 : i32
      %321 = arith.muli %arg13, %c8_i32_94 : i32
      %c4_i32_95 = arith.constant 4 : i32
      %322 = arith.addi %321, %c4_i32_95 : i32
      %c31_i32_96 = arith.constant 31 : i32
      %323 = arith.subi %c31_i32_96, %322 : i32
      %c8_i32_97 = arith.constant 8 : i32
      %324 = arith.muli %322, %c8_i32_97 : i32
      %325 = tpu.assume_multiple %324, 8 : i32
      %326 = arith.index_cast %325 : i32 to index
      %c0_98 = arith.constant 0 : index
      %327 = vector.load %arg11[%326, %c0_98] : memref<256x128xf32, #tpu.memory_space<vmem>>, vector<8x128xf32>
      %c8_i32_99 = arith.constant 8 : i32
      %328 = arith.muli %323, %c8_i32_99 : i32
      %329 = tpu.assume_multiple %328, 8 : i32
      %330 = arith.index_cast %329 : i32 to index
      %c0_100 = arith.constant 0 : index
      %331 = vector.load %arg12[%330, %c0_100] : memref<256x128xf32, #tpu.memory_space<vmem>>, vector<8x128xf32>
      %332 = arith.truncf %288 : vector<8x32xf32> to vector<8x32xbf16>
      %cst_101 = arith.constant dense<0.000000e+00> : vector<8x128xf32>
      %333 = tpu.matmul %332, %14, %cst_101 {dimension_numbers = #tpu.dot_dimension_numbers<[1], [0], [0], [1], [0, 0, 1, 1], [], []>} : vector<8x32xbf16>, vector<32x128xbf16>, vector<8x128xf32> -> vector<8x128xf32>
      %334 = arith.addf %327, %333 : vector<8x128xf32>
      %335 = arith.truncf %313 : vector<8x32xf32> to vector<8x32xbf16>
      %cst_102 = arith.constant dense<0.000000e+00> : vector<8x128xf32>
      %336 = tpu.matmul %335, %15, %cst_102 {dimension_numbers = #tpu.dot_dimension_numbers<[1], [0], [0], [1], [0, 0, 1, 1], [], []>} : vector<8x32xbf16>, vector<32x128xbf16>, vector<8x128xf32> -> vector<8x128xf32>
      %337 = arith.addf %331, %336 : vector<8x128xf32>
      %338 = vector.extract_strided_slice %334 {offsets = [0, 0], sizes = [8, 32], strides = [1, 1]} : vector<8x128xf32> to vector<8x32xf32>
      %339 = arith.negf %338 : vector<8x32xf32>
      %340 = math.exp %339 : vector<8x32xf32>
      %cst_103 = arith.constant 1.000000e+00 : f32
      %341 = vector.broadcast %cst_103 : f32 to vector<8x32xf32>
      %342 = arith.addf %341, %340 : vector<8x32xf32>
      %343 = arith.divf %341, %342 : vector<8x32xf32>
      %344 = vector.extract_strided_slice %334 {offsets = [0, 32], sizes = [8, 32], strides = [1, 1]} : vector<8x128xf32> to vector<8x32xf32>
      %345 = arith.negf %344 : vector<8x32xf32>
      %346 = math.exp %345 : vector<8x32xf32>
      %cst_104 = arith.constant 1.000000e+00 : f32
      %347 = vector.broadcast %cst_104 : f32 to vector<8x32xf32>
      %348 = arith.addf %347, %346 : vector<8x32xf32>
      %349 = arith.divf %347, %348 : vector<8x32xf32>
      %350 = vector.extract_strided_slice %334 {offsets = [0, 64], sizes = [8, 32], strides = [1, 1]} : vector<8x128xf32> to vector<8x32xf32>
      %351 = math.tanh %350 : vector<8x32xf32>
      %352 = vector.extract_strided_slice %334 {offsets = [0, 96], sizes = [8, 32], strides = [1, 1]} : vector<8x128xf32> to vector<8x32xf32>
      %353 = arith.negf %352 : vector<8x32xf32>
      %354 = math.exp %353 : vector<8x32xf32>
      %cst_105 = arith.constant 1.000000e+00 : f32
      %355 = vector.broadcast %cst_105 : f32 to vector<8x32xf32>
      %356 = arith.addf %355, %354 : vector<8x32xf32>
      %357 = arith.divf %355, %356 : vector<8x32xf32>
      %358 = arith.mulf %349, %286 : vector<8x32xf32>
      %359 = arith.mulf %343, %351 : vector<8x32xf32>
      %360 = arith.addf %358, %359 : vector<8x32xf32>
      %361 = math.tanh %360 : vector<8x32xf32>
      %362 = arith.mulf %357, %361 : vector<8x32xf32>
      %363 = vector.extract_strided_slice %337 {offsets = [0, 0], sizes = [8, 32], strides = [1, 1]} : vector<8x128xf32> to vector<8x32xf32>
      %364 = arith.negf %363 : vector<8x32xf32>
      %365 = math.exp %364 : vector<8x32xf32>
      %cst_106 = arith.constant 1.000000e+00 : f32
      %366 = vector.broadcast %cst_106 : f32 to vector<8x32xf32>
      %367 = arith.addf %366, %365 : vector<8x32xf32>
      %368 = arith.divf %366, %367 : vector<8x32xf32>
      %369 = vector.extract_strided_slice %337 {offsets = [0, 32], sizes = [8, 32], strides = [1, 1]} : vector<8x128xf32> to vector<8x32xf32>
      %370 = arith.negf %369 : vector<8x32xf32>
      %371 = math.exp %370 : vector<8x32xf32>
      %cst_107 = arith.constant 1.000000e+00 : f32
      %372 = vector.broadcast %cst_107 : f32 to vector<8x32xf32>
      %373 = arith.addf %372, %371 : vector<8x32xf32>
      %374 = arith.divf %372, %373 : vector<8x32xf32>
      %375 = vector.extract_strided_slice %337 {offsets = [0, 64], sizes = [8, 32], strides = [1, 1]} : vector<8x128xf32> to vector<8x32xf32>
      %376 = math.tanh %375 : vector<8x32xf32>
      %377 = vector.extract_strided_slice %337 {offsets = [0, 96], sizes = [8, 32], strides = [1, 1]} : vector<8x128xf32> to vector<8x32xf32>
      %378 = arith.negf %377 : vector<8x32xf32>
      %379 = math.exp %378 : vector<8x32xf32>
      %cst_108 = arith.constant 1.000000e+00 : f32
      %380 = vector.broadcast %cst_108 : f32 to vector<8x32xf32>
      %381 = arith.addf %380, %379 : vector<8x32xf32>
      %382 = arith.divf %380, %381 : vector<8x32xf32>
      %383 = arith.mulf %374, %311 : vector<8x32xf32>
      %384 = arith.mulf %368, %376 : vector<8x32xf32>
      %385 = arith.addf %383, %384 : vector<8x32xf32>
      %386 = math.tanh %385 : vector<8x32xf32>
      %387 = arith.mulf %382, %386 : vector<8x32xf32>
      %388 = tpu.concatenate %362, %387 in 1 : vector<8x32xf32>, vector<8x32xf32> -> vector<8x64xf32>
      %389 = arith.truncf %388 : vector<8x64xf32> to vector<8x64xbf16>
      %390 = arith.index_cast %322 : i32 to index
      %c0_109 = arith.constant 0 : index
      %c0_110 = arith.constant 0 : index
      %391 = vector.load %arg8[%390, %c0_109, %c0_110] : memref<32x64x128xbf16, #tpu.memory_space<vmem>>, vector<1x64x128xbf16>
      %392 = vector.shape_cast %391 : vector<1x64x128xbf16> to vector<64x128xbf16>
      %cst_111 = arith.constant dense<0.000000e+00> : vector<8x128xf32>
      %393 = tpu.matmul %389, %392, %cst_111 {dimension_numbers = #tpu.dot_dimension_numbers<[1], [0], [0], [1], [0, 0, 1, 1], [], []>} : vector<8x64xbf16>, vector<64x128xbf16>, vector<8x128xf32> -> vector<8x128xf32>
      %394 = arith.addf %320, %393 : vector<8x128xf32>
      %c8_i32_112 = arith.constant 8 : i32
      %395 = arith.muli %arg13, %c8_i32_112 : i32
      %c5_i32 = arith.constant 5 : i32
      %396 = arith.addi %395, %c5_i32 : i32
      %c31_i32_113 = arith.constant 31 : i32
      %397 = arith.subi %c31_i32_113, %396 : i32
      %c8_i32_114 = arith.constant 8 : i32
      %398 = arith.muli %396, %c8_i32_114 : i32
      %399 = tpu.assume_multiple %398, 8 : i32
      %400 = arith.index_cast %399 : i32 to index
      %c0_115 = arith.constant 0 : index
      %401 = vector.load %arg11[%400, %c0_115] : memref<256x128xf32, #tpu.memory_space<vmem>>, vector<8x128xf32>
      %c8_i32_116 = arith.constant 8 : i32
      %402 = arith.muli %397, %c8_i32_116 : i32
      %403 = tpu.assume_multiple %402, 8 : i32
      %404 = arith.index_cast %403 : i32 to index
      %c0_117 = arith.constant 0 : index
      %405 = vector.load %arg12[%404, %c0_117] : memref<256x128xf32, #tpu.memory_space<vmem>>, vector<8x128xf32>
      %406 = arith.truncf %362 : vector<8x32xf32> to vector<8x32xbf16>
      %cst_118 = arith.constant dense<0.000000e+00> : vector<8x128xf32>
      %407 = tpu.matmul %406, %14, %cst_118 {dimension_numbers = #tpu.dot_dimension_numbers<[1], [0], [0], [1], [0, 0, 1, 1], [], []>} : vector<8x32xbf16>, vector<32x128xbf16>, vector<8x128xf32> -> vector<8x128xf32>
      %408 = arith.addf %401, %407 : vector<8x128xf32>
      %409 = arith.truncf %387 : vector<8x32xf32> to vector<8x32xbf16>
      %cst_119 = arith.constant dense<0.000000e+00> : vector<8x128xf32>
      %410 = tpu.matmul %409, %15, %cst_119 {dimension_numbers = #tpu.dot_dimension_numbers<[1], [0], [0], [1], [0, 0, 1, 1], [], []>} : vector<8x32xbf16>, vector<32x128xbf16>, vector<8x128xf32> -> vector<8x128xf32>
      %411 = arith.addf %405, %410 : vector<8x128xf32>
      %412 = vector.extract_strided_slice %408 {offsets = [0, 0], sizes = [8, 32], strides = [1, 1]} : vector<8x128xf32> to vector<8x32xf32>
      %413 = arith.negf %412 : vector<8x32xf32>
      %414 = math.exp %413 : vector<8x32xf32>
      %cst_120 = arith.constant 1.000000e+00 : f32
      %415 = vector.broadcast %cst_120 : f32 to vector<8x32xf32>
      %416 = arith.addf %415, %414 : vector<8x32xf32>
      %417 = arith.divf %415, %416 : vector<8x32xf32>
      %418 = vector.extract_strided_slice %408 {offsets = [0, 32], sizes = [8, 32], strides = [1, 1]} : vector<8x128xf32> to vector<8x32xf32>
      %419 = arith.negf %418 : vector<8x32xf32>
      %420 = math.exp %419 : vector<8x32xf32>
      %cst_121 = arith.constant 1.000000e+00 : f32
      %421 = vector.broadcast %cst_121 : f32 to vector<8x32xf32>
      %422 = arith.addf %421, %420 : vector<8x32xf32>
      %423 = arith.divf %421, %422 : vector<8x32xf32>
      %424 = vector.extract_strided_slice %408 {offsets = [0, 64], sizes = [8, 32], strides = [1, 1]} : vector<8x128xf32> to vector<8x32xf32>
      %425 = math.tanh %424 : vector<8x32xf32>
      %426 = vector.extract_strided_slice %408 {offsets = [0, 96], sizes = [8, 32], strides = [1, 1]} : vector<8x128xf32> to vector<8x32xf32>
      %427 = arith.negf %426 : vector<8x32xf32>
      %428 = math.exp %427 : vector<8x32xf32>
      %cst_122 = arith.constant 1.000000e+00 : f32
      %429 = vector.broadcast %cst_122 : f32 to vector<8x32xf32>
      %430 = arith.addf %429, %428 : vector<8x32xf32>
      %431 = arith.divf %429, %430 : vector<8x32xf32>
      %432 = arith.mulf %423, %360 : vector<8x32xf32>
      %433 = arith.mulf %417, %425 : vector<8x32xf32>
      %434 = arith.addf %432, %433 : vector<8x32xf32>
      %435 = math.tanh %434 : vector<8x32xf32>
      %436 = arith.mulf %431, %435 : vector<8x32xf32>
      %437 = vector.extract_strided_slice %411 {offsets = [0, 0], sizes = [8, 32], strides = [1, 1]} : vector<8x128xf32> to vector<8x32xf32>
      %438 = arith.negf %437 : vector<8x32xf32>
      %439 = math.exp %438 : vector<8x32xf32>
      %cst_123 = arith.constant 1.000000e+00 : f32
      %440 = vector.broadcast %cst_123 : f32 to vector<8x32xf32>
      %441 = arith.addf %440, %439 : vector<8x32xf32>
      %442 = arith.divf %440, %441 : vector<8x32xf32>
      %443 = vector.extract_strided_slice %411 {offsets = [0, 32], sizes = [8, 32], strides = [1, 1]} : vector<8x128xf32> to vector<8x32xf32>
      %444 = arith.negf %443 : vector<8x32xf32>
      %445 = math.exp %444 : vector<8x32xf32>
      %cst_124 = arith.constant 1.000000e+00 : f32
      %446 = vector.broadcast %cst_124 : f32 to vector<8x32xf32>
      %447 = arith.addf %446, %445 : vector<8x32xf32>
      %448 = arith.divf %446, %447 : vector<8x32xf32>
      %449 = vector.extract_strided_slice %411 {offsets = [0, 64], sizes = [8, 32], strides = [1, 1]} : vector<8x128xf32> to vector<8x32xf32>
      %450 = math.tanh %449 : vector<8x32xf32>
      %451 = vector.extract_strided_slice %411 {offsets = [0, 96], sizes = [8, 32], strides = [1, 1]} : vector<8x128xf32> to vector<8x32xf32>
      %452 = arith.negf %451 : vector<8x32xf32>
      %453 = math.exp %452 : vector<8x32xf32>
      %cst_125 = arith.constant 1.000000e+00 : f32
      %454 = vector.broadcast %cst_125 : f32 to vector<8x32xf32>
      %455 = arith.addf %454, %453 : vector<8x32xf32>
      %456 = arith.divf %454, %455 : vector<8x32xf32>
      %457 = arith.mulf %448, %385 : vector<8x32xf32>
      %458 = arith.mulf %442, %450 : vector<8x32xf32>
      %459 = arith.addf %457, %458 : vector<8x32xf32>
      %460 = math.tanh %459 : vector<8x32xf32>
      %461 = arith.mulf %456, %460 : vector<8x32xf32>
      %462 = tpu.concatenate %436, %461 in 1 : vector<8x32xf32>, vector<8x32xf32> -> vector<8x64xf32>
      %463 = arith.truncf %462 : vector<8x64xf32> to vector<8x64xbf16>
      %464 = arith.index_cast %396 : i32 to index
      %c0_126 = arith.constant 0 : index
      %c0_127 = arith.constant 0 : index
      %465 = vector.load %arg8[%464, %c0_126, %c0_127] : memref<32x64x128xbf16, #tpu.memory_space<vmem>>, vector<1x64x128xbf16>
      %466 = vector.shape_cast %465 : vector<1x64x128xbf16> to vector<64x128xbf16>
      %cst_128 = arith.constant dense<0.000000e+00> : vector<8x128xf32>
      %467 = tpu.matmul %463, %466, %cst_128 {dimension_numbers = #tpu.dot_dimension_numbers<[1], [0], [0], [1], [0, 0, 1, 1], [], []>} : vector<8x64xbf16>, vector<64x128xbf16>, vector<8x128xf32> -> vector<8x128xf32>
      %468 = arith.addf %394, %467 : vector<8x128xf32>
      %c8_i32_129 = arith.constant 8 : i32
      %469 = arith.muli %arg13, %c8_i32_129 : i32
      %c6_i32 = arith.constant 6 : i32
      %470 = arith.addi %469, %c6_i32 : i32
      %c31_i32_130 = arith.constant 31 : i32
      %471 = arith.subi %c31_i32_130, %470 : i32
      %c8_i32_131 = arith.constant 8 : i32
      %472 = arith.muli %470, %c8_i32_131 : i32
      %473 = tpu.assume_multiple %472, 8 : i32
      %474 = arith.index_cast %473 : i32 to index
      %c0_132 = arith.constant 0 : index
      %475 = vector.load %arg11[%474, %c0_132] : memref<256x128xf32, #tpu.memory_space<vmem>>, vector<8x128xf32>
      %c8_i32_133 = arith.constant 8 : i32
      %476 = arith.muli %471, %c8_i32_133 : i32
      %477 = tpu.assume_multiple %476, 8 : i32
      %478 = arith.index_cast %477 : i32 to index
      %c0_134 = arith.constant 0 : index
      %479 = vector.load %arg12[%478, %c0_134] : memref<256x128xf32, #tpu.memory_space<vmem>>, vector<8x128xf32>
      %480 = arith.truncf %436 : vector<8x32xf32> to vector<8x32xbf16>
      %cst_135 = arith.constant dense<0.000000e+00> : vector<8x128xf32>
      %481 = tpu.matmul %480, %14, %cst_135 {dimension_numbers = #tpu.dot_dimension_numbers<[1], [0], [0], [1], [0, 0, 1, 1], [], []>} : vector<8x32xbf16>, vector<32x128xbf16>, vector<8x128xf32> -> vector<8x128xf32>
      %482 = arith.addf %475, %481 : vector<8x128xf32>
      %483 = arith.truncf %461 : vector<8x32xf32> to vector<8x32xbf16>
      %cst_136 = arith.constant dense<0.000000e+00> : vector<8x128xf32>
      %484 = tpu.matmul %483, %15, %cst_136 {dimension_numbers = #tpu.dot_dimension_numbers<[1], [0], [0], [1], [0, 0, 1, 1], [], []>} : vector<8x32xbf16>, vector<32x128xbf16>, vector<8x128xf32> -> vector<8x128xf32>
      %485 = arith.addf %479, %484 : vector<8x128xf32>
      %486 = vector.extract_strided_slice %482 {offsets = [0, 0], sizes = [8, 32], strides = [1, 1]} : vector<8x128xf32> to vector<8x32xf32>
      %487 = arith.negf %486 : vector<8x32xf32>
      %488 = math.exp %487 : vector<8x32xf32>
      %cst_137 = arith.constant 1.000000e+00 : f32
      %489 = vector.broadcast %cst_137 : f32 to vector<8x32xf32>
      %490 = arith.addf %489, %488 : vector<8x32xf32>
      %491 = arith.divf %489, %490 : vector<8x32xf32>
      %492 = vector.extract_strided_slice %482 {offsets = [0, 32], sizes = [8, 32], strides = [1, 1]} : vector<8x128xf32> to vector<8x32xf32>
      %493 = arith.negf %492 : vector<8x32xf32>
      %494 = math.exp %493 : vector<8x32xf32>
      %cst_138 = arith.constant 1.000000e+00 : f32
      %495 = vector.broadcast %cst_138 : f32 to vector<8x32xf32>
      %496 = arith.addf %495, %494 : vector<8x32xf32>
      %497 = arith.divf %495, %496 : vector<8x32xf32>
      %498 = vector.extract_strided_slice %482 {offsets = [0, 64], sizes = [8, 32], strides = [1, 1]} : vector<8x128xf32> to vector<8x32xf32>
      %499 = math.tanh %498 : vector<8x32xf32>
      %500 = vector.extract_strided_slice %482 {offsets = [0, 96], sizes = [8, 32], strides = [1, 1]} : vector<8x128xf32> to vector<8x32xf32>
      %501 = arith.negf %500 : vector<8x32xf32>
      %502 = math.exp %501 : vector<8x32xf32>
      %cst_139 = arith.constant 1.000000e+00 : f32
      %503 = vector.broadcast %cst_139 : f32 to vector<8x32xf32>
      %504 = arith.addf %503, %502 : vector<8x32xf32>
      %505 = arith.divf %503, %504 : vector<8x32xf32>
      %506 = arith.mulf %497, %434 : vector<8x32xf32>
      %507 = arith.mulf %491, %499 : vector<8x32xf32>
      %508 = arith.addf %506, %507 : vector<8x32xf32>
      %509 = math.tanh %508 : vector<8x32xf32>
      %510 = arith.mulf %505, %509 : vector<8x32xf32>
      %511 = vector.extract_strided_slice %485 {offsets = [0, 0], sizes = [8, 32], strides = [1, 1]} : vector<8x128xf32> to vector<8x32xf32>
      %512 = arith.negf %511 : vector<8x32xf32>
      %513 = math.exp %512 : vector<8x32xf32>
      %cst_140 = arith.constant 1.000000e+00 : f32
      %514 = vector.broadcast %cst_140 : f32 to vector<8x32xf32>
      %515 = arith.addf %514, %513 : vector<8x32xf32>
      %516 = arith.divf %514, %515 : vector<8x32xf32>
      %517 = vector.extract_strided_slice %485 {offsets = [0, 32], sizes = [8, 32], strides = [1, 1]} : vector<8x128xf32> to vector<8x32xf32>
      %518 = arith.negf %517 : vector<8x32xf32>
      %519 = math.exp %518 : vector<8x32xf32>
      %cst_141 = arith.constant 1.000000e+00 : f32
      %520 = vector.broadcast %cst_141 : f32 to vector<8x32xf32>
      %521 = arith.addf %520, %519 : vector<8x32xf32>
      %522 = arith.divf %520, %521 : vector<8x32xf32>
      %523 = vector.extract_strided_slice %485 {offsets = [0, 64], sizes = [8, 32], strides = [1, 1]} : vector<8x128xf32> to vector<8x32xf32>
      %524 = math.tanh %523 : vector<8x32xf32>
      %525 = vector.extract_strided_slice %485 {offsets = [0, 96], sizes = [8, 32], strides = [1, 1]} : vector<8x128xf32> to vector<8x32xf32>
      %526 = arith.negf %525 : vector<8x32xf32>
      %527 = math.exp %526 : vector<8x32xf32>
      %cst_142 = arith.constant 1.000000e+00 : f32
      %528 = vector.broadcast %cst_142 : f32 to vector<8x32xf32>
      %529 = arith.addf %528, %527 : vector<8x32xf32>
      %530 = arith.divf %528, %529 : vector<8x32xf32>
      %531 = arith.mulf %522, %459 : vector<8x32xf32>
      %532 = arith.mulf %516, %524 : vector<8x32xf32>
      %533 = arith.addf %531, %532 : vector<8x32xf32>
      %534 = math.tanh %533 : vector<8x32xf32>
      %535 = arith.mulf %530, %534 : vector<8x32xf32>
      %536 = tpu.concatenate %510, %535 in 1 : vector<8x32xf32>, vector<8x32xf32> -> vector<8x64xf32>
      %537 = arith.truncf %536 : vector<8x64xf32> to vector<8x64xbf16>
      %538 = arith.index_cast %470 : i32 to index
      %c0_143 = arith.constant 0 : index
      %c0_144 = arith.constant 0 : index
      %539 = vector.load %arg8[%538, %c0_143, %c0_144] : memref<32x64x128xbf16, #tpu.memory_space<vmem>>, vector<1x64x128xbf16>
      %540 = vector.shape_cast %539 : vector<1x64x128xbf16> to vector<64x128xbf16>
      %cst_145 = arith.constant dense<0.000000e+00> : vector<8x128xf32>
      %541 = tpu.matmul %537, %540, %cst_145 {dimension_numbers = #tpu.dot_dimension_numbers<[1], [0], [0], [1], [0, 0, 1, 1], [], []>} : vector<8x64xbf16>, vector<64x128xbf16>, vector<8x128xf32> -> vector<8x128xf32>
      %542 = arith.addf %468, %541 : vector<8x128xf32>
      %c8_i32_146 = arith.constant 8 : i32
      %543 = arith.muli %arg13, %c8_i32_146 : i32
      %c7_i32 = arith.constant 7 : i32
      %544 = arith.addi %543, %c7_i32 : i32
      %c31_i32_147 = arith.constant 31 : i32
      %545 = arith.subi %c31_i32_147, %544 : i32
      %c8_i32_148 = arith.constant 8 : i32
      %546 = arith.muli %544, %c8_i32_148 : i32
      %547 = tpu.assume_multiple %546, 8 : i32
      %548 = arith.index_cast %547 : i32 to index
      %c0_149 = arith.constant 0 : index
      %549 = vector.load %arg11[%548, %c0_149] : memref<256x128xf32, #tpu.memory_space<vmem>>, vector<8x128xf32>
      %c8_i32_150 = arith.constant 8 : i32
      %550 = arith.muli %545, %c8_i32_150 : i32
      %551 = tpu.assume_multiple %550, 8 : i32
      %552 = arith.index_cast %551 : i32 to index
      %c0_151 = arith.constant 0 : index
      %553 = vector.load %arg12[%552, %c0_151] : memref<256x128xf32, #tpu.memory_space<vmem>>, vector<8x128xf32>
      %554 = arith.truncf %510 : vector<8x32xf32> to vector<8x32xbf16>
      %cst_152 = arith.constant dense<0.000000e+00> : vector<8x128xf32>
      %555 = tpu.matmul %554, %14, %cst_152 {dimension_numbers = #tpu.dot_dimension_numbers<[1], [0], [0], [1], [0, 0, 1, 1], [], []>} : vector<8x32xbf16>, vector<32x128xbf16>, vector<8x128xf32> -> vector<8x128xf32>
      %556 = arith.addf %549, %555 : vector<8x128xf32>
      %557 = arith.truncf %535 : vector<8x32xf32> to vector<8x32xbf16>
      %cst_153 = arith.constant dense<0.000000e+00> : vector<8x128xf32>
      %558 = tpu.matmul %557, %15, %cst_153 {dimension_numbers = #tpu.dot_dimension_numbers<[1], [0], [0], [1], [0, 0, 1, 1], [], []>} : vector<8x32xbf16>, vector<32x128xbf16>, vector<8x128xf32> -> vector<8x128xf32>
      %559 = arith.addf %553, %558 : vector<8x128xf32>
      %560 = vector.extract_strided_slice %556 {offsets = [0, 0], sizes = [8, 32], strides = [1, 1]} : vector<8x128xf32> to vector<8x32xf32>
      %561 = arith.negf %560 : vector<8x32xf32>
      %562 = math.exp %561 : vector<8x32xf32>
      %cst_154 = arith.constant 1.000000e+00 : f32
      %563 = vector.broadcast %cst_154 : f32 to vector<8x32xf32>
      %564 = arith.addf %563, %562 : vector<8x32xf32>
      %565 = arith.divf %563, %564 : vector<8x32xf32>
      %566 = vector.extract_strided_slice %556 {offsets = [0, 32], sizes = [8, 32], strides = [1, 1]} : vector<8x128xf32> to vector<8x32xf32>
      %567 = arith.negf %566 : vector<8x32xf32>
      %568 = math.exp %567 : vector<8x32xf32>
      %cst_155 = arith.constant 1.000000e+00 : f32
      %569 = vector.broadcast %cst_155 : f32 to vector<8x32xf32>
      %570 = arith.addf %569, %568 : vector<8x32xf32>
      %571 = arith.divf %569, %570 : vector<8x32xf32>
      %572 = vector.extract_strided_slice %556 {offsets = [0, 64], sizes = [8, 32], strides = [1, 1]} : vector<8x128xf32> to vector<8x32xf32>
      %573 = math.tanh %572 : vector<8x32xf32>
      %574 = vector.extract_strided_slice %556 {offsets = [0, 96], sizes = [8, 32], strides = [1, 1]} : vector<8x128xf32> to vector<8x32xf32>
      %575 = arith.negf %574 : vector<8x32xf32>
      %576 = math.exp %575 : vector<8x32xf32>
      %cst_156 = arith.constant 1.000000e+00 : f32
      %577 = vector.broadcast %cst_156 : f32 to vector<8x32xf32>
      %578 = arith.addf %577, %576 : vector<8x32xf32>
      %579 = arith.divf %577, %578 : vector<8x32xf32>
      %580 = arith.mulf %571, %508 : vector<8x32xf32>
      %581 = arith.mulf %565, %573 : vector<8x32xf32>
      %582 = arith.addf %580, %581 : vector<8x32xf32>
      %583 = math.tanh %582 : vector<8x32xf32>
      %584 = arith.mulf %579, %583 : vector<8x32xf32>
      %585 = vector.extract_strided_slice %559 {offsets = [0, 0], sizes = [8, 32], strides = [1, 1]} : vector<8x128xf32> to vector<8x32xf32>
      %586 = arith.negf %585 : vector<8x32xf32>
      %587 = math.exp %586 : vector<8x32xf32>
      %cst_157 = arith.constant 1.000000e+00 : f32
      %588 = vector.broadcast %cst_157 : f32 to vector<8x32xf32>
      %589 = arith.addf %588, %587 : vector<8x32xf32>
      %590 = arith.divf %588, %589 : vector<8x32xf32>
      %591 = vector.extract_strided_slice %559 {offsets = [0, 32], sizes = [8, 32], strides = [1, 1]} : vector<8x128xf32> to vector<8x32xf32>
      %592 = arith.negf %591 : vector<8x32xf32>
      %593 = math.exp %592 : vector<8x32xf32>
      %cst_158 = arith.constant 1.000000e+00 : f32
      %594 = vector.broadcast %cst_158 : f32 to vector<8x32xf32>
      %595 = arith.addf %594, %593 : vector<8x32xf32>
      %596 = arith.divf %594, %595 : vector<8x32xf32>
      %597 = vector.extract_strided_slice %559 {offsets = [0, 64], sizes = [8, 32], strides = [1, 1]} : vector<8x128xf32> to vector<8x32xf32>
      %598 = math.tanh %597 : vector<8x32xf32>
      %599 = vector.extract_strided_slice %559 {offsets = [0, 96], sizes = [8, 32], strides = [1, 1]} : vector<8x128xf32> to vector<8x32xf32>
      %600 = arith.negf %599 : vector<8x32xf32>
      %601 = math.exp %600 : vector<8x32xf32>
      %cst_159 = arith.constant 1.000000e+00 : f32
      %602 = vector.broadcast %cst_159 : f32 to vector<8x32xf32>
      %603 = arith.addf %602, %601 : vector<8x32xf32>
      %604 = arith.divf %602, %603 : vector<8x32xf32>
      %605 = arith.mulf %596, %533 : vector<8x32xf32>
      %606 = arith.mulf %590, %598 : vector<8x32xf32>
      %607 = arith.addf %605, %606 : vector<8x32xf32>
      %608 = math.tanh %607 : vector<8x32xf32>
      %609 = arith.mulf %604, %608 : vector<8x32xf32>
      %610 = tpu.concatenate %584, %609 in 1 : vector<8x32xf32>, vector<8x32xf32> -> vector<8x64xf32>
      %611 = arith.truncf %610 : vector<8x64xf32> to vector<8x64xbf16>
      %612 = arith.index_cast %544 : i32 to index
      %c0_160 = arith.constant 0 : index
      %c0_161 = arith.constant 0 : index
      %613 = vector.load %arg8[%612, %c0_160, %c0_161] : memref<32x64x128xbf16, #tpu.memory_space<vmem>>, vector<1x64x128xbf16>
      %614 = vector.shape_cast %613 : vector<1x64x128xbf16> to vector<64x128xbf16>
      %cst_162 = arith.constant dense<0.000000e+00> : vector<8x128xf32>
      %615 = tpu.matmul %611, %614, %cst_162 {dimension_numbers = #tpu.dot_dimension_numbers<[1], [0], [0], [1], [0, 0, 1, 1], [], []>} : vector<8x64xbf16>, vector<64x128xbf16>, vector<8x128xf32> -> vector<8x128xf32>
      %616 = arith.addf %542, %615 : vector<8x128xf32>
      scf.yield %584, %582, %609, %607, %616 : vector<8x32xf32>, vector<8x32xf32>, vector<8x32xf32>, vector<8x32xf32>, vector<8x128xf32>
    }
    %c4_i32_21 = arith.constant 4 : i32
    %c0_22 = arith.constant 0 : index
    %c0_23 = arith.constant 0 : index
    %20 = vector.load %arg9[%c0_22, %c0_23] : memref<1x128xf32, #tpu.memory_space<vmem>>, vector<1x128xf32>
    %21 = vector.broadcast %20 : vector<1x128xf32> to vector<8x128xf32>
    %22 = arith.addf %19#4, %21 : vector<8x128xf32>
    %23 = arith.truncf %22 : vector<8x128xf32> to vector<8x128xbf16>
    %c0_24 = arith.constant 0 : index
    %c0_25 = arith.constant 0 : index
    %24 = vector.load %arg10[%c0_24, %c0_25] : memref<8x128xbf16, #tpu.memory_space<vmem>>, vector<8x128xbf16>
    tpu.vector_store %arg10[%c0_24, %c0_25], %23 {strides = array<i32>} : memref<8x128xbf16, #tpu.memory_space<vmem>>, vector<8x128xbf16>,
    return
  }
  func.func @transform_0(%arg0: i32) -> (i32, i32, i32) {
    %c0_i32 = arith.constant 0 : i32
    %c0_i32_0 = arith.constant 0 : i32
    %c0_i32_1 = arith.constant 0 : i32
    return %c0_i32, %arg0, %c0_i32_0 : i32, i32, i32
  }
  func.func @transform_1(%arg0: i32) -> (i32, i32) {
    %c0_i32 = arith.constant 0 : i32
    %c0_i32_0 = arith.constant 0 : i32
    %c0_i32_1 = arith.constant 0 : i32
    return %c0_i32, %c0_i32_0 : i32, i32
  }
  func.func @transform_2(%arg0: i32) -> (i32, i32) {
    %c0_i32 = arith.constant 0 : i32
    %c0_i32_0 = arith.constant 0 : i32
    %c0_i32_1 = arith.constant 0 : i32
    return %c0_i32, %c0_i32_0 : i32, i32
  }
  func.func @transform_3(%arg0: i32) -> (i32, i32) {
    %c0_i32 = arith.constant 0 : i32
    %c0_i32_0 = arith.constant 0 : i32
    %c0_i32_1 = arith.constant 0 : i32
    return %c0_i32, %c0_i32_0 : i32, i32
  }
  func.func @transform_4(%arg0: i32) -> (i32, i32) {
    %c0_i32 = arith.constant 0 : i32
    %c0_i32_0 = arith.constant 0 : i32
    %c0_i32_1 = arith.constant 0 : i32
    return %c0_i32, %c0_i32_0 : i32, i32
  }
  func.func @transform_5(%arg0: i32) -> (i32, i32) {
    %c0_i32 = arith.constant 0 : i32
    %c0_i32_0 = arith.constant 0 : i32
    %c0_i32_1 = arith.constant 0 : i32
    return %c0_i32, %c0_i32_0 : i32, i32
  }
  func.func @transform_6(%arg0: i32) -> (i32, i32) {
    %c0_i32 = arith.constant 0 : i32
    %c0_i32_0 = arith.constant 0 : i32
    %c0_i32_1 = arith.constant 0 : i32
    return %c0_i32, %c0_i32_0 : i32, i32
  }
  func.func @transform_7(%arg0: i32) -> (i32, i32, i32) {
    %c0_i32 = arith.constant 0 : i32
    %c0_i32_0 = arith.constant 0 : i32
    %c0_i32_1 = arith.constant 0 : i32
    %c0_i32_2 = arith.constant 0 : i32
    return %c0_i32, %c0_i32_0, %c0_i32_1 : i32, i32, i32
  }
  func.func @transform_8(%arg0: i32) -> (i32, i32) {
    %c0_i32 = arith.constant 0 : i32
    %c0_i32_0 = arith.constant 0 : i32
    %c0_i32_1 = arith.constant 0 : i32
    return %c0_i32, %c0_i32_0 : i32, i32
  }
  func.func @transform_9(%arg0: i32) -> (i32, i32) {
    %c0_i32 = arith.constant 0 : i32
    %c0_i32_0 = arith.constant 0 : i32
    return %arg0, %c0_i32 : i32, i32
  }
}

module attributes {stable_mosaic.version = 11 : i64} {
  func.func @_context_bilstm_kernel(%arg0: i32, %arg1: memref<4x8x128xbf16, #tpu.memory_space<vmem>>, %arg2: memref<4x8x128xbf16, #tpu.memory_space<vmem>>, %arg3: memref<128x128xbf16, #tpu.memory_space<vmem>>, %arg4: memref<1x128xf32, #tpu.memory_space<vmem>>, %arg5: memref<128x128xbf16, #tpu.memory_space<vmem>>, %arg6: memref<128x128xbf16, #tpu.memory_space<vmem>>, %arg7: memref<128x128xbf16, #tpu.memory_space<vmem>>, %arg8: memref<128x128xbf16, #tpu.memory_space<vmem>>, %arg9: memref<32x128xbf16, #tpu.memory_space<vmem>>, %arg10: memref<32x128xbf16, #tpu.memory_space<vmem>>, %arg11: memref<1x128xf32, #tpu.memory_space<vmem>>, %arg12: memref<1x128xf32, #tpu.memory_space<vmem>>, %arg13: memref<4x64x128xbf16, #tpu.memory_space<vmem>>, %arg14: memref<1x128xf32, #tpu.memory_space<vmem>>, %arg15: memref<8x128xf32, #tpu.memory_space<vmem>>, %arg16: memref<32x128xf32, #tpu.memory_space<vmem>>, %arg17: memref<32x128xf32, #tpu.memory_space<vmem>>) attributes {dimension_semantics = [#tpu.dimension_semantics<parallel>], iteration_bounds = array<i64: 1>, scalar_prefetch = 0 : i64, scratch_operands = 2 : i64, tpu.core_type = #tpu.core_type<tc>, window_params = [{transform_indices = @transform_0, window_bounds = array<i64: 4, 8, 128>}, {transform_indices = @transform_1, window_bounds = array<i64: 4, 8, 128>}, {pipeline_mode = #tpu.pipeline_mode<synchronous>, transform_indices = @transform_2, window_bounds = array<i64: 128, 128>}, {pipeline_mode = #tpu.pipeline_mode<synchronous>, transform_indices = @transform_3, window_bounds = array<i64: 1, 128>}, {pipeline_mode = #tpu.pipeline_mode<synchronous>, transform_indices = @transform_4, window_bounds = array<i64: 128, 128>}, {pipeline_mode = #tpu.pipeline_mode<synchronous>, transform_indices = @transform_5, window_bounds = array<i64: 128, 128>}, {pipeline_mode = #tpu.pipeline_mode<synchronous>, transform_indices = @transform_6, window_bounds = array<i64: 128, 128>}, {pipeline_mode = #tpu.pipeline_mode<synchronous>, transform_indices = @transform_7, window_bounds = array<i64: 128, 128>}, {pipeline_mode = #tpu.pipeline_mode<synchronous>, transform_indices = @transform_8, window_bounds = array<i64: 32, 128>}, {pipeline_mode = #tpu.pipeline_mode<synchronous>, transform_indices = @transform_9, window_bounds = array<i64: 32, 128>}, {pipeline_mode = #tpu.pipeline_mode<synchronous>, transform_indices = @transform_10, window_bounds = array<i64: 1, 128>}, {pipeline_mode = #tpu.pipeline_mode<synchronous>, transform_indices = @transform_11, window_bounds = array<i64: 1, 128>}, {pipeline_mode = #tpu.pipeline_mode<synchronous>, transform_indices = @transform_12, window_bounds = array<i64: 4, 64, 128>}, {pipeline_mode = #tpu.pipeline_mode<synchronous>, transform_indices = @transform_13, window_bounds = array<i64: 1, 128>}, {transform_indices = @transform_14, window_bounds = array<i64: 8, 128>}]} {
    %c0 = arith.constant 0 : index
    %c0_0 = arith.constant 0 : index
    %c0_1 = arith.constant 0 : index
    %0 = vector.load %arg1[%c0, %c0_0, %c0_1] : memref<4x8x128xbf16, #tpu.memory_space<vmem>>, vector<4x8x128xbf16>
    %1 = vector.shape_cast %0 : vector<4x8x128xbf16> to vector<32x128xbf16>
    %c0_2 = arith.constant 0 : index
    %c0_3 = arith.constant 0 : index
    %c0_4 = arith.constant 0 : index
    %2 = vector.load %arg2[%c0_2, %c0_3, %c0_4] : memref<4x8x128xbf16, #tpu.memory_space<vmem>>, vector<4x8x128xbf16>
    %3 = vector.shape_cast %2 : vector<4x8x128xbf16> to vector<32x128xbf16>
    %c0_5 = arith.constant 0 : index
    %c0_6 = arith.constant 0 : index
    %4 = vector.load %arg3[%c0_5, %c0_6] : memref<128x128xbf16, #tpu.memory_space<vmem>>, vector<128x128xbf16>
    %cst = arith.constant dense<0.000000e+00> : vector<32x128xf32>
    %5 = tpu.matmul %3, %4, %cst {dimension_numbers = #tpu.dot_dimension_numbers<[1], [0], [0], [1], [0, 0, 1, 1], [], []>} : vector<32x128xbf16>, vector<128x128xbf16>, vector<32x128xf32> -> vector<32x128xf32>
    %c0_7 = arith.constant 0 : index
    %c0_8 = arith.constant 0 : index
    %6 = vector.load %arg4[%c0_7, %c0_8] : memref<1x128xf32, #tpu.memory_space<vmem>>, vector<1x128xf32>
    %7 = vector.broadcast %6 : vector<1x128xf32> to vector<32x128xf32>
    %8 = arith.addf %5, %7 : vector<32x128xf32>
    %9 = math.tanh %8 : vector<32x128xf32>
    %10 = arith.truncf %9 : vector<32x128xf32> to vector<32x128xbf16>
    %c0_9 = arith.constant 0 : index
    %c0_10 = arith.constant 0 : index
    %11 = vector.load %arg5[%c0_9, %c0_10] : memref<128x128xbf16, #tpu.memory_space<vmem>>, vector<128x128xbf16>
    %cst_11 = arith.constant dense<0.000000e+00> : vector<32x128xf32>
    %12 = tpu.matmul %1, %11, %cst_11 {dimension_numbers = #tpu.dot_dimension_numbers<[1], [0], [0], [1], [0, 0, 1, 1], [], []>} : vector<32x128xbf16>, vector<128x128xbf16>, vector<32x128xf32> -> vector<32x128xf32>
    %c0_12 = arith.constant 0 : index
    %c0_13 = arith.constant 0 : index
    %13 = vector.load %arg7[%c0_12, %c0_13] : memref<128x128xbf16, #tpu.memory_space<vmem>>, vector<128x128xbf16>
    %cst_14 = arith.constant dense<0.000000e+00> : vector<32x128xf32>
    %14 = tpu.matmul %10, %13, %cst_14 {dimension_numbers = #tpu.dot_dimension_numbers<[1], [0], [0], [1], [0, 0, 1, 1], [], []>} : vector<32x128xbf16>, vector<128x128xbf16>, vector<32x128xf32> -> vector<32x128xf32>
    %15 = arith.addf %12, %14 : vector<32x128xf32>
    %c0_15 = arith.constant 0 : index
    %c0_16 = arith.constant 0 : index
    %16 = vector.load %arg11[%c0_15, %c0_16] : memref<1x128xf32, #tpu.memory_space<vmem>>, vector<1x128xf32>
    %17 = vector.broadcast %16 : vector<1x128xf32> to vector<32x128xf32>
    %18 = arith.addf %15, %17 : vector<32x128xf32>
    %c0_17 = arith.constant 0 : index
    %c0_18 = arith.constant 0 : index
    %19 = vector.load %arg16[%c0_17, %c0_18] : memref<32x128xf32, #tpu.memory_space<vmem>>, vector<32x128xf32>
    tpu.vector_store %arg16[%c0_17, %c0_18], %18 {strides = array<i32>} : memref<32x128xf32, #tpu.memory_space<vmem>>, vector<32x128xf32>,
    %c0_19 = arith.constant 0 : index
    %c0_20 = arith.constant 0 : index
    %20 = vector.load %arg6[%c0_19, %c0_20] : memref<128x128xbf16, #tpu.memory_space<vmem>>, vector<128x128xbf16>
    %cst_21 = arith.constant dense<0.000000e+00> : vector<32x128xf32>
    %21 = tpu.matmul %1, %20, %cst_21 {dimension_numbers = #tpu.dot_dimension_numbers<[1], [0], [0], [1], [0, 0, 1, 1], [], []>} : vector<32x128xbf16>, vector<128x128xbf16>, vector<32x128xf32> -> vector<32x128xf32>
    %c0_22 = arith.constant 0 : index
    %c0_23 = arith.constant 0 : index
    %22 = vector.load %arg8[%c0_22, %c0_23] : memref<128x128xbf16, #tpu.memory_space<vmem>>, vector<128x128xbf16>
    %cst_24 = arith.constant dense<0.000000e+00> : vector<32x128xf32>
    %23 = tpu.matmul %10, %22, %cst_24 {dimension_numbers = #tpu.dot_dimension_numbers<[1], [0], [0], [1], [0, 0, 1, 1], [], []>} : vector<32x128xbf16>, vector<128x128xbf16>, vector<32x128xf32> -> vector<32x128xf32>
    %24 = arith.addf %21, %23 : vector<32x128xf32>
    %c0_25 = arith.constant 0 : index
    %c0_26 = arith.constant 0 : index
    %25 = vector.load %arg12[%c0_25, %c0_26] : memref<1x128xf32, #tpu.memory_space<vmem>>, vector<1x128xf32>
    %26 = vector.broadcast %25 : vector<1x128xf32> to vector<32x128xf32>
    %27 = arith.addf %24, %26 : vector<32x128xf32>
    %c0_27 = arith.constant 0 : index
    %c0_28 = arith.constant 0 : index
    %28 = vector.load %arg17[%c0_27, %c0_28] : memref<32x128xf32, #tpu.memory_space<vmem>>, vector<32x128xf32>
    tpu.vector_store %arg17[%c0_27, %c0_28], %27 {strides = array<i32>} : memref<32x128xf32, #tpu.memory_space<vmem>>, vector<32x128xf32>,
    %c0_29 = arith.constant 0 : index
    %c0_30 = arith.constant 0 : index
    %29 = vector.load %arg9[%c0_29, %c0_30] : memref<32x128xbf16, #tpu.memory_space<vmem>>, vector<32x128xbf16>
    %c0_31 = arith.constant 0 : index
    %c0_32 = arith.constant 0 : index
    %30 = vector.load %arg10[%c0_31, %c0_32] : memref<32x128xbf16, #tpu.memory_space<vmem>>, vector<32x128xbf16>
    %cst_33 = arith.constant 0.000000e+00 : f32
    %31 = vector.broadcast %cst_33 : f32 to vector<8x32xf32>
    %cst_34 = arith.constant 0.000000e+00 : f32
    %32 = vector.broadcast %cst_34 : f32 to vector<8x128xf32>
    %c0_35 = arith.constant 0 : index
    %c0_36 = arith.constant 0 : index
    %33 = vector.load %arg16[%c0_35, %c0_36] : memref<32x128xf32, #tpu.memory_space<vmem>>, vector<8x128xf32>
    %c24 = arith.constant 24 : index
    %c0_37 = arith.constant 0 : index
    %34 = vector.load %arg17[%c24, %c0_37] : memref<32x128xf32, #tpu.memory_space<vmem>>, vector<8x128xf32>
    %35 = arith.truncf %31 : vector<8x32xf32> to vector<8x32xbf16>
    %cst_38 = arith.constant dense<0.000000e+00> : vector<8x128xf32>
    %36 = tpu.matmul %35, %29, %cst_38 {dimension_numbers = #tpu.dot_dimension_numbers<[1], [0], [0], [1], [0, 0, 1, 1], [], []>} : vector<8x32xbf16>, vector<32x128xbf16>, vector<8x128xf32> -> vector<8x128xf32>
    %37 = arith.addf %33, %36 : vector<8x128xf32>
    %38 = arith.truncf %31 : vector<8x32xf32> to vector<8x32xbf16>
    %cst_39 = arith.constant dense<0.000000e+00> : vector<8x128xf32>
    %39 = tpu.matmul %38, %30, %cst_39 {dimension_numbers = #tpu.dot_dimension_numbers<[1], [0], [0], [1], [0, 0, 1, 1], [], []>} : vector<8x32xbf16>, vector<32x128xbf16>, vector<8x128xf32> -> vector<8x128xf32>
    %40 = arith.addf %34, %39 : vector<8x128xf32>
    %41 = vector.extract_strided_slice %37 {offsets = [0, 0], sizes = [8, 32], strides = [1, 1]} : vector<8x128xf32> to vector<8x32xf32>
    %42 = arith.negf %41 : vector<8x32xf32>
    %43 = math.exp %42 : vector<8x32xf32>
    %cst_40 = arith.constant 1.000000e+00 : f32
    %44 = vector.broadcast %cst_40 : f32 to vector<8x32xf32>
    %45 = arith.addf %44, %43 : vector<8x32xf32>
    %46 = arith.divf %44, %45 : vector<8x32xf32>
    %47 = vector.extract_strided_slice %37 {offsets = [0, 32], sizes = [8, 32], strides = [1, 1]} : vector<8x128xf32> to vector<8x32xf32>
    %48 = arith.negf %47 : vector<8x32xf32>
    %49 = math.exp %48 : vector<8x32xf32>
    %cst_41 = arith.constant 1.000000e+00 : f32
    %50 = vector.broadcast %cst_41 : f32 to vector<8x32xf32>
    %51 = arith.addf %50, %49 : vector<8x32xf32>
    %52 = arith.divf %50, %51 : vector<8x32xf32>
    %53 = vector.extract_strided_slice %37 {offsets = [0, 64], sizes = [8, 32], strides = [1, 1]} : vector<8x128xf32> to vector<8x32xf32>
    %54 = math.tanh %53 : vector<8x32xf32>
    %55 = vector.extract_strided_slice %37 {offsets = [0, 96], sizes = [8, 32], strides = [1, 1]} : vector<8x128xf32> to vector<8x32xf32>
    %56 = arith.negf %55 : vector<8x32xf32>
    %57 = math.exp %56 : vector<8x32xf32>
    %cst_42 = arith.constant 1.000000e+00 : f32
    %58 = vector.broadcast %cst_42 : f32 to vector<8x32xf32>
    %59 = arith.addf %58, %57 : vector<8x32xf32>
    %60 = arith.divf %58, %59 : vector<8x32xf32>
    %61 = arith.mulf %52, %31 : vector<8x32xf32>
    %62 = arith.mulf %46, %54 : vector<8x32xf32>
    %63 = arith.addf %61, %62 : vector<8x32xf32>
    %64 = math.tanh %63 : vector<8x32xf32>
    %65 = arith.mulf %60, %64 : vector<8x32xf32>
    %66 = vector.extract_strided_slice %40 {offsets = [0, 0], sizes = [8, 32], strides = [1, 1]} : vector<8x128xf32> to vector<8x32xf32>
    %67 = arith.negf %66 : vector<8x32xf32>
    %68 = math.exp %67 : vector<8x32xf32>
    %cst_43 = arith.constant 1.000000e+00 : f32
    %69 = vector.broadcast %cst_43 : f32 to vector<8x32xf32>
    %70 = arith.addf %69, %68 : vector<8x32xf32>
    %71 = arith.divf %69, %70 : vector<8x32xf32>
    %72 = vector.extract_strided_slice %40 {offsets = [0, 32], sizes = [8, 32], strides = [1, 1]} : vector<8x128xf32> to vector<8x32xf32>
    %73 = arith.negf %72 : vector<8x32xf32>
    %74 = math.exp %73 : vector<8x32xf32>
    %cst_44 = arith.constant 1.000000e+00 : f32
    %75 = vector.broadcast %cst_44 : f32 to vector<8x32xf32>
    %76 = arith.addf %75, %74 : vector<8x32xf32>
    %77 = arith.divf %75, %76 : vector<8x32xf32>
    %78 = vector.extract_strided_slice %40 {offsets = [0, 64], sizes = [8, 32], strides = [1, 1]} : vector<8x128xf32> to vector<8x32xf32>
    %79 = math.tanh %78 : vector<8x32xf32>
    %80 = vector.extract_strided_slice %40 {offsets = [0, 96], sizes = [8, 32], strides = [1, 1]} : vector<8x128xf32> to vector<8x32xf32>
    %81 = arith.negf %80 : vector<8x32xf32>
    %82 = math.exp %81 : vector<8x32xf32>
    %cst_45 = arith.constant 1.000000e+00 : f32
    %83 = vector.broadcast %cst_45 : f32 to vector<8x32xf32>
    %84 = arith.addf %83, %82 : vector<8x32xf32>
    %85 = arith.divf %83, %84 : vector<8x32xf32>
    %86 = arith.mulf %77, %31 : vector<8x32xf32>
    %87 = arith.mulf %71, %79 : vector<8x32xf32>
    %88 = arith.addf %86, %87 : vector<8x32xf32>
    %89 = math.tanh %88 : vector<8x32xf32>
    %90 = arith.mulf %85, %89 : vector<8x32xf32>
    %91 = tpu.concatenate %65, %90 in 1 : vector<8x32xf32>, vector<8x32xf32> -> vector<8x64xf32>
    %92 = arith.truncf %91 : vector<8x64xf32> to vector<8x64xbf16>
    %c0_46 = arith.constant 0 : index
    %c0_47 = arith.constant 0 : index
    %c0_48 = arith.constant 0 : index
    %93 = vector.load %arg13[%c0_46, %c0_47, %c0_48] : memref<4x64x128xbf16, #tpu.memory_space<vmem>>, vector<1x64x128xbf16>
    %94 = vector.shape_cast %93 : vector<1x64x128xbf16> to vector<64x128xbf16>
    %cst_49 = arith.constant dense<0.000000e+00> : vector<8x128xf32>
    %95 = tpu.matmul %92, %94, %cst_49 {dimension_numbers = #tpu.dot_dimension_numbers<[1], [0], [0], [1], [0, 0, 1, 1], [], []>} : vector<8x64xbf16>, vector<64x128xbf16>, vector<8x128xf32> -> vector<8x128xf32>
    %96 = arith.addf %32, %95 : vector<8x128xf32>
    %c8 = arith.constant 8 : index
    %c0_50 = arith.constant 0 : index
    %97 = vector.load %arg16[%c8, %c0_50] : memref<32x128xf32, #tpu.memory_space<vmem>>, vector<8x128xf32>
    %c16 = arith.constant 16 : index
    %c0_51 = arith.constant 0 : index
    %98 = vector.load %arg17[%c16, %c0_51] : memref<32x128xf32, #tpu.memory_space<vmem>>, vector<8x128xf32>
    %99 = arith.truncf %65 : vector<8x32xf32> to vector<8x32xbf16>
    %cst_52 = arith.constant dense<0.000000e+00> : vector<8x128xf32>
    %100 = tpu.matmul %99, %29, %cst_52 {dimension_numbers = #tpu.dot_dimension_numbers<[1], [0], [0], [1], [0, 0, 1, 1], [], []>} : vector<8x32xbf16>, vector<32x128xbf16>, vector<8x128xf32> -> vector<8x128xf32>
    %101 = arith.addf %97, %100 : vector<8x128xf32>
    %102 = arith.truncf %90 : vector<8x32xf32> to vector<8x32xbf16>
    %cst_53 = arith.constant dense<0.000000e+00> : vector<8x128xf32>
    %103 = tpu.matmul %102, %30, %cst_53 {dimension_numbers = #tpu.dot_dimension_numbers<[1], [0], [0], [1], [0, 0, 1, 1], [], []>} : vector<8x32xbf16>, vector<32x128xbf16>, vector<8x128xf32> -> vector<8x128xf32>
    %104 = arith.addf %98, %103 : vector<8x128xf32>
    %105 = vector.extract_strided_slice %101 {offsets = [0, 0], sizes = [8, 32], strides = [1, 1]} : vector<8x128xf32> to vector<8x32xf32>
    %106 = arith.negf %105 : vector<8x32xf32>
    %107 = math.exp %106 : vector<8x32xf32>
    %cst_54 = arith.constant 1.000000e+00 : f32
    %108 = vector.broadcast %cst_54 : f32 to vector<8x32xf32>
    %109 = arith.addf %108, %107 : vector<8x32xf32>
    %110 = arith.divf %108, %109 : vector<8x32xf32>
    %111 = vector.extract_strided_slice %101 {offsets = [0, 32], sizes = [8, 32], strides = [1, 1]} : vector<8x128xf32> to vector<8x32xf32>
    %112 = arith.negf %111 : vector<8x32xf32>
    %113 = math.exp %112 : vector<8x32xf32>
    %cst_55 = arith.constant 1.000000e+00 : f32
    %114 = vector.broadcast %cst_55 : f32 to vector<8x32xf32>
    %115 = arith.addf %114, %113 : vector<8x32xf32>
    %116 = arith.divf %114, %115 : vector<8x32xf32>
    %117 = vector.extract_strided_slice %101 {offsets = [0, 64], sizes = [8, 32], strides = [1, 1]} : vector<8x128xf32> to vector<8x32xf32>
    %118 = math.tanh %117 : vector<8x32xf32>
    %119 = vector.extract_strided_slice %101 {offsets = [0, 96], sizes = [8, 32], strides = [1, 1]} : vector<8x128xf32> to vector<8x32xf32>
    %120 = arith.negf %119 : vector<8x32xf32>
    %121 = math.exp %120 : vector<8x32xf32>
    %cst_56 = arith.constant 1.000000e+00 : f32
    %122 = vector.broadcast %cst_56 : f32 to vector<8x32xf32>
    %123 = arith.addf %122, %121 : vector<8x32xf32>
    %124 = arith.divf %122, %123 : vector<8x32xf32>
    %125 = arith.mulf %116, %63 : vector<8x32xf32>
    %126 = arith.mulf %110, %118 : vector<8x32xf32>
    %127 = arith.addf %125, %126 : vector<8x32xf32>
    %128 = math.tanh %127 : vector<8x32xf32>
    %129 = arith.mulf %124, %128 : vector<8x32xf32>
    %130 = vector.extract_strided_slice %104 {offsets = [0, 0], sizes = [8, 32], strides = [1, 1]} : vector<8x128xf32> to vector<8x32xf32>
    %131 = arith.negf %130 : vector<8x32xf32>
    %132 = math.exp %131 : vector<8x32xf32>
    %cst_57 = arith.constant 1.000000e+00 : f32
    %133 = vector.broadcast %cst_57 : f32 to vector<8x32xf32>
    %134 = arith.addf %133, %132 : vector<8x32xf32>
    %135 = arith.divf %133, %134 : vector<8x32xf32>
    %136 = vector.extract_strided_slice %104 {offsets = [0, 32], sizes = [8, 32], strides = [1, 1]} : vector<8x128xf32> to vector<8x32xf32>
    %137 = arith.negf %136 : vector<8x32xf32>
    %138 = math.exp %137 : vector<8x32xf32>
    %cst_58 = arith.constant 1.000000e+00 : f32
    %139 = vector.broadcast %cst_58 : f32 to vector<8x32xf32>
    %140 = arith.addf %139, %138 : vector<8x32xf32>
    %141 = arith.divf %139, %140 : vector<8x32xf32>
    %142 = vector.extract_strided_slice %104 {offsets = [0, 64], sizes = [8, 32], strides = [1, 1]} : vector<8x128xf32> to vector<8x32xf32>
    %143 = math.tanh %142 : vector<8x32xf32>
    %144 = vector.extract_strided_slice %104 {offsets = [0, 96], sizes = [8, 32], strides = [1, 1]} : vector<8x128xf32> to vector<8x32xf32>
    %145 = arith.negf %144 : vector<8x32xf32>
    %146 = math.exp %145 : vector<8x32xf32>
    %cst_59 = arith.constant 1.000000e+00 : f32
    %147 = vector.broadcast %cst_59 : f32 to vector<8x32xf32>
    %148 = arith.addf %147, %146 : vector<8x32xf32>
    %149 = arith.divf %147, %148 : vector<8x32xf32>
    %150 = arith.mulf %141, %88 : vector<8x32xf32>
    %151 = arith.mulf %135, %143 : vector<8x32xf32>
    %152 = arith.addf %150, %151 : vector<8x32xf32>
    %153 = math.tanh %152 : vector<8x32xf32>
    %154 = arith.mulf %149, %153 : vector<8x32xf32>
    %155 = tpu.concatenate %129, %154 in 1 : vector<8x32xf32>, vector<8x32xf32> -> vector<8x64xf32>
    %156 = arith.truncf %155 : vector<8x64xf32> to vector<8x64xbf16>
    %c1 = arith.constant 1 : index
    %c0_60 = arith.constant 0 : index
    %c0_61 = arith.constant 0 : index
    %157 = vector.load %arg13[%c1, %c0_60, %c0_61] : memref<4x64x128xbf16, #tpu.memory_space<vmem>>, vector<1x64x128xbf16>
    %158 = vector.shape_cast %157 : vector<1x64x128xbf16> to vector<64x128xbf16>
    %cst_62 = arith.constant dense<0.000000e+00> : vector<8x128xf32>
    %159 = tpu.matmul %156, %158, %cst_62 {dimension_numbers = #tpu.dot_dimension_numbers<[1], [0], [0], [1], [0, 0, 1, 1], [], []>} : vector<8x64xbf16>, vector<64x128xbf16>, vector<8x128xf32> -> vector<8x128xf32>
    %160 = arith.addf %96, %159 : vector<8x128xf32>
    %c16_63 = arith.constant 16 : index
    %c0_64 = arith.constant 0 : index
    %161 = vector.load %arg16[%c16_63, %c0_64] : memref<32x128xf32, #tpu.memory_space<vmem>>, vector<8x128xf32>
    %c8_65 = arith.constant 8 : index
    %c0_66 = arith.constant 0 : index
    %162 = vector.load %arg17[%c8_65, %c0_66] : memref<32x128xf32, #tpu.memory_space<vmem>>, vector<8x128xf32>
    %163 = arith.truncf %129 : vector<8x32xf32> to vector<8x32xbf16>
    %cst_67 = arith.constant dense<0.000000e+00> : vector<8x128xf32>
    %164 = tpu.matmul %163, %29, %cst_67 {dimension_numbers = #tpu.dot_dimension_numbers<[1], [0], [0], [1], [0, 0, 1, 1], [], []>} : vector<8x32xbf16>, vector<32x128xbf16>, vector<8x128xf32> -> vector<8x128xf32>
    %165 = arith.addf %161, %164 : vector<8x128xf32>
    %166 = arith.truncf %154 : vector<8x32xf32> to vector<8x32xbf16>
    %cst_68 = arith.constant dense<0.000000e+00> : vector<8x128xf32>
    %167 = tpu.matmul %166, %30, %cst_68 {dimension_numbers = #tpu.dot_dimension_numbers<[1], [0], [0], [1], [0, 0, 1, 1], [], []>} : vector<8x32xbf16>, vector<32x128xbf16>, vector<8x128xf32> -> vector<8x128xf32>
    %168 = arith.addf %162, %167 : vector<8x128xf32>
    %169 = vector.extract_strided_slice %165 {offsets = [0, 0], sizes = [8, 32], strides = [1, 1]} : vector<8x128xf32> to vector<8x32xf32>
    %170 = arith.negf %169 : vector<8x32xf32>
    %171 = math.exp %170 : vector<8x32xf32>
    %cst_69 = arith.constant 1.000000e+00 : f32
    %172 = vector.broadcast %cst_69 : f32 to vector<8x32xf32>
    %173 = arith.addf %172, %171 : vector<8x32xf32>
    %174 = arith.divf %172, %173 : vector<8x32xf32>
    %175 = vector.extract_strided_slice %165 {offsets = [0, 32], sizes = [8, 32], strides = [1, 1]} : vector<8x128xf32> to vector<8x32xf32>
    %176 = arith.negf %175 : vector<8x32xf32>
    %177 = math.exp %176 : vector<8x32xf32>
    %cst_70 = arith.constant 1.000000e+00 : f32
    %178 = vector.broadcast %cst_70 : f32 to vector<8x32xf32>
    %179 = arith.addf %178, %177 : vector<8x32xf32>
    %180 = arith.divf %178, %179 : vector<8x32xf32>
    %181 = vector.extract_strided_slice %165 {offsets = [0, 64], sizes = [8, 32], strides = [1, 1]} : vector<8x128xf32> to vector<8x32xf32>
    %182 = math.tanh %181 : vector<8x32xf32>
    %183 = vector.extract_strided_slice %165 {offsets = [0, 96], sizes = [8, 32], strides = [1, 1]} : vector<8x128xf32> to vector<8x32xf32>
    %184 = arith.negf %183 : vector<8x32xf32>
    %185 = math.exp %184 : vector<8x32xf32>
    %cst_71 = arith.constant 1.000000e+00 : f32
    %186 = vector.broadcast %cst_71 : f32 to vector<8x32xf32>
    %187 = arith.addf %186, %185 : vector<8x32xf32>
    %188 = arith.divf %186, %187 : vector<8x32xf32>
    %189 = arith.mulf %180, %127 : vector<8x32xf32>
    %190 = arith.mulf %174, %182 : vector<8x32xf32>
    %191 = arith.addf %189, %190 : vector<8x32xf32>
    %192 = math.tanh %191 : vector<8x32xf32>
    %193 = arith.mulf %188, %192 : vector<8x32xf32>
    %194 = vector.extract_strided_slice %168 {offsets = [0, 0], sizes = [8, 32], strides = [1, 1]} : vector<8x128xf32> to vector<8x32xf32>
    %195 = arith.negf %194 : vector<8x32xf32>
    %196 = math.exp %195 : vector<8x32xf32>
    %cst_72 = arith.constant 1.000000e+00 : f32
    %197 = vector.broadcast %cst_72 : f32 to vector<8x32xf32>
    %198 = arith.addf %197, %196 : vector<8x32xf32>
    %199 = arith.divf %197, %198 : vector<8x32xf32>
    %200 = vector.extract_strided_slice %168 {offsets = [0, 32], sizes = [8, 32], strides = [1, 1]} : vector<8x128xf32> to vector<8x32xf32>
    %201 = arith.negf %200 : vector<8x32xf32>
    %202 = math.exp %201 : vector<8x32xf32>
    %cst_73 = arith.constant 1.000000e+00 : f32
    %203 = vector.broadcast %cst_73 : f32 to vector<8x32xf32>
    %204 = arith.addf %203, %202 : vector<8x32xf32>
    %205 = arith.divf %203, %204 : vector<8x32xf32>
    %206 = vector.extract_strided_slice %168 {offsets = [0, 64], sizes = [8, 32], strides = [1, 1]} : vector<8x128xf32> to vector<8x32xf32>
    %207 = math.tanh %206 : vector<8x32xf32>
    %208 = vector.extract_strided_slice %168 {offsets = [0, 96], sizes = [8, 32], strides = [1, 1]} : vector<8x128xf32> to vector<8x32xf32>
    %209 = arith.negf %208 : vector<8x32xf32>
    %210 = math.exp %209 : vector<8x32xf32>
    %cst_74 = arith.constant 1.000000e+00 : f32
    %211 = vector.broadcast %cst_74 : f32 to vector<8x32xf32>
    %212 = arith.addf %211, %210 : vector<8x32xf32>
    %213 = arith.divf %211, %212 : vector<8x32xf32>
    %214 = arith.mulf %205, %152 : vector<8x32xf32>
    %215 = arith.mulf %199, %207 : vector<8x32xf32>
    %216 = arith.addf %214, %215 : vector<8x32xf32>
    %217 = math.tanh %216 : vector<8x32xf32>
    %218 = arith.mulf %213, %217 : vector<8x32xf32>
    %219 = tpu.concatenate %193, %218 in 1 : vector<8x32xf32>, vector<8x32xf32> -> vector<8x64xf32>
    %220 = arith.truncf %219 : vector<8x64xf32> to vector<8x64xbf16>
    %c2 = arith.constant 2 : index
    %c0_75 = arith.constant 0 : index
    %c0_76 = arith.constant 0 : index
    %221 = vector.load %arg13[%c2, %c0_75, %c0_76] : memref<4x64x128xbf16, #tpu.memory_space<vmem>>, vector<1x64x128xbf16>
    %222 = vector.shape_cast %221 : vector<1x64x128xbf16> to vector<64x128xbf16>
    %cst_77 = arith.constant dense<0.000000e+00> : vector<8x128xf32>
    %223 = tpu.matmul %220, %222, %cst_77 {dimension_numbers = #tpu.dot_dimension_numbers<[1], [0], [0], [1], [0, 0, 1, 1], [], []>} : vector<8x64xbf16>, vector<64x128xbf16>, vector<8x128xf32> -> vector<8x128xf32>
    %224 = arith.addf %160, %223 : vector<8x128xf32>
    %c24_78 = arith.constant 24 : index
    %c0_79 = arith.constant 0 : index
    %225 = vector.load %arg16[%c24_78, %c0_79] : memref<32x128xf32, #tpu.memory_space<vmem>>, vector<8x128xf32>
    %c0_80 = arith.constant 0 : index
    %c0_81 = arith.constant 0 : index
    %226 = vector.load %arg17[%c0_80, %c0_81] : memref<32x128xf32, #tpu.memory_space<vmem>>, vector<8x128xf32>
    %227 = arith.truncf %193 : vector<8x32xf32> to vector<8x32xbf16>
    %cst_82 = arith.constant dense<0.000000e+00> : vector<8x128xf32>
    %228 = tpu.matmul %227, %29, %cst_82 {dimension_numbers = #tpu.dot_dimension_numbers<[1], [0], [0], [1], [0, 0, 1, 1], [], []>} : vector<8x32xbf16>, vector<32x128xbf16>, vector<8x128xf32> -> vector<8x128xf32>
    %229 = arith.addf %225, %228 : vector<8x128xf32>
    %230 = arith.truncf %218 : vector<8x32xf32> to vector<8x32xbf16>
    %cst_83 = arith.constant dense<0.000000e+00> : vector<8x128xf32>
    %231 = tpu.matmul %230, %30, %cst_83 {dimension_numbers = #tpu.dot_dimension_numbers<[1], [0], [0], [1], [0, 0, 1, 1], [], []>} : vector<8x32xbf16>, vector<32x128xbf16>, vector<8x128xf32> -> vector<8x128xf32>
    %232 = arith.addf %226, %231 : vector<8x128xf32>
    %233 = vector.extract_strided_slice %229 {offsets = [0, 0], sizes = [8, 32], strides = [1, 1]} : vector<8x128xf32> to vector<8x32xf32>
    %234 = arith.negf %233 : vector<8x32xf32>
    %235 = math.exp %234 : vector<8x32xf32>
    %cst_84 = arith.constant 1.000000e+00 : f32
    %236 = vector.broadcast %cst_84 : f32 to vector<8x32xf32>
    %237 = arith.addf %236, %235 : vector<8x32xf32>
    %238 = arith.divf %236, %237 : vector<8x32xf32>
    %239 = vector.extract_strided_slice %229 {offsets = [0, 32], sizes = [8, 32], strides = [1, 1]} : vector<8x128xf32> to vector<8x32xf32>
    %240 = arith.negf %239 : vector<8x32xf32>
    %241 = math.exp %240 : vector<8x32xf32>
    %cst_85 = arith.constant 1.000000e+00 : f32
    %242 = vector.broadcast %cst_85 : f32 to vector<8x32xf32>
    %243 = arith.addf %242, %241 : vector<8x32xf32>
    %244 = arith.divf %242, %243 : vector<8x32xf32>
    %245 = vector.extract_strided_slice %229 {offsets = [0, 64], sizes = [8, 32], strides = [1, 1]} : vector<8x128xf32> to vector<8x32xf32>
    %246 = math.tanh %245 : vector<8x32xf32>
    %247 = vector.extract_strided_slice %229 {offsets = [0, 96], sizes = [8, 32], strides = [1, 1]} : vector<8x128xf32> to vector<8x32xf32>
    %248 = arith.negf %247 : vector<8x32xf32>
    %249 = math.exp %248 : vector<8x32xf32>
    %cst_86 = arith.constant 1.000000e+00 : f32
    %250 = vector.broadcast %cst_86 : f32 to vector<8x32xf32>
    %251 = arith.addf %250, %249 : vector<8x32xf32>
    %252 = arith.divf %250, %251 : vector<8x32xf32>
    %253 = arith.mulf %244, %191 : vector<8x32xf32>
    %254 = arith.mulf %238, %246 : vector<8x32xf32>
    %255 = arith.addf %253, %254 : vector<8x32xf32>
    %256 = math.tanh %255 : vector<8x32xf32>
    %257 = arith.mulf %252, %256 : vector<8x32xf32>
    %258 = vector.extract_strided_slice %232 {offsets = [0, 0], sizes = [8, 32], strides = [1, 1]} : vector<8x128xf32> to vector<8x32xf32>
    %259 = arith.negf %258 : vector<8x32xf32>
    %260 = math.exp %259 : vector<8x32xf32>
    %cst_87 = arith.constant 1.000000e+00 : f32
    %261 = vector.broadcast %cst_87 : f32 to vector<8x32xf32>
    %262 = arith.addf %261, %260 : vector<8x32xf32>
    %263 = arith.divf %261, %262 : vector<8x32xf32>
    %264 = vector.extract_strided_slice %232 {offsets = [0, 32], sizes = [8, 32], strides = [1, 1]} : vector<8x128xf32> to vector<8x32xf32>
    %265 = arith.negf %264 : vector<8x32xf32>
    %266 = math.exp %265 : vector<8x32xf32>
    %cst_88 = arith.constant 1.000000e+00 : f32
    %267 = vector.broadcast %cst_88 : f32 to vector<8x32xf32>
    %268 = arith.addf %267, %266 : vector<8x32xf32>
    %269 = arith.divf %267, %268 : vector<8x32xf32>
    %270 = vector.extract_strided_slice %232 {offsets = [0, 64], sizes = [8, 32], strides = [1, 1]} : vector<8x128xf32> to vector<8x32xf32>
    %271 = math.tanh %270 : vector<8x32xf32>
    %272 = vector.extract_strided_slice %232 {offsets = [0, 96], sizes = [8, 32], strides = [1, 1]} : vector<8x128xf32> to vector<8x32xf32>
    %273 = arith.negf %272 : vector<8x32xf32>
    %274 = math.exp %273 : vector<8x32xf32>
    %cst_89 = arith.constant 1.000000e+00 : f32
    %275 = vector.broadcast %cst_89 : f32 to vector<8x32xf32>
    %276 = arith.addf %275, %274 : vector<8x32xf32>
    %277 = arith.divf %275, %276 : vector<8x32xf32>
    %278 = arith.mulf %269, %216 : vector<8x32xf32>
    %279 = arith.mulf %263, %271 : vector<8x32xf32>
    %280 = arith.addf %278, %279 : vector<8x32xf32>
    %281 = math.tanh %280 : vector<8x32xf32>
    %282 = arith.mulf %277, %281 : vector<8x32xf32>
    %283 = tpu.concatenate %257, %282 in 1 : vector<8x32xf32>, vector<8x32xf32> -> vector<8x64xf32>
    %284 = arith.truncf %283 : vector<8x64xf32> to vector<8x64xbf16>
    %c3 = arith.constant 3 : index
    %c0_90 = arith.constant 0 : index
    %c0_91 = arith.constant 0 : index
    %285 = vector.load %arg13[%c3, %c0_90, %c0_91] : memref<4x64x128xbf16, #tpu.memory_space<vmem>>, vector<1x64x128xbf16>
    %286 = vector.shape_cast %285 : vector<1x64x128xbf16> to vector<64x128xbf16>
    %cst_92 = arith.constant dense<0.000000e+00> : vector<8x128xf32>
    %287 = tpu.matmul %284, %286, %cst_92 {dimension_numbers = #tpu.dot_dimension_numbers<[1], [0], [0], [1], [0, 0, 1, 1], [], []>} : vector<8x64xbf16>, vector<64x128xbf16>, vector<8x128xf32> -> vector<8x128xf32>
    %288 = arith.addf %224, %287 : vector<8x128xf32>
    %c0_93 = arith.constant 0 : index
    %c0_94 = arith.constant 0 : index
    %289 = vector.load %arg14[%c0_93, %c0_94] : memref<1x128xf32, #tpu.memory_space<vmem>>, vector<1x128xf32>
    %290 = vector.broadcast %289 : vector<1x128xf32> to vector<8x128xf32>
    %291 = arith.addf %288, %290 : vector<8x128xf32>
    %c0_95 = arith.constant 0 : index
    %c0_96 = arith.constant 0 : index
    %292 = vector.load %arg15[%c0_95, %c0_96] : memref<8x128xf32, #tpu.memory_space<vmem>>, vector<8x128xf32>
    tpu.vector_store %arg15[%c0_95, %c0_96], %291 {strides = array<i32>} : memref<8x128xf32, #tpu.memory_space<vmem>>, vector<8x128xf32>,
    return
  }
  func.func @transform_0(%arg0: i32) -> (i32, i32, i32) {
    %c0_i32 = arith.constant 0 : i32
    %c0_i32_0 = arith.constant 0 : i32
    %c0_i32_1 = arith.constant 0 : i32
    return %c0_i32, %arg0, %c0_i32_0 : i32, i32, i32
  }
  func.func @transform_1(%arg0: i32) -> (i32, i32, i32) {
    %c0_i32 = arith.constant 0 : i32
    %c0_i32_0 = arith.constant 0 : i32
    %c0_i32_1 = arith.constant 0 : i32
    return %c0_i32, %arg0, %c0_i32_0 : i32, i32, i32
  }
  func.func @transform_2(%arg0: i32) -> (i32, i32) {
    %c0_i32 = arith.constant 0 : i32
    %c0_i32_0 = arith.constant 0 : i32
    %c0_i32_1 = arith.constant 0 : i32
    return %c0_i32, %c0_i32_0 : i32, i32
  }
  func.func @transform_3(%arg0: i32) -> (i32, i32) {
    %c0_i32 = arith.constant 0 : i32
    %c0_i32_0 = arith.constant 0 : i32
    %c0_i32_1 = arith.constant 0 : i32
    return %c0_i32, %c0_i32_0 : i32, i32
  }
  func.func @transform_4(%arg0: i32) -> (i32, i32) {
    %c0_i32 = arith.constant 0 : i32
    %c0_i32_0 = arith.constant 0 : i32
    %c0_i32_1 = arith.constant 0 : i32
    return %c0_i32, %c0_i32_0 : i32, i32
  }
  func.func @transform_5(%arg0: i32) -> (i32, i32) {
    %c0_i32 = arith.constant 0 : i32
    %c0_i32_0 = arith.constant 0 : i32
    %c0_i32_1 = arith.constant 0 : i32
    return %c0_i32, %c0_i32_0 : i32, i32
  }
  func.func @transform_6(%arg0: i32) -> (i32, i32) {
    %c0_i32 = arith.constant 0 : i32
    %c0_i32_0 = arith.constant 0 : i32
    %c0_i32_1 = arith.constant 0 : i32
    return %c0_i32, %c0_i32_0 : i32, i32
  }
  func.func @transform_7(%arg0: i32) -> (i32, i32) {
    %c0_i32 = arith.constant 0 : i32
    %c0_i32_0 = arith.constant 0 : i32
    %c0_i32_1 = arith.constant 0 : i32
    return %c0_i32, %c0_i32_0 : i32, i32
  }
  func.func @transform_8(%arg0: i32) -> (i32, i32) {
    %c0_i32 = arith.constant 0 : i32
    %c0_i32_0 = arith.constant 0 : i32
    %c0_i32_1 = arith.constant 0 : i32
    return %c0_i32, %c0_i32_0 : i32, i32
  }
  func.func @transform_9(%arg0: i32) -> (i32, i32) {
    %c0_i32 = arith.constant 0 : i32
    %c0_i32_0 = arith.constant 0 : i32
    %c0_i32_1 = arith.constant 0 : i32
    return %c0_i32, %c0_i32_0 : i32, i32
  }
  func.func @transform_10(%arg0: i32) -> (i32, i32) {
    %c0_i32 = arith.constant 0 : i32
    %c0_i32_0 = arith.constant 0 : i32
    %c0_i32_1 = arith.constant 0 : i32
    return %c0_i32, %c0_i32_0 : i32, i32
  }
  func.func @transform_11(%arg0: i32) -> (i32, i32) {
    %c0_i32 = arith.constant 0 : i32
    %c0_i32_0 = arith.constant 0 : i32
    %c0_i32_1 = arith.constant 0 : i32
    return %c0_i32, %c0_i32_0 : i32, i32
  }
  func.func @transform_12(%arg0: i32) -> (i32, i32, i32) {
    %c0_i32 = arith.constant 0 : i32
    %c0_i32_0 = arith.constant 0 : i32
    %c0_i32_1 = arith.constant 0 : i32
    %c0_i32_2 = arith.constant 0 : i32
    return %c0_i32, %c0_i32_0, %c0_i32_1 : i32, i32, i32
  }
  func.func @transform_13(%arg0: i32) -> (i32, i32) {
    %c0_i32 = arith.constant 0 : i32
    %c0_i32_0 = arith.constant 0 : i32
    %c0_i32_1 = arith.constant 0 : i32
    return %c0_i32, %c0_i32_0 : i32, i32
  }
  func.func @transform_14(%arg0: i32) -> (i32, i32) {
    %c0_i32 = arith.constant 0 : i32
    %c0_i32_0 = arith.constant 0 : i32
    return %arg0, %c0_i32 : i32, i32
  }
}

</mosaic_0001>

<llo_original>
// kernel: crosscode2vec_lack_atten.3
$region0: #{crosscode2vec_lack_atten.3}
  #allocation0 [shape = 'u32[]', space=smem, size = 0x4, offset = 0x4, fixed_abs, tag = 'smem constant byte address 0x4 - core index']
  #allocation1 [shape = 'u32[144,128]{1,0:T(1,128)}', space=vmem, size = 0x12000, scoped, tag = 'internal scratch']
  #allocation2 [shape = 'f32[32,128]{1,0:T(8,128)}', space=vmem, size = 0x4000, scoped, tag = 'scratch operand']
  #allocation3 [shape = 'f32[32,128]{1,0:T(8,128)}', space=vmem, size = 0x4000, scoped, tag = 'scratch operand']
  %s0 = inlined_call_operand.vmem [shape: bf16[4,8,128], index: 0, kind: input, shape index: {}]
  %s1 = inlined_call_operand.vmem [shape: bf16[4,8,128], index: 1, kind: input, shape index: {}]
  %s2 = inlined_call_operand.vmem [shape: bf16[128,128], index: 2, kind: input, shape index: {}]
  %s3 = inlined_call_operand.vmem [shape: f32[1,128], index: 3, kind: input, shape index: {}]
  %s4 = inlined_call_operand.vmem [shape: bf16[128,128], index: 4, kind: input, shape index: {}]
  %s5 = inlined_call_operand.vmem [shape: bf16[128,128], index: 5, kind: input, shape index: {}]
  %s6 = inlined_call_operand.vmem [shape: bf16[128,128], index: 6, kind: input, shape index: {}]
  %s7 = inlined_call_operand.vmem [shape: bf16[128,128], index: 7, kind: input, shape index: {}]
  %s8 = inlined_call_operand.vmem [shape: bf16[32,128], index: 8, kind: input, shape index: {}]
  %s9 = inlined_call_operand.vmem [shape: bf16[32,128], index: 9, kind: input, shape index: {}]
  %s10 = inlined_call_operand.vmem [shape: f32[1,128], index: 10, kind: input, shape index: {}]
  %s11 = inlined_call_operand.vmem [shape: f32[1,128], index: 11, kind: input, shape index: {}]
  %s12 = inlined_call_operand.vmem [shape: bf16[4,64,128], index: 12, kind: input, shape index: {}]
  %s13 = inlined_call_operand.vmem [shape: f32[1,128], index: 13, kind: input, shape index: {}]
  %s14 = inlined_call_operand.vmem [shape: f32[8,128], index: 14, kind: output, shape index: {}]
  %s15 = sld [smem:[#allocation0]]
  $region66: #{crosscode2vec_lack_atten.3} parent=0
    _
  %s17 = ssub.s32 1, %s15
  %s18 = scalar_select 0, %s17, %s15
  // Predicated region
  $region2: #{crosscode2vec_lack_atten.3} parent=0 // pred_check
    _
  $region3: #{crosscode2vec_lack_atten.3} parent=0 // pred_check_branch
    %20 = sbr.rel (0) target = $region5
  $region4: #{crosscode2vec_lack_atten.3} parent=0 // pred_region
    _
  $region5: #{crosscode2vec_lack_atten.3} parent=0 // pred_fallthru
    _
  // Predicated region
  $region6: #{crosscode2vec_lack_atten.3} parent=0 // pred_check
    _
  $region7: #{crosscode2vec_lack_atten.3} parent=0 // pred_check_branch
    %22 = sbr.rel (0) target = $region9
  $region8: #{crosscode2vec_lack_atten.3} parent=0 // pred_region
    _
  $region9: #{crosscode2vec_lack_atten.3} parent=0 // pred_fallthru
    _
  // Predicated region
  $region10: #{crosscode2vec_lack_atten.3} parent=0 // pred_check
    _
  $region11: #{crosscode2vec_lack_atten.3} parent=0 // pred_check_branch
    %24 = sbr.rel (0) target = $region13
  $region12: #{crosscode2vec_lack_atten.3} parent=0 // pred_region
    _
  $region13: #{crosscode2vec_lack_atten.3} parent=0 // pred_fallthru
    _
  // Predicated region
  $region14: #{crosscode2vec_lack_atten.3} parent=0 // pred_check
    _
  $region15: #{crosscode2vec_lack_atten.3} parent=0 // pred_check_branch
    %26 = sbr.rel (0) target = $region17
  $region16: #{crosscode2vec_lack_atten.3} parent=0 // pred_region
    _
  $region17: #{crosscode2vec_lack_atten.3} parent=0 // pred_fallthru
    _
  // Predicated region
  $region18: #{crosscode2vec_lack_atten.3} parent=0 // pred_check
    _
  $region19: #{crosscode2vec_lack_atten.3} parent=0 // pred_check_branch
    %28 = sbr.rel (0) target = $region21
  $region20: #{crosscode2vec_lack_atten.3} parent=0 // pred_region
    _
  $region21: #{crosscode2vec_lack_atten.3} parent=0 // pred_fallthru
    _
  // Predicated region
  $region22: #{crosscode2vec_lack_atten.3} parent=0 // pred_check
    _
  $region23: #{crosscode2vec_lack_atten.3} parent=0 // pred_check_branch
    %30 = sbr.rel (0) target = $region25
  $region24: #{crosscode2vec_lack_atten.3} parent=0 // pred_region
    _
  $region25: #{crosscode2vec_lack_atten.3} parent=0 // pred_fallthru
    _
  // Predicated region
  $region26: #{crosscode2vec_lack_atten.3} parent=0 // pred_check
    _
  $region27: #{crosscode2vec_lack_atten.3} parent=0 // pred_check_branch
    %32 = sbr.rel (0) target = $region29
  $region28: #{crosscode2vec_lack_atten.3} parent=0 // pred_region
    _
  $region29: #{crosscode2vec_lack_atten.3} parent=0 // pred_fallthru
    _
  // Predicated region
  $region30: #{crosscode2vec_lack_atten.3} parent=0 // pred_check
    _
  $region31: #{crosscode2vec_lack_atten.3} parent=0 // pred_check_branch
    %34 = sbr.rel (0) target = $region33
  $region32: #{crosscode2vec_lack_atten.3} parent=0 // pred_region
    _
  $region33: #{crosscode2vec_lack_atten.3} parent=0 // pred_fallthru
    _
  // Predicated region
  $region34: #{crosscode2vec_lack_atten.3} parent=0 // pred_check
    _
  $region35: #{crosscode2vec_lack_atten.3} parent=0 // pred_check_branch
    %36 = sbr.rel (0) target = $region37
  $region36: #{crosscode2vec_lack_atten.3} parent=0 // pred_region
    _
  $region37: #{crosscode2vec_lack_atten.3} parent=0 // pred_fallthru
    _
  // Predicated region
  $region38: #{crosscode2vec_lack_atten.3} parent=0 // pred_check
    _
  $region39: #{crosscode2vec_lack_atten.3} parent=0 // pred_check_branch
    %38 = sbr.rel (0) target = $region41
  $region40: #{crosscode2vec_lack_atten.3} parent=0 // pred_region
    _
  $region41: #{crosscode2vec_lack_atten.3} parent=0 // pred_fallthru
    _
  // Predicated region
  $region42: #{crosscode2vec_lack_atten.3} parent=0 // pred_check
    _
  $region43: #{crosscode2vec_lack_atten.3} parent=0 // pred_check_branch
    %40 = sbr.rel (0) target = $region45
  $region44: #{crosscode2vec_lack_atten.3} parent=0 // pred_region
    _
  $region45: #{crosscode2vec_lack_atten.3} parent=0 // pred_fallthru
    _
  // Predicated region
  $region46: #{crosscode2vec_lack_atten.3} parent=0 // pred_check
    _
  $region47: #{crosscode2vec_lack_atten.3} parent=0 // pred_check_branch
    %42 = sbr.rel (0) target = $region49
  $region48: #{crosscode2vec_lack_atten.3} parent=0 // pred_region
    _
  $region49: #{crosscode2vec_lack_atten.3} parent=0 // pred_fallthru
    _
  // Predicated region
  $region50: #{crosscode2vec_lack_atten.3} parent=0 // pred_check
    _
  $region51: #{crosscode2vec_lack_atten.3} parent=0 // pred_check_branch
    %44 = sbr.rel (0) target = $region53
  $region52: #{crosscode2vec_lack_atten.3} parent=0 // pred_region
    _
  $region53: #{crosscode2vec_lack_atten.3} parent=0 // pred_fallthru
    _
  // Predicated region
  $region54: #{crosscode2vec_lack_atten.3} parent=0 // pred_check
    _
  $region55: #{crosscode2vec_lack_atten.3} parent=0 // pred_check_branch
    %46 = sbr.rel (0) target = $region57
  $region56: #{crosscode2vec_lack_atten.3} parent=0 // pred_region
    _
  $region57: #{crosscode2vec_lack_atten.3} parent=0 // pred_fallthru
    _
  %v48 = vld [vmem:[%s0] sm:$0xf]
  %v49 = vld [vmem:[%s0 + $0x4] sm:$0xf]
  %v50 = vld [vmem:[%s0 + $0x8] sm:$0xf]
  %v51 = vld [vmem:[%s0 + $0xc] sm:$0xf]
  %v52 = vld [vmem:[%s1] sm:$0xf]
  %v53 = vld [vmem:[%s1 + $0x4] sm:$0xf]
  %v54 = vld [vmem:[%s1 + $0x8] sm:$0xf]
  %v55 = vld [vmem:[%s1 + $0xc] sm:$0xf]
  %v56 = vld [vmem:[%s2] sm:$0xf]
  %v57 = vld [vmem:[%s2 + $0x4] sm:$0xf]
  %v58 = vld [vmem:[%s2 + $0x8] sm:$0xf]
  %v59 = vld [vmem:[%s2 + $0xc] sm:$0xf]
  %v60 = vld [vmem:[%s2 + $0x10] sm:$0xf]
  %v61 = vld [vmem:[%s2 + $0x14] sm:$0xf]
  %v62 = vld [vmem:[%s2 + $0x18] sm:$0xf]
  %v63 = vld [vmem:[%s2 + $0x1c] sm:$0xf]
  %v64 = vld [vmem:[%s2 + $0x20] sm:$0xf]
  %v65 = vld [vmem:[%s2 + $0x24] sm:$0xf]
  %v66 = vld [vmem:[%s2 + $0x28] sm:$0xf]
  %v67 = vld [vmem:[%s2 + $0x2c] sm:$0xf]
  %v68 = vld [vmem:[%s2 + $0x30] sm:$0xf]
  %v69 = vld [vmem:[%s2 + $0x34] sm:$0xf]
  %v70 = vld [vmem:[%s2 + $0x38] sm:$0xf]
  %v71 = vld [vmem:[%s2 + $0x3c] sm:$0xf]
  %v72 = vld [vmem:[%s3] sm:$0x1]
  %v74 = vlaneseq
  %v75 = vshrl.u32 %v74, 7
  %v76 = vsub.s32 0, %v75
  %v77 = vrot.slane %v72, %v76
  %v83 = vunpack.c.l.b16 %v52
  %v84 = vunpack.c.l.b16 %v53
  %v85 = vunpack.c.l.b16 %v54
  %v86 = vunpack.c.l.b16 %v55
  %v87 = vpack.c.b16 %v84, %v83
  %v88 = vpack.c.b16 %v86, %v85
  %v107 = vunpack.c.l.b16 %v56
  %v108 = vunpack.c.l.b16 %v57
  %v109 = vunpack.c.l.b16 %v58
  %v110 = vunpack.c.l.b16 %v59
  %v111 = vunpack.c.l.b16 %v60
  %v112 = vunpack.c.l.b16 %v61
  %v113 = vunpack.c.l.b16 %v62
  %v114 = vunpack.c.l.b16 %v63
  %v115 = vunpack.c.l.b16 %v64
  %v116 = vunpack.c.l.b16 %v65
  %v117 = vunpack.c.l.b16 %v66
  %v118 = vunpack.c.l.b16 %v67
  %v119 = vunpack.c.l.b16 %v68
  %v120 = vunpack.c.l.b16 %v69
  %v121 = vunpack.c.l.b16 %v70
  %v122 = vunpack.c.l.b16 %v71
  %v123 = vpack.c.b16 %v108, %v107
  %v124 = vpack.c.b16 %v110, %v109
  %v125 = vpack.c.b16 %v112, %v111
  %v126 = vpack.c.b16 %v114, %v113
  %v127 = vpack.c.b16 %v116, %v115
  %v128 = vpack.c.b16 %v118, %v117
  %v129 = vpack.c.b16 %v120, %v119
  %v130 = vpack.c.b16 %v122, %v121
  %139 = vmatprep.subr.bf16.mxu0 0
  %140 = vmatpush1.bf16.msra.mxu0 %v130
  %141 = vmatprep.subr.bf16.mxu0 0
  %142 = vmatpush1.bf16.msra.mxu0 %v129
  %143 = vmatprep.subr.bf16.mxu0 0
  %144 = vmatpush1.bf16.msra.mxu0 %v128
  %145 = vmatprep.subr.bf16.mxu0 0
  %146 = vmatpush1.bf16.msra.mxu0 %v127
  %147 = vmatprep.subr.bf16.mxu0 0
  %148 = vmatpush1.bf16.msra.mxu0 %v126
  %149 = vmatprep.subr.bf16.mxu0 0
  %150 = vmatpush1.bf16.msra.mxu0 %v125
  %151 = vmatprep.subr.bf16.mxu0 0
  %152 = vmatpush1.bf16.msra.mxu0 %v124
  %153 = vmatprep.subr.bf16.mxu0 0
  %154 = vmatpush1.bf16.msra.mxu0 %v123
  %155 = vmatprep.subr.bf16.mxu0 0
  %156 = vmatpush2.bf16.msra.mxu0 0
  %157 = vmatprep.subr.bf16.mxu0 0
  %158 = vmatpush2.bf16.msra.mxu0 0
  %159 = vmatprep.subr.bf16.mxu0 0
  %160 = vmatpush2.bf16.msra.mxu0 0
  %161 = vmatprep.subr.bf16.mxu0 0
  %162 = vmatpush2.bf16.msra.mxu0 0
  %163 = vmatprep.subr.bf16.mxu0 0
  %164 = vmatpush2.bf16.msra.mxu0 0
  %165 = vmatprep.subr.bf16.mxu0 0
  %166 = vmatpush2.bf16.msra.mxu0 0
  %167 = vmatprep.subr.bf16.mxu0 0
  %168 = vmatpush2.bf16.msra.mxu0 0
  %169 = vmatprep.subr.bf16.mxu0 0
  %170 = vmatpush2.bf16.msra.mxu0 0
  %171 = vmatprep.mubr.bf16.mxu0 0
  %172 = vmatmul.mubr.bf16.gmra.mxu0 %v87
  %v173 = vpop.f32.mrf.mxu0
  %v174 = vadd.f32 %v77, %v173
  %v175 = vpop.f32.mrf.mxu0
  %v176 = vpop.f32.mrf.mxu0
  %v177 = vadd.f32 %v77, %v176
  %v178 = vpop.f32.mrf.mxu0
  %179 = vmatprep.mubr.bf16.mxu0 0
  %180 = vmatmul.mubr.bf16.gmra.mxu0 %v88
  %v181 = vpop.f32.mrf.mxu0
  %v182 = vadd.f32 %v77, %v181
  %v183 = vpop.f32.mrf.mxu0
  %v184 = vpop.f32.mrf.mxu0
  %v185 = vadd.f32 %v77, %v184
  %v186 = vpop.f32.mrf.mxu0
  %187 = vdwg.mxu0
  %v188 = vtanh.pop %v174
  %v189 = vtanh.pop %v177
  %v190 = vtanh.pop %v182
  %v191 = vtanh.pop %v185
  %v192 = vpack.c.bf16 %v189, %v188
  %v193 = vpack.c.bf16 %v191, %v190
  %v194 = vld [vmem:[%s4] sm:$0xf]
  %v195 = vld [vmem:[%s4 + $0x4] sm:$0xf]
  %v196 = vld [vmem:[%s4 + $0x8] sm:$0xf]
  %v197 = vld [vmem:[%s4 + $0xc] sm:$0xf]
  %v198 = vld [vmem:[%s4 + $0x10] sm:$0xf]
  %v199 = vld [vmem:[%s4 + $0x14] sm:$0xf]
  %v200 = vld [vmem:[%s4 + $0x18] sm:$0xf]
  %v201 = vld [vmem:[%s4 + $0x1c] sm:$0xf]
  %v202 = vld [vmem:[%s4 + $0x20] sm:$0xf]
  %v203 = vld [vmem:[%s4 + $0x24] sm:$0xf]
  %v204 = vld [vmem:[%s4 + $0x28] sm:$0xf]
  %v205 = vld [vmem:[%s4 + $0x2c] sm:$0xf]
  %v206 = vld [vmem:[%s4 + $0x30] sm:$0xf]
  %v207 = vld [vmem:[%s4 + $0x34] sm:$0xf]
  %v208 = vld [vmem:[%s4 + $0x38] sm:$0xf]
  %v209 = vld [vmem:[%s4 + $0x3c] sm:$0xf]
  %v210 = vld [vmem:[%s6] sm:$0xf]
  %v211 = vld [vmem:[%s6 + $0x4] sm:$0xf]
  %v212 = vld [vmem:[%s6 + $0x8] sm:$0xf]
  %v213 = vld [vmem:[%s6 + $0xc] sm:$0xf]
  %v214 = vld [vmem:[%s6 + $0x10] sm:$0xf]
  %v215 = vld [vmem:[%s6 + $0x14] sm:$0xf]
  %v216 = vld [vmem:[%s6 + $0x18] sm:$0xf]
  %v217 = vld [vmem:[%s6 + $0x1c] sm:$0xf]
  %v218 = vld [vmem:[%s6 + $0x20] sm:$0xf]
  %v219 = vld [vmem:[%s6 + $0x24] sm:$0xf]
  %v220 = vld [vmem:[%s6 + $0x28] sm:$0xf]
  %v221 = vld [vmem:[%s6 + $0x2c] sm:$0xf]
  %v222 = vld [vmem:[%s6 + $0x30] sm:$0xf]
  %v223 = vld [vmem:[%s6 + $0x34] sm:$0xf]
  %v224 = vld [vmem:[%s6 + $0x38] sm:$0xf]
  %v225 = vld [vmem:[%s6 + $0x3c] sm:$0xf]
  %v242 = vunpack.c.l.b16 %v210
  %v243 = vunpack.c.l.b16 %v211
  %v244 = vunpack.c.l.b16 %v212
  %v245 = vunpack.c.l.b16 %v213
  %v246 = vunpack.c.l.b16 %v214
  %v247 = vunpack.c.l.b16 %v215
  %v248 = vunpack.c.l.b16 %v216
  %v249 = vunpack.c.l.b16 %v217
  %v250 = vunpack.c.l.b16 %v218
  %v251 = vunpack.c.l.b16 %v219
  %v252 = vunpack.c.l.b16 %v220
  %v253 = vunpack.c.l.b16 %v221
  %v254 = vunpack.c.l.b16 %v222
  %v255 = vunpack.c.l.b16 %v223
  %v256 = vunpack.c.l.b16 %v224
  %v257 = vunpack.c.l.b16 %v225
  %v258 = vpack.c.b16 %v243, %v242
  %v259 = vpack.c.b16 %v245, %v244
  %v260 = vpack.c.b16 %v247, %v246
  %v261 = vpack.c.b16 %v249, %v248
  %v262 = vpack.c.b16 %v251, %v250
  %v263 = vpack.c.b16 %v253, %v252
  %v264 = vpack.c.b16 %v255, %v254
  %v265 = vpack.c.b16 %v257, %v256
  %274 = vmatprep.subr.bf16.mxu0 0
  %275 = vmatpush1.bf16.msra.mxu0 %v265
  %276 = vmatprep.subr.bf16.mxu0 0
  %277 = vmatpush1.bf16.msra.mxu0 %v264
  %278 = vmatprep.subr.bf16.mxu0 0
  %279 = vmatpush1.bf16.msra.mxu0 %v263
  %280 = vmatprep.subr.bf16.mxu0 0
  %281 = vmatpush1.bf16.msra.mxu0 %v262
  %282 = vmatprep.subr.bf16.mxu0 0
  %283 = vmatpush1.bf16.msra.mxu0 %v261
  %284 = vmatprep.subr.bf16.mxu0 0
  %285 = vmatpush1.bf16.msra.mxu0 %v260
  %286 = vmatprep.subr.bf16.mxu0 0
  %287 = vmatpush1.bf16.msra.mxu0 %v259
  %288 = vmatprep.subr.bf16.mxu0 0
  %289 = vmatpush1.bf16.msra.mxu0 %v258
  %290 = vmatprep.subr.bf16.mxu0 0
  %291 = vmatpush2.bf16.msra.mxu0 0
  %292 = vmatprep.subr.bf16.mxu0 0
  %293 = vmatpush2.bf16.msra.mxu0 0
  %294 = vmatprep.subr.bf16.mxu0 0
  %295 = vmatpush2.bf16.msra.mxu0 0
  %296 = vmatprep.subr.bf16.mxu0 0
  %297 = vmatpush2.bf16.msra.mxu0 0
  %298 = vmatprep.subr.bf16.mxu0 0
  %299 = vmatpush2.bf16.msra.mxu0 0
  %300 = vmatprep.subr.bf16.mxu0 0
  %301 = vmatpush2.bf16.msra.mxu0 0
  %302 = vmatprep.subr.bf16.mxu0 0
  %303 = vmatpush2.bf16.msra.mxu0 0
  %304 = vmatprep.subr.bf16.mxu0 0
  %305 = vmatpush2.bf16.msra.mxu0 0
  %306 = vmatprep.mubr.bf16.mxu0 0
  %307 = vmatmul.mubr.bf16.gmra.mxu0 %v192
  %v308 = vpop.f32.mrf.mxu0
  %v309 = vadd.f32 0.0, %v308
  %v310 = vpop.f32.mrf.mxu0
  %v311 = vpop.f32.mrf.mxu0
  %v312 = vadd.f32 0.0, %v311
  %v313 = vpop.f32.mrf.mxu0
  %314 = vmatprep.mubr.bf16.mxu0 0
  %315 = vmatmul.mubr.bf16.gmra.mxu0 %v193
  %v316 = vpop.f32.mrf.mxu0
  %v317 = vadd.f32 0.0, %v316
  %v318 = vpop.f32.mrf.mxu0
  %v319 = vpop.f32.mrf.mxu0
  %v320 = vadd.f32 0.0, %v319
  %v321 = vpop.f32.mrf.mxu0
  %322 = vdwg.mxu0
  %v327 = vunpack.c.l.b16 %v48
  %v328 = vunpack.c.l.b16 %v49
  %v329 = vunpack.c.l.b16 %v50
  %v330 = vunpack.c.l.b16 %v51
  %v331 = vpack.c.b16 %v328, %v327
  %v332 = vpack.c.b16 %v330, %v329
  %v351 = vunpack.c.l.b16 %v194
  %v352 = vunpack.c.l.b16 %v195
  %v353 = vunpack.c.l.b16 %v196
  %v354 = vunpack.c.l.b16 %v197
  %v355 = vunpack.c.l.b16 %v198
  %v356 = vunpack.c.l.b16 %v199
  %v357 = vunpack.c.l.b16 %v200
  %v358 = vunpack.c.l.b16 %v201
  %v359 = vunpack.c.l.b16 %v202
  %v360 = vunpack.c.l.b16 %v203
  %v361 = vunpack.c.l.b16 %v204
  %v362 = vunpack.c.l.b16 %v205
  %v363 = vunpack.c.l.b16 %v206
  %v364 = vunpack.c.l.b16 %v207
  %v365 = vunpack.c.l.b16 %v208
  %v366 = vunpack.c.l.b16 %v209
  %v367 = vpack.c.b16 %v352, %v351
  %v368 = vpack.c.b16 %v354, %v353
  %v369 = vpack.c.b16 %v356, %v355
  %v370 = vpack.c.b16 %v358, %v357
  %v371 = vpack.c.b16 %v360, %v359
  %v372 = vpack.c.b16 %v362, %v361
  %v373 = vpack.c.b16 %v364, %v363
  %v374 = vpack.c.b16 %v366, %v365
  %383 = vmatprep.subr.bf16.mxu0 0
  %384 = vmatpush1.bf16.msra.mxu0 %v374
  %385 = vmatprep.subr.bf16.mxu0 0
  %386 = vmatpush1.bf16.msra.mxu0 %v373
  %387 = vmatprep.subr.bf16.mxu0 0
  %388 = vmatpush1.bf16.msra.mxu0 %v372
  %389 = vmatprep.subr.bf16.mxu0 0
  %390 = vmatpush1.bf16.msra.mxu0 %v371
  %391 = vmatprep.subr.bf16.mxu0 0
  %392 = vmatpush1.bf16.msra.mxu0 %v370
  %393 = vmatprep.subr.bf16.mxu0 0
  %394 = vmatpush1.bf16.msra.mxu0 %v369
  %395 = vmatprep.subr.bf16.mxu0 0
  %396 = vmatpush1.bf16.msra.mxu0 %v368
  %397 = vmatprep.subr.bf16.mxu0 0
  %398 = vmatpush1.bf16.msra.mxu0 %v367
  %399 = vmatprep.subr.bf16.mxu0 0
  %400 = vmatpush2.bf16.msra.mxu0 0
  %401 = vmatprep.subr.bf16.mxu0 0
  %402 = vmatpush2.bf16.msra.mxu0 0
  %403 = vmatprep.subr.bf16.mxu0 0
  %404 = vmatpush2.bf16.msra.mxu0 0
  %405 = vmatprep.subr.bf16.mxu0 0
  %406 = vmatpush2.bf16.msra.mxu0 0
  %407 = vmatprep.subr.bf16.mxu0 0
  %408 = vmatpush2.bf16.msra.mxu0 0
  %409 = vmatprep.subr.bf16.mxu0 0
  %410 = vmatpush2.bf16.msra.mxu0 0
  %411 = vmatprep.subr.bf16.mxu0 0
  %412 = vmatpush2.bf16.msra.mxu0 0
  %413 = vmatprep.subr.bf16.mxu0 0
  %414 = vmatpush2.bf16.msra.mxu0 0
  %415 = vmatprep.mubr.bf16.mxu0 0
  %416 = vmatmul.mubr.bf16.gmra.mxu0 %v331
  %v417 = vpop.f32.mrf.mxu0
  %v418 = vadd.f32 %v309, %v417
  %v419 = vpop.f32.mrf.mxu0
  %v420 = vpop.f32.mrf.mxu0
  %v421 = vadd.f32 %v312, %v420
  %v422 = vpop.f32.mrf.mxu0
  %423 = vmatprep.mubr.bf16.mxu0 0
  %424 = vmatmul.mubr.bf16.gmra.mxu0 %v332
  %v425 = vpop.f32.mrf.mxu0
  %v426 = vadd.f32 %v317, %v425
  %v427 = vpop.f32.mrf.mxu0
  %v428 = vpop.f32.mrf.mxu0
  %v429 = vadd.f32 %v320, %v428
  %v430 = vpop.f32.mrf.mxu0
  %431 = vdwg.mxu0
  %v432 = vld [vmem:[%s10] sm:$0x1]
  %v434 = vlaneseq
  %v435 = vshrl.u32 %v434, 7
  %v436 = vsub.s32 0, %v435
  %v437 = vrot.slane %v432, %v436
  %v439 = vadd.f32 %v418, %v437
  %v440 = vadd.f32 %v421, %v437
  %v441 = vadd.f32 %v426, %v437
  %v442 = vadd.f32 %v429, %v437
  %443 = vst [vmem:[#allocation2] sm:$0xff] %v439
  %444 = vst [vmem:[#allocation2 + $0x8] sm:$0xff] %v440
  %445 = vst [vmem:[#allocation2 + $0x10] sm:$0xff] %v441
  %446 = vst [vmem:[#allocation2 + $0x18] sm:$0xff] %v442
  %v447 = vld [vmem:[%s5] sm:$0xf]
  %v448 = vld [vmem:[%s5 + $0x4] sm:$0xf]
  %v449 = vld [vmem:[%s5 + $0x8] sm:$0xf]
  %v450 = vld [vmem:[%s5 + $0xc] sm:$0xf]
  %v451 = vld [vmem:[%s5 + $0x10] sm:$0xf]
  %v452 = vld [vmem:[%s5 + $0x14] sm:$0xf]
  %v453 = vld [vmem:[%s5 + $0x18] sm:$0xf]
  %v454 = vld [vmem:[%s5 + $0x1c] sm:$0xf]
  %v455 = vld [vmem:[%s5 + $0x20] sm:$0xf]
  %v456 = vld [vmem:[%s5 + $0x24] sm:$0xf]
  %v457 = vld [vmem:[%s5 + $0x28] sm:$0xf]
  %v458 = vld [vmem:[%s5 + $0x2c] sm:$0xf]
  %v459 = vld [vmem:[%s5 + $0x30] sm:$0xf]
  %v460 = vld [vmem:[%s5 + $0x34] sm:$0xf]
  %v461 = vld [vmem:[%s5 + $0x38] sm:$0xf]
  %v462 = vld [vmem:[%s5 + $0x3c] sm:$0xf]
  %v463 = vld [vmem:[%s7] sm:$0xf]
  %v464 = vld [vmem:[%s7 + $0x4] sm:$0xf]
  %v465 = vld [vmem:[%s7 + $0x8] sm:$0xf]
  %v466 = vld [vmem:[%s7 + $0xc] sm:$0xf]
  %v467 = vld [vmem:[%s7 + $0x10] sm:$0xf]
  %v468 = vld [vmem:[%s7 + $0x14] sm:$0xf]
  %v469 = vld [vmem:[%s7 + $0x18] sm:$0xf]
  %v470 = vld [vmem:[%s7 + $0x1c] sm:$0xf]
  %v471 = vld [vmem:[%s7 + $0x20] sm:$0xf]
  %v472 = vld [vmem:[%s7 + $0x24] sm:$0xf]
  %v473 = vld [vmem:[%s7 + $0x28] sm:$0xf]
  %v474 = vld [vmem:[%s7 + $0x2c] sm:$0xf]
  %v475 = vld [vmem:[%s7 + $0x30] sm:$0xf]
  %v476 = vld [vmem:[%s7 + $0x34] sm:$0xf]
  %v477 = vld [vmem:[%s7 + $0x38] sm:$0xf]
  %v478 = vld [vmem:[%s7 + $0x3c] sm:$0xf]
  %v495 = vunpack.c.l.b16 %v463
  %v496 = vunpack.c.l.b16 %v464
  %v497 = vunpack.c.l.b16 %v465
  %v498 = vunpack.c.l.b16 %v466
  %v499 = vunpack.c.l.b16 %v467
  %v500 = vunpack.c.l.b16 %v468
  %v501 = vunpack.c.l.b16 %v469
  %v502 = vunpack.c.l.b16 %v470
  %v503 = vunpack.c.l.b16 %v471
  %v504 = vunpack.c.l.b16 %v472
  %v505 = vunpack.c.l.b16 %v473
  %v506 = vunpack.c.l.b16 %v474
  %v507 = vunpack.c.l.b16 %v475
  %v508 = vunpack.c.l.b16 %v476
  %v509 = vunpack.c.l.b16 %v477
  %v510 = vunpack.c.l.b16 %v478
  %v511 = vpack.c.b16 %v496, %v495
  %v512 = vpack.c.b16 %v498, %v497
  %v513 = vpack.c.b16 %v500, %v499
  %v514 = vpack.c.b16 %v502, %v501
  %v515 = vpack.c.b16 %v504, %v503
  %v516 = vpack.c.b16 %v506, %v505
  %v517 = vpack.c.b16 %v508, %v507
  %v518 = vpack.c.b16 %v510, %v509
  %527 = vmatprep.subr.bf16.mxu0 0
  %528 = vmatpush1.bf16.msra.mxu0 %v518
  %529 = vmatprep.subr.bf16.mxu0 0
  %530 = vmatpush1.bf16.msra.mxu0 %v517
  %531 = vmatprep.subr.bf16.mxu0 0
  %532 = vmatpush1.bf16.msra.mxu0 %v516
  %533 = vmatprep.subr.bf16.mxu0 0
  %534 = vmatpush1.bf16.msra.mxu0 %v515
  %535 = vmatprep.subr.bf16.mxu0 0
  %536 = vmatpush1.bf16.msra.mxu0 %v514
  %537 = vmatprep.subr.bf16.mxu0 0
  %538 = vmatpush1.bf16.msra.mxu0 %v513
  %539 = vmatprep.subr.bf16.mxu0 0
  %540 = vmatpush1.bf16.msra.mxu0 %v512
  %541 = vmatprep.subr.bf16.mxu0 0
  %542 = vmatpush1.bf16.msra.mxu0 %v511
  %543 = vmatprep.subr.bf16.mxu0 0
  %544 = vmatpush2.bf16.msra.mxu0 0
  %545 = vmatprep.subr.bf16.mxu0 0
  %546 = vmatpush2.bf16.msra.mxu0 0
  %547 = vmatprep.subr.bf16.mxu0 0
  %548 = vmatpush2.bf16.msra.mxu0 0
  %549 = vmatprep.subr.bf16.mxu0 0
  %550 = vmatpush2.bf16.msra.mxu0 0
  %551 = vmatprep.subr.bf16.mxu0 0
  %552 = vmatpush2.bf16.msra.mxu0 0
  %553 = vmatprep.subr.bf16.mxu0 0
  %554 = vmatpush2.bf16.msra.mxu0 0
  %555 = vmatprep.subr.bf16.mxu0 0
  %556 = vmatpush2.bf16.msra.mxu0 0
  %557 = vmatprep.subr.bf16.mxu0 0
  %558 = vmatpush2.bf16.msra.mxu0 0
  %559 = vmatprep.mubr.bf16.mxu0 0
  %560 = vmatmul.mubr.bf16.gmra.mxu0 %v192
  %v561 = vpop.f32.mrf.mxu0
  %v562 = vadd.f32 0.0, %v561
  %v563 = vpop.f32.mrf.mxu0
  %v564 = vpop.f32.mrf.mxu0
  %v565 = vadd.f32 0.0, %v564
  %v566 = vpop.f32.mrf.mxu0
  %567 = vmatprep.mubr.bf16.mxu0 0
  %568 = vmatmul.mubr.bf16.gmra.mxu0 %v193
  %v569 = vpop.f32.mrf.mxu0
  %v570 = vadd.f32 0.0, %v569
  %v571 = vpop.f32.mrf.mxu0
  %v572 = vpop.f32.mrf.mxu0
  %v573 = vadd.f32 0.0, %v572
  %v574 = vpop.f32.mrf.mxu0
  %575 = vdwg.mxu0
  %v592 = vunpack.c.l.b16 %v447
  %v593 = vunpack.c.l.b16 %v448
  %v594 = vunpack.c.l.b16 %v449
  %v595 = vunpack.c.l.b16 %v450
  %v596 = vunpack.c.l.b16 %v451
  %v597 = vunpack.c.l.b16 %v452
  %v598 = vunpack.c.l.b16 %v453
  %v599 = vunpack.c.l.b16 %v454
  %v600 = vunpack.c.l.b16 %v455
  %v601 = vunpack.c.l.b16 %v456
  %v602 = vunpack.c.l.b16 %v457
  %v603 = vunpack.c.l.b16 %v458
  %v604 = vunpack.c.l.b16 %v459
  %v605 = vunpack.c.l.b16 %v460
  %v606 = vunpack.c.l.b16 %v461
  %v607 = vunpack.c.l.b16 %v462
  %v608 = vpack.c.b16 %v593, %v592
  %v609 = vpack.c.b16 %v595, %v594
  %v610 = vpack.c.b16 %v597, %v596
  %v611 = vpack.c.b16 %v599, %v598
  %v612 = vpack.c.b16 %v601, %v600
  %v613 = vpack.c.b16 %v603, %v602
  %v614 = vpack.c.b16 %v605, %v604
  %v615 = vpack.c.b16 %v607, %v606
  %624 = vmatprep.subr.bf16.mxu0 0
  %625 = vmatpush1.bf16.msra.mxu0 %v615
  %626 = vmatprep.subr.bf16.mxu0 0
  %627 = vmatpush1.bf16.msra.mxu0 %v614
  %628 = vmatprep.subr.bf16.mxu0 0
  %629 = vmatpush1.bf16.msra.mxu0 %v613
  %630 = vmatprep.subr.bf16.mxu0 0
  %631 = vmatpush1.bf16.msra.mxu0 %v612
  %632 = vmatprep.subr.bf16.mxu0 0
  %633 = vmatpush1.bf16.msra.mxu0 %v611
  %634 = vmatprep.subr.bf16.mxu0 0
  %635 = vmatpush1.bf16.msra.mxu0 %v610
  %636 = vmatprep.subr.bf16.mxu0 0
  %637 = vmatpush1.bf16.msra.mxu0 %v609
  %638 = vmatprep.subr.bf16.mxu0 0
  %639 = vmatpush1.bf16.msra.mxu0 %v608
  %640 = vmatprep.subr.bf16.mxu0 0
  %641 = vmatpush2.bf16.msra.mxu0 0
  %642 = vmatprep.subr.bf16.mxu0 0
  %643 = vmatpush2.bf16.msra.mxu0 0
  %644 = vmatprep.subr.bf16.mxu0 0
  %645 = vmatpush2.bf16.msra.mxu0 0
  %646 = vmatprep.subr.bf16.mxu0 0
  %647 = vmatpush2.bf16.msra.mxu0 0
  %648 = vmatprep.subr.bf16.mxu0 0
  %649 = vmatpush2.bf16.msra.mxu0 0
  %650 = vmatprep.subr.bf16.mxu0 0
  %651 = vmatpush2.bf16.msra.mxu0 0
  %652 = vmatprep.subr.bf16.mxu0 0
  %653 = vmatpush2.bf16.msra.mxu0 0
  %654 = vmatprep.subr.bf16.mxu0 0
  %655 = vmatpush2.bf16.msra.mxu0 0
  %656 = vmatprep.mubr.bf16.mxu0 0
  %657 = vmatmul.mubr.bf16.gmra.mxu0 %v331
  %v658 = vpop.f32.mrf.mxu0
  %v659 = vadd.f32 %v562, %v658
  %v660 = vpop.f32.mrf.mxu0
  %v661 = vpop.f32.mrf.mxu0
  %v662 = vadd.f32 %v565, %v661
  %v663 = vpop.f32.mrf.mxu0
  %664 = vmatprep.mubr.bf16.mxu0 0
  %665 = vmatmul.mubr.bf16.gmra.mxu0 %v332
  %v666 = vpop.f32.mrf.mxu0
  %v667 = vadd.f32 %v570, %v666
  %v668 = vpop.f32.mrf.mxu0
  %v669 = vpop.f32.mrf.mxu0
  %v670 = vadd.f32 %v573, %v669
  %v671 = vpop.f32.mrf.mxu0
  %672 = vdwg.mxu0
  %v673 = vld [vmem:[%s11] sm:$0x1]
  %v675 = vlaneseq
  %v676 = vshrl.u32 %v675, 7
  %v677 = vsub.s32 0, %v676
  %v678 = vrot.slane %v673, %v677
  %v680 = vadd.f32 %v659, %v678
  %v681 = vadd.f32 %v662, %v678
  %v682 = vadd.f32 %v667, %v678
  %v683 = vadd.f32 %v670, %v678
  %684 = vst [vmem:[#allocation3] sm:$0xff] %v680
  %685 = vst [vmem:[#allocation3 + $0x8] sm:$0xff] %v681
  %686 = vst [vmem:[#allocation3 + $0x10] sm:$0xff] %v682
  %687 = vst [vmem:[#allocation3 + $0x18] sm:$0xff] %v683
  %v688 = vld [vmem:[%s8] sm:$0xf]
  %v689 = vld [vmem:[%s8 + $0x4] sm:$0xf]
  %v690 = vld [vmem:[%s8 + $0x8] sm:$0xf]
  %v691 = vld [vmem:[%s8 + $0xc] sm:$0xf]
  %v692 = vld [vmem:[%s9] sm:$0xf]
  %v693 = vld [vmem:[%s9 + $0x4] sm:$0xf]
  %v694 = vld [vmem:[%s9 + $0x8] sm:$0xf]
  %v695 = vld [vmem:[%s9 + $0xc] sm:$0xf]
  %v696 = vld [vmem:[#allocation2] sm:$0xff]
  %v697 = vld [vmem:[#allocation3 + $0x18] sm:$0xff]
  %v702 = vunpack.c.l.b16 %v688
  %v703 = vunpack.c.l.b16 %v689
  %v704 = vunpack.c.l.b16 %v690
  %v705 = vunpack.c.l.b16 %v691
  %v706 = vpack.c.b16 %v703, %v702
  %v707 = vpack.c.b16 %v705, %v704
  %vm710 = vcmask 261120
  %v712 = vsel %vm710, 0, 0
  %714 = vmatprep.subr.bf16.mxu0 0
  %715 = vmatpush1.bf16.msra.mxu0 0
  %716 = vmatprep.subr.bf16.mxu0 0
  %717 = vmatpush1.bf16.msra.mxu0 0
  %718 = vmatprep.subr.bf16.mxu0 0
  %719 = vmatpush1.bf16.msra.mxu0 0
  %720 = vmatprep.subr.bf16.mxu0 0
  %721 = vmatpush1.bf16.msra.mxu0 0
  %722 = vmatprep.subr.bf16.mxu0 0
  %723 = vmatpush1.bf16.msra.mxu0 0
  %724 = vmatprep.subr.bf16.mxu0 0
  %725 = vmatpush1.bf16.msra.mxu0 0
  %726 = vmatprep.subr.bf16.mxu0 0
  %727 = vmatpush1.bf16.msra.mxu0 %v707
  %728 = vmatprep.subr.bf16.mxu0 0
  %729 = vmatpush1.bf16.msra.mxu0 %v706
  %730 = vmatprep.subr.bf16.mxu0 0
  %731 = vmatpush2.bf16.msra.mxu0 0
  %732 = vmatprep.subr.bf16.mxu0 0
  %733 = vmatpush2.bf16.msra.mxu0 0
  %734 = vmatprep.subr.bf16.mxu0 0
  %735 = vmatpush2.bf16.msra.mxu0 0
  %736 = vmatprep.subr.bf16.mxu0 0
  %737 = vmatpush2.bf16.msra.mxu0 0
  %738 = vmatprep.subr.bf16.mxu0 0
  %739 = vmatpush2.bf16.msra.mxu0 0
  %740 = vmatprep.subr.bf16.mxu0 0
  %741 = vmatpush2.bf16.msra.mxu0 0
  %742 = vmatprep.subr.bf16.mxu0 0
  %743 = vmatpush2.bf16.msra.mxu0 0
  %744 = vmatprep.subr.bf16.mxu0 0
  %745 = vmatpush2.bf16.msra.mxu0 0
  %746 = vmatprep.mubr.bf16.mxu0 0
  %747 = vmatmul.mubr.bf16.gmra.mxu0 %v712
  %v748 = vpop.f32.mrf.mxu0
  %v749 = vadd.f32 0.0, %v748
  %v750 = vpop.f32.mrf.mxu0
  %v751 = vpop.f32.mrf.mxu0
  %v752 = vpop.f32.mrf.mxu0
  %753 = vdwg.mxu0
  %v754 = vadd.f32 %v696, %v749
  %v759 = vunpack.c.l.b16 %v692
  %v760 = vunpack.c.l.b16 %v693
  %v761 = vunpack.c.l.b16 %v694
  %v762 = vunpack.c.l.b16 %v695
  %v763 = vpack.c.b16 %v760, %v759
  %v764 = vpack.c.b16 %v762, %v761
  %767 = vmatprep.subr.bf16.mxu0 0
  %768 = vmatpush1.bf16.msra.mxu0 0
  %769 = vmatprep.subr.bf16.mxu0 0
  %770 = vmatpush1.bf16.msra.mxu0 0
  %771 = vmatprep.subr.bf16.mxu0 0
  %772 = vmatpush1.bf16.msra.mxu0 0
  %773 = vmatprep.subr.bf16.mxu0 0
  %774 = vmatpush1.bf16.msra.mxu0 0
  %775 = vmatprep.subr.bf16.mxu0 0
  %776 = vmatpush1.bf16.msra.mxu0 0
  %777 = vmatprep.subr.bf16.mxu0 0
  %778 = vmatpush1.bf16.msra.mxu0 0
  %779 = vmatprep.subr.bf16.mxu0 0
  %780 = vmatpush1.bf16.msra.mxu0 %v764
  %781 = vmatprep.subr.bf16.mxu0 0
  %782 = vmatpush1.bf16.msra.mxu0 %v763
  %783 = vmatprep.subr.bf16.mxu0 0
  %784 = vmatpush2.bf16.msra.mxu0 0
  %785 = vmatprep.subr.bf16.mxu0 0
  %786 = vmatpush2.bf16.msra.mxu0 0
  %787 = vmatprep.subr.bf16.mxu0 0
  %788 = vmatpush2.bf16.msra.mxu0 0
  %789 = vmatprep.subr.bf16.mxu0 0
  %790 = vmatpush2.bf16.msra.mxu0 0
  %791 = vmatprep.subr.bf16.mxu0 0
  %792 = vmatpush2.bf16.msra.mxu0 0
  %793 = vmatprep.subr.bf16.mxu0 0
  %794 = vmatpush2.bf16.msra.mxu0 0
  %795 = vmatprep.subr.bf16.mxu0 0
  %796 = vmatpush2.bf16.msra.mxu0 0
  %797 = vmatprep.subr.bf16.mxu0 0
  %798 = vmatpush2.bf16.msra.mxu0 0
  %799 = vmatprep.mubr.bf16.mxu0 0
  %800 = vmatmul.mubr.bf16.gmra.mxu0 %v712
  %v801 = vpop.f32.mrf.mxu0
  %v802 = vadd.f32 0.0, %v801
  %v803 = vpop.f32.mrf.mxu0
  %v804 = vpop.f32.mrf.mxu0
  %v805 = vpop.f32.mrf.mxu0
  %806 = vdwg.mxu0
  %v807 = vadd.f32 %v697, %v802
  %v808 = vxor.u32 %v754, 2147483648
  %v809 = vmul.f32 %v808, 1.442695
  %v810 = vpow.pop %v809
  %v811 = vadd.f32 %v810, 1.0
  %v812 = vrcp.pop %v811
  %v813 = vmul.f32 1.0, %v812
  %v814 = vtanh.pop %v754
  %v815 = vmul.f32 %v813, 0.0
  %817 = vrot.lane.b32.xlu0 %v814, 64
  %v818 = vpop.permute.xlu0 %817
  %v820 = vmul.f32 %v813, %v818
  %822 = vrot.lane.b32.xlu0 %v820, 32
  %v823 = vpop.permute.xlu0 %822
  %v825 = vadd.f32 %v815, %v823
  %v826 = vtanh.pop %v825
  %828 = vrot.lane.b32.xlu0 %v826, 64
  %v829 = vpop.permute.xlu0 %828
  %v831 = vmul.f32 %v813, %v829
  %v832 = vxor.u32 %v807, 2147483648
  %v833 = vmul.f32 %v832, 1.442695
  %v834 = vpow.pop %v833
  %v835 = vadd.f32 %v834, 1.0
  %v836 = vrcp.pop %v835
  %v837 = vmul.f32 1.0, %v836
  %v838 = vtanh.pop %v807
  %v839 = vmul.f32 %v837, 0.0
  %841 = vrot.lane.b32.xlu0 %v838, 64
  %v842 = vpop.permute.xlu0 %841
  %v844 = vmul.f32 %v837, %v842
  %846 = vrot.lane.b32.xlu0 %v844, 32
  %v847 = vpop.permute.xlu0 %846
  %v849 = vadd.f32 %v839, %v847
  %v850 = vtanh.pop %v849
  %852 = vrot.lane.b32.xlu0 %v850, 64
  %v853 = vpop.permute.xlu0 %852
  %v855 = vmul.f32 %v837, %v853
  %857 = vrot.lane.b32.xlu0 %v831, 32
  %v858 = vpop.permute.xlu0 %857
  %861 = vrot.lane.b32.xlu0 %v855, 64
  %v862 = vpop.permute.xlu0 %861
  %v864 = vsel %vm710, %v858, %v862
  %v865 = vpack.c.bf16 %v864, %v864
  %v866 = vld [vmem:[%s12] sm:$0xf]
  %v867 = vld [vmem:[%s12 + $0x4] sm:$0xf]
  %v868 = vld [vmem:[%s12 + $0x8] sm:$0xf]
  %v869 = vld [vmem:[%s12 + $0xc] sm:$0xf]
  %v870 = vld [vmem:[%s12 + $0x10] sm:$0xf]
  %v871 = vld [vmem:[%s12 + $0x14] sm:$0xf]
  %v872 = vld [vmem:[%s12 + $0x18] sm:$0xf]
  %v873 = vld [vmem:[%s12 + $0x1c] sm:$0xf]
  %v874 = vld [vmem:[#allocation2 + $0x8] sm:$0xff]
  %v875 = vld [vmem:[#allocation3 + $0x10] sm:$0xff]
  %v876 = vpack.c.bf16 %v831, %v831
  %878 = vrot.lane.b32.xlu0 %v876, 32
  %v879 = vpop.permute.xlu0 %878
  %v881 = vsel %vm710, %v879, 0
  %883 = vmatprep.subr.bf16.mxu0 0
  %884 = vmatpush1.bf16.msra.mxu0 0
  %885 = vmatprep.subr.bf16.mxu0 0
  %886 = vmatpush1.bf16.msra.mxu0 0
  %887 = vmatprep.subr.bf16.mxu0 0
  %888 = vmatpush1.bf16.msra.mxu0 0
  %889 = vmatprep.subr.bf16.mxu0 0
  %890 = vmatpush1.bf16.msra.mxu0 0
  %891 = vmatprep.subr.bf16.mxu0 0
  %892 = vmatpush1.bf16.msra.mxu0 0
  %893 = vmatprep.subr.bf16.mxu0 0
  %894 = vmatpush1.bf16.msra.mxu0 0
  %895 = vmatprep.subr.bf16.mxu0 0
  %896 = vmatpush1.bf16.msra.mxu0 %v707
  %897 = vmatprep.subr.bf16.mxu0 0
  %898 = vmatpush1.bf16.msra.mxu0 %v706
  %899 = vmatprep.subr.bf16.mxu0 0
  %900 = vmatpush2.bf16.msra.mxu0 0
  %901 = vmatprep.subr.bf16.mxu0 0
  %902 = vmatpush2.bf16.msra.mxu0 0
  %903 = vmatprep.subr.bf16.mxu0 0
  %904 = vmatpush2.bf16.msra.mxu0 0
  %905 = vmatprep.subr.bf16.mxu0 0
  %906 = vmatpush2.bf16.msra.mxu0 0
  %907 = vmatprep.subr.bf16.mxu0 0
  %908 = vmatpush2.bf16.msra.mxu0 0
  %909 = vmatprep.subr.bf16.mxu0 0
  %910 = vmatpush2.bf16.msra.mxu0 0
  %911 = vmatprep.subr.bf16.mxu0 0
  %912 = vmatpush2.bf16.msra.mxu0 0
  %913 = vmatprep.subr.bf16.mxu0 0
  %914 = vmatpush2.bf16.msra.mxu0 0
  %915 = vmatprep.mubr.bf16.mxu0 0
  %916 = vmatmul.mubr.bf16.gmra.mxu0 %v881
  %v917 = vpop.f32.mrf.mxu0
  %v918 = vadd.f32 0.0, %v917
  %v919 = vpop.f32.mrf.mxu0
  %v920 = vpop.f32.mrf.mxu0
  %v921 = vpop.f32.mrf.mxu0
  %922 = vdwg.mxu0
  %v923 = vadd.f32 %v874, %v918
  %v924 = vpack.c.bf16 %v855, %v855
  %926 = vrot.lane.b32.xlu0 %v924, 32
  %v927 = vpop.permute.xlu0 %926
  %v929 = vsel %vm710, %v927, 0
  %931 = vmatprep.subr.bf16.mxu0 0
  %932 = vmatpush1.bf16.msra.mxu0 0
  %933 = vmatprep.subr.bf16.mxu0 0
  %934 = vmatpush1.bf16.msra.mxu0 0
  %935 = vmatprep.subr.bf16.mxu0 0
  %936 = vmatpush1.bf16.msra.mxu0 0
  %937 = vmatprep.subr.bf16.mxu0 0
  %938 = vmatpush1.bf16.msra.mxu0 0
  %939 = vmatprep.subr.bf16.mxu0 0
  %940 = vmatpush1.bf16.msra.mxu0 0
  %941 = vmatprep.subr.bf16.mxu0 0
  %942 = vmatpush1.bf16.msra.mxu0 0
  %943 = vmatprep.subr.bf16.mxu0 0
  %944 = vmatpush1.bf16.msra.mxu0 %v764
  %945 = vmatprep.subr.bf16.mxu0 0
  %946 = vmatpush1.bf16.msra.mxu0 %v763
  %947 = vmatprep.subr.bf16.mxu0 0
  %948 = vmatpush2.bf16.msra.mxu0 0
  %949 = vmatprep.subr.bf16.mxu0 0
  %950 = vmatpush2.bf16.msra.mxu0 0
  %951 = vmatprep.subr.bf16.mxu0 0
  %952 = vmatpush2.bf16.msra.mxu0 0
  %953 = vmatprep.subr.bf16.mxu0 0
  %954 = vmatpush2.bf16.msra.mxu0 0
  %955 = vmatprep.subr.bf16.mxu0 0
  %956 = vmatpush2.bf16.msra.mxu0 0
  %957 = vmatprep.subr.bf16.mxu0 0
  %958 = vmatpush2.bf16.msra.mxu0 0
  %959 = vmatprep.subr.bf16.mxu0 0
  %960 = vmatpush2.bf16.msra.mxu0 0
  %961 = vmatprep.subr.bf16.mxu0 0
  %962 = vmatpush2.bf16.msra.mxu0 0
  %963 = vmatprep.mubr.bf16.mxu0 0
  %964 = vmatmul.mubr.bf16.gmra.mxu0 %v929
  %v965 = vpop.f32.mrf.mxu0
  %v966 = vadd.f32 0.0, %v965
  %v967 = vpop.f32.mrf.mxu0
  %v968 = vpop.f32.mrf.mxu0
  %v969 = vpop.f32.mrf.mxu0
  %970 = vdwg.mxu0
  %v971 = vadd.f32 %v875, %v966
  %v972 = vxor.u32 %v923, 2147483648
  %v973 = vmul.f32 %v972, 1.442695
  %v974 = vpow.pop %v973
  %v975 = vadd.f32 %v974, 1.0
  %v976 = vrcp.pop %v975
  %v977 = vmul.f32 1.0, %v976
  %v978 = vtanh.pop %v923
  %v979 = vmul.f32 %v977, %v825
  %981 = vrot.lane.b32.xlu0 %v978, 64
  %v982 = vpop.permute.xlu0 %981
  %v984 = vmul.f32 %v977, %v982
  %986 = vrot.lane.b32.xlu0 %v984, 32
  %v987 = vpop.permute.xlu0 %986
  %v989 = vadd.f32 %v979, %v987
  %v990 = vtanh.pop %v989
  %992 = vrot.lane.b32.xlu0 %v990, 64
  %v993 = vpop.permute.xlu0 %992
  %v995 = vmul.f32 %v977, %v993
  %v996 = vxor.u32 %v971, 2147483648
  %v997 = vmul.f32 %v996, 1.442695
  %v998 = vpow.pop %v997
  %v999 = vadd.f32 %v998, 1.0
  %v1000 = vrcp.pop %v999
  %v1001 = vmul.f32 1.0, %v1000
  %v1002 = vtanh.pop %v971
  %v1003 = vmul.f32 %v1001, %v849
  %1005 = vrot.lane.b32.xlu0 %v1002, 64
  %v1006 = vpop.permute.xlu0 %1005
  %v1008 = vmul.f32 %v1001, %v1006
  %1010 = vrot.lane.b32.xlu0 %v1008, 32
  %v1011 = vpop.permute.xlu0 %1010
  %v1013 = vadd.f32 %v1003, %v1011
  %v1014 = vtanh.pop %v1013
  %1016 = vrot.lane.b32.xlu0 %v1014, 64
  %v1017 = vpop.permute.xlu0 %1016
  %v1019 = vmul.f32 %v1001, %v1017
  %1021 = vrot.lane.b32.xlu0 %v995, 32
  %v1022 = vpop.permute.xlu0 %1021
  %1025 = vrot.lane.b32.xlu0 %v1019, 64
  %v1026 = vpop.permute.xlu0 %1025
  %v1028 = vsel %vm710, %v1022, %v1026
  %v1029 = vpack.c.bf16 %v1028, %v1028
  %s1030 = scalar_lea.vmem %s12, 32
  %v1031 = vld [vmem:[%s1030] sm:$0xf]
  %v1032 = vld [vmem:[%s1030 + $0x4] sm:$0xf]
  %v1033 = vld [vmem:[%s1030 + $0x8] sm:$0xf]
  %v1034 = vld [vmem:[%s1030 + $0xc] sm:$0xf]
  %v1035 = vld [vmem:[%s1030 + $0x10] sm:$0xf]
  %v1036 = vld [vmem:[%s1030 + $0x14] sm:$0xf]
  %v1037 = vld [vmem:[%s1030 + $0x18] sm:$0xf]
  %v1038 = vld [vmem:[%s1030 + $0x1c] sm:$0xf]
  %v1047 = vunpack.c.l.b16 %v1031
  %v1048 = vunpack.c.l.b16 %v1032
  %v1049 = vunpack.c.l.b16 %v1033
  %v1050 = vunpack.c.l.b16 %v1034
  %v1051 = vunpack.c.l.b16 %v1035
  %v1052 = vunpack.c.l.b16 %v1036
  %v1053 = vunpack.c.l.b16 %v1037
  %v1054 = vunpack.c.l.b16 %v1038
  %v1055 = vpack.c.b16 %v1048, %v1047
  %v1056 = vpack.c.b16 %v1050, %v1049
  %v1057 = vpack.c.b16 %v1052, %v1051
  %v1058 = vpack.c.b16 %v1054, %v1053
  %vm1063 = vcmask 523264
  %v1065 = vsel %vm1063, %v1029, 0
  %1067 = vmatprep.subr.bf16.mxu0 0
  %1068 = vmatpush1.bf16.msra.mxu0 0
  %1069 = vmatprep.subr.bf16.mxu0 0
  %1070 = vmatpush1.bf16.msra.mxu0 0
  %1071 = vmatprep.subr.bf16.mxu0 0
  %1072 = vmatpush1.bf16.msra.mxu0 0
  %1073 = vmatprep.subr.bf16.mxu0 0
  %1074 = vmatpush1.bf16.msra.mxu0 0
  %1075 = vmatprep.subr.bf16.mxu0 0
  %1076 = vmatpush1.bf16.msra.mxu0 %v1058
  %1077 = vmatprep.subr.bf16.mxu0 0
  %1078 = vmatpush1.bf16.msra.mxu0 %v1057
  %1079 = vmatprep.subr.bf16.mxu0 0
  %1080 = vmatpush1.bf16.msra.mxu0 %v1056
  %1081 = vmatprep.subr.bf16.mxu0 0
  %1082 = vmatpush1.bf16.msra.mxu0 %v1055
  %1083 = vmatprep.subr.bf16.mxu0 0
  %1084 = vmatpush2.bf16.msra.mxu0 0
  %1085 = vmatprep.subr.bf16.mxu0 0
  %1086 = vmatpush2.bf16.msra.mxu0 0
  %1087 = vmatprep.subr.bf16.mxu0 0
  %1088 = vmatpush2.bf16.msra.mxu0 0
  %1089 = vmatprep.subr.bf16.mxu0 0
  %1090 = vmatpush2.bf16.msra.mxu0 0
  %1091 = vmatprep.subr.bf16.mxu0 0
  %1092 = vmatpush2.bf16.msra.mxu0 0
  %1093 = vmatprep.subr.bf16.mxu0 0
  %1094 = vmatpush2.bf16.msra.mxu0 0
  %1095 = vmatprep.subr.bf16.mxu0 0
  %1096 = vmatpush2.bf16.msra.mxu0 0
  %1097 = vmatprep.subr.bf16.mxu0 0
  %1098 = vmatpush2.bf16.msra.mxu0 0
  %1099 = vmatprep.mubr.bf16.mxu0 0
  %1100 = vmatmul.mubr.bf16.gmra.mxu0 %v1065
  %v1101 = vpop.f32.mrf.mxu0
  %v1102 = vadd.f32 0.0, %v1101
  %v1103 = vpop.f32.mrf.mxu0
  %v1104 = vpop.f32.mrf.mxu0
  %v1105 = vpop.f32.mrf.mxu0
  %1106 = vdwg.mxu0
  %v1115 = vunpack.c.l.b16 %v866
  %v1116 = vunpack.c.l.b16 %v867
  %v1117 = vunpack.c.l.b16 %v868
  %v1118 = vunpack.c.l.b16 %v869
  %v1119 = vunpack.c.l.b16 %v870
  %v1120 = vunpack.c.l.b16 %v871
  %v1121 = vunpack.c.l.b16 %v872
  %v1122 = vunpack.c.l.b16 %v873
  %v1123 = vpack.c.b16 %v1116, %v1115
  %v1124 = vpack.c.b16 %v1118, %v1117
  %v1125 = vpack.c.b16 %v1120, %v1119
  %v1126 = vpack.c.b16 %v1122, %v1121
  %v1132 = vsel %vm1063, %v865, 0
  %1134 = vmatprep.subr.bf16.mxu0 0
  %1135 = vmatpush1.bf16.msra.mxu0 0
  %1136 = vmatprep.subr.bf16.mxu0 0
  %1137 = vmatpush1.bf16.msra.mxu0 0
  %1138 = vmatprep.subr.bf16.mxu0 0
  %1139 = vmatpush1.bf16.msra.mxu0 0
  %1140 = vmatprep.subr.bf16.mxu0 0
  %1141 = vmatpush1.bf16.msra.mxu0 0
  %1142 = vmatprep.subr.bf16.mxu0 0
  %1143 = vmatpush1.bf16.msra.mxu0 %v1126
  %1144 = vmatprep.subr.bf16.mxu0 0
  %1145 = vmatpush1.bf16.msra.mxu0 %v1125
  %1146 = vmatprep.subr.bf16.mxu0 0
  %1147 = vmatpush1.bf16.msra.mxu0 %v1124
  %1148 = vmatprep.subr.bf16.mxu0 0
  %1149 = vmatpush1.bf16.msra.mxu0 %v1123
  %1150 = vmatprep.subr.bf16.mxu0 0
  %1151 = vmatpush2.bf16.msra.mxu0 0
  %1152 = vmatprep.subr.bf16.mxu0 0
  %1153 = vmatpush2.bf16.msra.mxu0 0
  %1154 = vmatprep.subr.bf16.mxu0 0
  %1155 = vmatpush2.bf16.msra.mxu0 0
  %1156 = vmatprep.subr.bf16.mxu0 0
  %1157 = vmatpush2.bf16.msra.mxu0 0
  %1158 = vmatprep.subr.bf16.mxu0 0
  %1159 = vmatpush2.bf16.msra.mxu0 0
  %1160 = vmatprep.subr.bf16.mxu0 0
  %1161 = vmatpush2.bf16.msra.mxu0 0
  %1162 = vmatprep.subr.bf16.mxu0 0
  %1163 = vmatpush2.bf16.msra.mxu0 0
  %1164 = vmatprep.subr.bf16.mxu0 0
  %1165 = vmatpush2.bf16.msra.mxu0 0
  %1166 = vmatprep.mubr.bf16.mxu0 0
  %1167 = vmatmul.mubr.bf16.gmra.mxu0 %v1132
  %v1168 = vpop.f32.mrf.mxu0
  %v1169 = vadd.f32 %v1102, %v1168
  %v1170 = vpop.f32.mrf.mxu0
  %v1171 = vpop.f32.mrf.mxu0
  %v1172 = vpop.f32.mrf.mxu0
  %1173 = vdwg.mxu0
  %v1174 = vld [vmem:[#allocation2 + $0x10] sm:$0xff]
  %v1175 = vld [vmem:[#allocation3 + $0x8] sm:$0xff]
  %v1176 = vpack.c.bf16 %v995, %v995
  %1178 = vrot.lane.b32.xlu0 %v1176, 32
  %v1179 = vpop.permute.xlu0 %1178
  %v1181 = vsel %vm710, %v1179, 0
  %1183 = vmatprep.subr.bf16.mxu0 0
  %1184 = vmatpush1.bf16.msra.mxu0 0
  %1185 = vmatprep.subr.bf16.mxu0 0
  %1186 = vmatpush1.bf16.msra.mxu0 0
  %1187 = vmatprep.subr.bf16.mxu0 0
  %1188 = vmatpush1.bf16.msra.mxu0 0
  %1189 = vmatprep.subr.bf16.mxu0 0
  %1190 = vmatpush1.bf16.msra.mxu0 0
  %1191 = vmatprep.subr.bf16.mxu0 0
  %1192 = vmatpush1.bf16.msra.mxu0 0
  %1193 = vmatprep.subr.bf16.mxu0 0
  %1194 = vmatpush1.bf16.msra.mxu0 0
  %1195 = vmatprep.subr.bf16.mxu0 0
  %1196 = vmatpush1.bf16.msra.mxu0 %v707
  %1197 = vmatprep.subr.bf16.mxu0 0
  %1198 = vmatpush1.bf16.msra.mxu0 %v706
  %1199 = vmatprep.subr.bf16.mxu0 0
  %1200 = vmatpush2.bf16.msra.mxu0 0
  %1201 = vmatprep.subr.bf16.mxu0 0
  %1202 = vmatpush2.bf16.msra.mxu0 0
  %1203 = vmatprep.subr.bf16.mxu0 0
  %1204 = vmatpush2.bf16.msra.mxu0 0
  %1205 = vmatprep.subr.bf16.mxu0 0
  %1206 = vmatpush2.bf16.msra.mxu0 0
  %1207 = vmatprep.subr.bf16.mxu0 0
  %1208 = vmatpush2.bf16.msra.mxu0 0
  %1209 = vmatprep.subr.bf16.mxu0 0
  %1210 = vmatpush2.bf16.msra.mxu0 0
  %1211 = vmatprep.subr.bf16.mxu0 0
  %1212 = vmatpush2.bf16.msra.mxu0 0
  %1213 = vmatprep.subr.bf16.mxu0 0
  %1214 = vmatpush2.bf16.msra.mxu0 0
  %1215 = vmatprep.mubr.bf16.mxu0 0
  %1216 = vmatmul.mubr.bf16.gmra.mxu0 %v1181
  %v1217 = vpop.f32.mrf.mxu0
  %v1218 = vadd.f32 0.0, %v1217
  %v1219 = vpop.f32.mrf.mxu0
  %v1220 = vpop.f32.mrf.mxu0
  %v1221 = vpop.f32.mrf.mxu0
  %1222 = vdwg.mxu0
  %v1223 = vadd.f32 %v1174, %v1218
  %v1224 = vpack.c.bf16 %v1019, %v1019
  %1226 = vrot.lane.b32.xlu0 %v1224, 32
  %v1227 = vpop.permute.xlu0 %1226
  %v1229 = vsel %vm710, %v1227, 0
  %1231 = vmatprep.subr.bf16.mxu0 0
  %1232 = vmatpush1.bf16.msra.mxu0 0
  %1233 = vmatprep.subr.bf16.mxu0 0
  %1234 = vmatpush1.bf16.msra.mxu0 0
  %1235 = vmatprep.subr.bf16.mxu0 0
  %1236 = vmatpush1.bf16.msra.mxu0 0
  %1237 = vmatprep.subr.bf16.mxu0 0
  %1238 = vmatpush1.bf16.msra.mxu0 0
  %1239 = vmatprep.subr.bf16.mxu0 0
  %1240 = vmatpush1.bf16.msra.mxu0 0
  %1241 = vmatprep.subr.bf16.mxu0 0
  %1242 = vmatpush1.bf16.msra.mxu0 0
  %1243 = vmatprep.subr.bf16.mxu0 0
  %1244 = vmatpush1.bf16.msra.mxu0 %v764
  %1245 = vmatprep.subr.bf16.mxu0 0
  %1246 = vmatpush1.bf16.msra.mxu0 %v763
  %1247 = vmatprep.subr.bf16.mxu0 0
  %1248 = vmatpush2.bf16.msra.mxu0 0
  %1249 = vmatprep.subr.bf16.mxu0 0
  %1250 = vmatpush2.bf16.msra.mxu0 0
  %1251 = vmatprep.subr.bf16.mxu0 0
  %1252 = vmatpush2.bf16.msra.mxu0 0
  %1253 = vmatprep.subr.bf16.mxu0 0
  %1254 = vmatpush2.bf16.msra.mxu0 0
  %1255 = vmatprep.subr.bf16.mxu0 0
  %1256 = vmatpush2.bf16.msra.mxu0 0
  %1257 = vmatprep.subr.bf16.mxu0 0
  %1258 = vmatpush2.bf16.msra.mxu0 0
  %1259 = vmatprep.subr.bf16.mxu0 0
  %1260 = vmatpush2.bf16.msra.mxu0 0
  %1261 = vmatprep.subr.bf16.mxu0 0
  %1262 = vmatpush2.bf16.msra.mxu0 0
  %1263 = vmatprep.mubr.bf16.mxu0 0
  %1264 = vmatmul.mubr.bf16.gmra.mxu0 %v1229
  %v1265 = vpop.f32.mrf.mxu0
  %v1266 = vadd.f32 0.0, %v1265
  %v1267 = vpop.f32.mrf.mxu0
  %v1268 = vpop.f32.mrf.mxu0
  %v1269 = vpop.f32.mrf.mxu0
  %1270 = vdwg.mxu0
  %v1271 = vadd.f32 %v1175, %v1266
  %v1272 = vxor.u32 %v1223, 2147483648
  %v1273 = vmul.f32 %v1272, 1.442695
  %v1274 = vpow.pop %v1273
  %v1275 = vadd.f32 %v1274, 1.0
  %v1276 = vrcp.pop %v1275
  %v1277 = vmul.f32 1.0, %v1276
  %v1278 = vtanh.pop %v1223
  %v1279 = vmul.f32 %v1277, %v989
  %1281 = vrot.lane.b32.xlu0 %v1278, 64
  %v1282 = vpop.permute.xlu0 %1281
  %v1284 = vmul.f32 %v1277, %v1282
  %1286 = vrot.lane.b32.xlu0 %v1284, 32
  %v1287 = vpop.permute.xlu0 %1286
  %v1289 = vadd.f32 %v1279, %v1287
  %v1290 = vtanh.pop %v1289
  %1292 = vrot.lane.b32.xlu0 %v1290, 64
  %v1293 = vpop.permute.xlu0 %1292
  %v1295 = vmul.f32 %v1277, %v1293
  %v1296 = vxor.u32 %v1271, 2147483648
  %v1297 = vmul.f32 %v1296, 1.442695
  %v1298 = vpow.pop %v1297
  %v1299 = vadd.f32 %v1298, 1.0
  %v1300 = vrcp.pop %v1299
  %v1301 = vmul.f32 1.0, %v1300
  %v1302 = vtanh.pop %v1271
  %v1303 = vmul.f32 %v1301, %v1013
  %1305 = vrot.lane.b32.xlu0 %v1302, 64
  %v1306 = vpop.permute.xlu0 %1305
  %v1308 = vmul.f32 %v1301, %v1306
  %1310 = vrot.lane.b32.xlu0 %v1308, 32
  %v1311 = vpop.permute.xlu0 %1310
  %v1313 = vadd.f32 %v1303, %v1311
  %v1314 = vtanh.pop %v1313
  %1316 = vrot.lane.b32.xlu0 %v1314, 64
  %v1317 = vpop.permute.xlu0 %1316
  %v1319 = vmul.f32 %v1301, %v1317
  %1321 = vrot.lane.b32.xlu0 %v1295, 32
  %v1322 = vpop.permute.xlu0 %1321
  %1325 = vrot.lane.b32.xlu0 %v1319, 64
  %v1326 = vpop.permute.xlu0 %1325
  %v1328 = vsel %vm710, %v1322, %v1326
  %v1329 = vpack.c.bf16 %v1328, %v1328
  %s1330 = scalar_lea.vmem %s12, 64
  %v1331 = vld [vmem:[%s1330] sm:$0xf]
  %v1332 = vld [vmem:[%s1330 + $0x4] sm:$0xf]
  %v1333 = vld [vmem:[%s1330 + $0x8] sm:$0xf]
  %v1334 = vld [vmem:[%s1330 + $0xc] sm:$0xf]
  %v1335 = vld [vmem:[%s1330 + $0x10] sm:$0xf]
  %v1336 = vld [vmem:[%s1330 + $0x14] sm:$0xf]
  %v1337 = vld [vmem:[%s1330 + $0x18] sm:$0xf]
  %v1338 = vld [vmem:[%s1330 + $0x1c] sm:$0xf]
  %v1347 = vunpack.c.l.b16 %v1331
  %v1348 = vunpack.c.l.b16 %v1332
  %v1349 = vunpack.c.l.b16 %v1333
  %v1350 = vunpack.c.l.b16 %v1334
  %v1351 = vunpack.c.l.b16 %v1335
  %v1352 = vunpack.c.l.b16 %v1336
  %v1353 = vunpack.c.l.b16 %v1337
  %v1354 = vunpack.c.l.b16 %v1338
  %v1355 = vpack.c.b16 %v1348, %v1347
  %v1356 = vpack.c.b16 %v1350, %v1349
  %v1357 = vpack.c.b16 %v1352, %v1351
  %v1358 = vpack.c.b16 %v1354, %v1353
  %v1364 = vsel %vm1063, %v1329, 0
  %1366 = vmatprep.subr.bf16.mxu0 0
  %1367 = vmatpush1.bf16.msra.mxu0 0
  %1368 = vmatprep.subr.bf16.mxu0 0
  %1369 = vmatpush1.bf16.msra.mxu0 0
  %1370 = vmatprep.subr.bf16.mxu0 0
  %1371 = vmatpush1.bf16.msra.mxu0 0
  %1372 = vmatprep.subr.bf16.mxu0 0
  %1373 = vmatpush1.bf16.msra.mxu0 0
  %1374 = vmatprep.subr.bf16.mxu0 0
  %1375 = vmatpush1.bf16.msra.mxu0 %v1358
  %1376 = vmatprep.subr.bf16.mxu0 0
  %1377 = vmatpush1.bf16.msra.mxu0 %v1357
  %1378 = vmatprep.subr.bf16.mxu0 0
  %1379 = vmatpush1.bf16.msra.mxu0 %v1356
  %1380 = vmatprep.subr.bf16.mxu0 0
  %1381 = vmatpush1.bf16.msra.mxu0 %v1355
  %1382 = vmatprep.subr.bf16.mxu0 0
  %1383 = vmatpush2.bf16.msra.mxu0 0
  %1384 = vmatprep.subr.bf16.mxu0 0
  %1385 = vmatpush2.bf16.msra.mxu0 0
  %1386 = vmatprep.subr.bf16.mxu0 0
  %1387 = vmatpush2.bf16.msra.mxu0 0
  %1388 = vmatprep.subr.bf16.mxu0 0
  %1389 = vmatpush2.bf16.msra.mxu0 0
  %1390 = vmatprep.subr.bf16.mxu0 0
  %1391 = vmatpush2.bf16.msra.mxu0 0
  %1392 = vmatprep.subr.bf16.mxu0 0
  %1393 = vmatpush2.bf16.msra.mxu0 0
  %1394 = vmatprep.subr.bf16.mxu0 0
  %1395 = vmatpush2.bf16.msra.mxu0 0
  %1396 = vmatprep.subr.bf16.mxu0 0
  %1397 = vmatpush2.bf16.msra.mxu0 0
  %1398 = vmatprep.mubr.bf16.mxu0 0
  %1399 = vmatmul.mubr.bf16.gmra.mxu0 %v1364
  %v1400 = vpop.f32.mrf.mxu0
  %v1401 = vadd.f32 0.0, %v1400
  %v1402 = vpop.f32.mrf.mxu0
  %v1403 = vpop.f32.mrf.mxu0
  %v1404 = vpop.f32.mrf.mxu0
  %1405 = vdwg.mxu0
  %v1406 = vadd.f32 %v1169, %v1401
  %v1407 = vld [vmem:[#allocation2 + $0x18] sm:$0xff]
  %v1408 = vld [vmem:[#allocation3] sm:$0xff]
  %v1409 = vpack.c.bf16 %v1295, %v1295
  %1411 = vrot.lane.b32.xlu0 %v1409, 32
  %v1412 = vpop.permute.xlu0 %1411
  %v1414 = vsel %vm710, %v1412, 0
  %1416 = vmatprep.subr.bf16.mxu0 0
  %1417 = vmatpush1.bf16.msra.mxu0 0
  %1418 = vmatprep.subr.bf16.mxu0 0
  %1419 = vmatpush1.bf16.msra.mxu0 0
  %1420 = vmatprep.subr.bf16.mxu0 0
  %1421 = vmatpush1.bf16.msra.mxu0 0
  %1422 = vmatprep.subr.bf16.mxu0 0
  %1423 = vmatpush1.bf16.msra.mxu0 0
  %1424 = vmatprep.subr.bf16.mxu0 0
  %1425 = vmatpush1.bf16.msra.mxu0 0
  %1426 = vmatprep.subr.bf16.mxu0 0
  %1427 = vmatpush1.bf16.msra.mxu0 0
  %1428 = vmatprep.subr.bf16.mxu0 0
  %1429 = vmatpush1.bf16.msra.mxu0 %v707
  %1430 = vmatprep.subr.bf16.mxu0 0
  %1431 = vmatpush1.bf16.msra.mxu0 %v706
  %1432 = vmatprep.subr.bf16.mxu0 0
  %1433 = vmatpush2.bf16.msra.mxu0 0
  %1434 = vmatprep.subr.bf16.mxu0 0
  %1435 = vmatpush2.bf16.msra.mxu0 0
  %1436 = vmatprep.subr.bf16.mxu0 0
  %1437 = vmatpush2.bf16.msra.mxu0 0
  %1438 = vmatprep.subr.bf16.mxu0 0
  %1439 = vmatpush2.bf16.msra.mxu0 0
  %1440 = vmatprep.subr.bf16.mxu0 0
  %1441 = vmatpush2.bf16.msra.mxu0 0
  %1442 = vmatprep.subr.bf16.mxu0 0
  %1443 = vmatpush2.bf16.msra.mxu0 0
  %1444 = vmatprep.subr.bf16.mxu0 0
  %1445 = vmatpush2.bf16.msra.mxu0 0
  %1446 = vmatprep.subr.bf16.mxu0 0
  %1447 = vmatpush2.bf16.msra.mxu0 0
  %1448 = vmatprep.mubr.bf16.mxu0 0
  %1449 = vmatmul.mubr.bf16.gmra.mxu0 %v1414
  %v1450 = vpop.f32.mrf.mxu0
  %v1451 = vadd.f32 0.0, %v1450
  %v1452 = vpop.f32.mrf.mxu0
  %v1453 = vpop.f32.mrf.mxu0
  %v1454 = vpop.f32.mrf.mxu0
  %1455 = vdwg.mxu0
  %v1456 = vadd.f32 %v1407, %v1451
  %v1457 = vpack.c.bf16 %v1319, %v1319
  %1459 = vrot.lane.b32.xlu0 %v1457, 32
  %v1460 = vpop.permute.xlu0 %1459
  %v1462 = vsel %vm710, %v1460, 0
  %1464 = vmatprep.subr.bf16.mxu0 0
  %1465 = vmatpush1.bf16.msra.mxu0 0
  %1466 = vmatprep.subr.bf16.mxu0 0
  %1467 = vmatpush1.bf16.msra.mxu0 0
  %1468 = vmatprep.subr.bf16.mxu0 0
  %1469 = vmatpush1.bf16.msra.mxu0 0
  %1470 = vmatprep.subr.bf16.mxu0 0
  %1471 = vmatpush1.bf16.msra.mxu0 0
  %1472 = vmatprep.subr.bf16.mxu0 0
  %1473 = vmatpush1.bf16.msra.mxu0 0
  %1474 = vmatprep.subr.bf16.mxu0 0
  %1475 = vmatpush1.bf16.msra.mxu0 0
  %1476 = vmatprep.subr.bf16.mxu0 0
  %1477 = vmatpush1.bf16.msra.mxu0 %v764
  %1478 = vmatprep.subr.bf16.mxu0 0
  %1479 = vmatpush1.bf16.msra.mxu0 %v763
  %1480 = vmatprep.subr.bf16.mxu0 0
  %1481 = vmatpush2.bf16.msra.mxu0 0
  %1482 = vmatprep.subr.bf16.mxu0 0
  %1483 = vmatpush2.bf16.msra.mxu0 0
  %1484 = vmatprep.subr.bf16.mxu0 0
  %1485 = vmatpush2.bf16.msra.mxu0 0
  %1486 = vmatprep.subr.bf16.mxu0 0
  %1487 = vmatpush2.bf16.msra.mxu0 0
  %1488 = vmatprep.subr.bf16.mxu0 0
  %1489 = vmatpush2.bf16.msra.mxu0 0
  %1490 = vmatprep.subr.bf16.mxu0 0
  %1491 = vmatpush2.bf16.msra.mxu0 0
  %1492 = vmatprep.subr.bf16.mxu0 0
  %1493 = vmatpush2.bf16.msra.mxu0 0
  %1494 = vmatprep.subr.bf16.mxu0 0
  %1495 = vmatpush2.bf16.msra.mxu0 0
  %1496 = vmatprep.mubr.bf16.mxu0 0
  %1497 = vmatmul.mubr.bf16.gmra.mxu0 %v1462
  %v1498 = vpop.f32.mrf.mxu0
  %v1499 = vadd.f32 0.0, %v1498
  %v1500 = vpop.f32.mrf.mxu0
  %v1501 = vpop.f32.mrf.mxu0
  %v1502 = vpop.f32.mrf.mxu0
  %1503 = vdwg.mxu0
  %v1504 = vadd.f32 %v1408, %v1499
  %v1505 = vxor.u32 %v1456, 2147483648
  %v1506 = vmul.f32 %v1505, 1.442695
  %v1507 = vpow.pop %v1506
  %v1508 = vadd.f32 %v1507, 1.0
  %v1509 = vrcp.pop %v1508
  %v1510 = vmul.f32 1.0, %v1509
  %v1511 = vtanh.pop %v1456
  %v1512 = vmul.f32 %v1510, %v1289
  %1514 = vrot.lane.b32.xlu0 %v1511, 64
  %v1515 = vpop.permute.xlu0 %1514
  %v1517 = vmul.f32 %v1510, %v1515
  %1519 = vrot.lane.b32.xlu0 %v1517, 32
  %v1520 = vpop.permute.xlu0 %1519
  %v1522 = vadd.f32 %v1512, %v1520
  %v1523 = vtanh.pop %v1522
  %1525 = vrot.lane.b32.xlu0 %v1523, 64
  %v1526 = vpop.permute.xlu0 %1525
  %v1528 = vmul.f32 %v1510, %v1526
  %v1529 = vxor.u32 %v1504, 2147483648
  %v1530 = vmul.f32 %v1529, 1.442695
  %v1531 = vpow.pop %v1530
  %v1532 = vadd.f32 %v1531, 1.0
  %v1533 = vrcp.pop %v1532
  %v1534 = vmul.f32 1.0, %v1533
  %v1535 = vtanh.pop %v1504
  %v1536 = vmul.f32 %v1534, %v1313
  %1538 = vrot.lane.b32.xlu0 %v1535, 64
  %v1539 = vpop.permute.xlu0 %1538
  %v1541 = vmul.f32 %v1534, %v1539
  %1543 = vrot.lane.b32.xlu0 %v1541, 32
  %v1544 = vpop.permute.xlu0 %1543
  %v1546 = vadd.f32 %v1536, %v1544
  %v1547 = vtanh.pop %v1546
  %1549 = vrot.lane.b32.xlu0 %v1547, 64
  %v1550 = vpop.permute.xlu0 %1549
  %v1552 = vmul.f32 %v1534, %v1550
  %1554 = vrot.lane.b32.xlu0 %v1528, 32
  %v1555 = vpop.permute.xlu0 %1554
  %1558 = vrot.lane.b32.xlu0 %v1552, 64
  %v1559 = vpop.permute.xlu0 %1558
  %v1561 = vsel %vm710, %v1555, %v1559
  %v1562 = vpack.c.bf16 %v1561, %v1561
  %s1563 = scalar_lea.vmem %s12, 96
  %v1564 = vld [vmem:[%s1563] sm:$0xf]
  %v1565 = vld [vmem:[%s1563 + $0x4] sm:$0xf]
  %v1566 = vld [vmem:[%s1563 + $0x8] sm:$0xf]
  %v1567 = vld [vmem:[%s1563 + $0xc] sm:$0xf]
  %v1568 = vld [vmem:[%s1563 + $0x10] sm:$0xf]
  %v1569 = vld [vmem:[%s1563 + $0x14] sm:$0xf]
  %v1570 = vld [vmem:[%s1563 + $0x18] sm:$0xf]
  %v1571 = vld [vmem:[%s1563 + $0x1c] sm:$0xf]
  %v1580 = vunpack.c.l.b16 %v1564
  %v1581 = vunpack.c.l.b16 %v1565
  %v1582 = vunpack.c.l.b16 %v1566
  %v1583 = vunpack.c.l.b16 %v1567
  %v1584 = vunpack.c.l.b16 %v1568
  %v1585 = vunpack.c.l.b16 %v1569
  %v1586 = vunpack.c.l.b16 %v1570
  %v1587 = vunpack.c.l.b16 %v1571
  %v1588 = vpack.c.b16 %v1581, %v1580
  %v1589 = vpack.c.b16 %v1583, %v1582
  %v1590 = vpack.c.b16 %v1585, %v1584
  %v1591 = vpack.c.b16 %v1587, %v1586
  %v1597 = vsel %vm1063, %v1562, 0
  %1599 = vmatprep.subr.bf16.mxu0 0
  %1600 = vmatpush1.bf16.msra.mxu0 0
  %1601 = vmatprep.subr.bf16.mxu0 0
  %1602 = vmatpush1.bf16.msra.mxu0 0
  %1603 = vmatprep.subr.bf16.mxu0 0
  %1604 = vmatpush1.bf16.msra.mxu0 0
  %1605 = vmatprep.subr.bf16.mxu0 0
  %1606 = vmatpush1.bf16.msra.mxu0 0
  %1607 = vmatprep.subr.bf16.mxu0 0
  %1608 = vmatpush1.bf16.msra.mxu0 %v1591
  %1609 = vmatprep.subr.bf16.mxu0 0
  %1610 = vmatpush1.bf16.msra.mxu0 %v1590
  %1611 = vmatprep.subr.bf16.mxu0 0
  %1612 = vmatpush1.bf16.msra.mxu0 %v1589
  %1613 = vmatprep.subr.bf16.mxu0 0
  %1614 = vmatpush1.bf16.msra.mxu0 %v1588
  %1615 = vmatprep.subr.bf16.mxu0 0
  %1616 = vmatpush2.bf16.msra.mxu0 0
  %1617 = vmatprep.subr.bf16.mxu0 0
  %1618 = vmatpush2.bf16.msra.mxu0 0
  %1619 = vmatprep.subr.bf16.mxu0 0
  %1620 = vmatpush2.bf16.msra.mxu0 0
  %1621 = vmatprep.subr.bf16.mxu0 0
  %1622 = vmatpush2.bf16.msra.mxu0 0
  %1623 = vmatprep.subr.bf16.mxu0 0
  %1624 = vmatpush2.bf16.msra.mxu0 0
  %1625 = vmatprep.subr.bf16.mxu0 0
  %1626 = vmatpush2.bf16.msra.mxu0 0
  %1627 = vmatprep.subr.bf16.mxu0 0
  %1628 = vmatpush2.bf16.msra.mxu0 0
  %1629 = vmatprep.subr.bf16.mxu0 0
  %1630 = vmatpush2.bf16.msra.mxu0 0
  %1631 = vmatprep.mubr.bf16.mxu0 0
  %1632 = vmatmul.mubr.bf16.gmra.mxu0 %v1597
  %v1633 = vpop.f32.mrf.mxu0
  %v1634 = vadd.f32 0.0, %v1633
  %v1635 = vpop.f32.mrf.mxu0
  %v1636 = vpop.f32.mrf.mxu0
  %v1637 = vpop.f32.mrf.mxu0
  %1638 = vdwg.mxu0
  %v1639 = vadd.f32 %v1406, %v1634
  %v1640 = vld [vmem:[%s13] sm:$0x1]
  %v1642 = vlaneseq
  %v1643 = vshrl.u32 %v1642, 7
  %v1644 = vsub.s32 0, %v1643
  %v1645 = vrot.slane %v1640, %v1644
  %v1647 = vadd.f32 %v1639, %v1645
  %1648 = vst [vmem:[%s14] sm:$0xff] %v1647
  // Predicated region
  $region58: #{crosscode2vec_lack_atten.3} parent=0 // pred_check
    _
  $region59: #{crosscode2vec_lack_atten.3} parent=0 // pred_check_branch
    %1650 = sbr.rel (0) target = $region61
  $region60: #{crosscode2vec_lack_atten.3} parent=0 // pred_region
    _
  $region61: #{crosscode2vec_lack_atten.3} parent=0 // pred_fallthru
    _
  // Predicated region
  $region62: #{crosscode2vec_lack_atten.3} parent=0 // pred_check
    _
  $region63: #{crosscode2vec_lack_atten.3} parent=0 // pred_check_branch
    %1652 = sbr.rel (0) target = $region65
  $region64: #{crosscode2vec_lack_atten.3} parent=0 // pred_region
    _
  $region65: #{crosscode2vec_lack_atten.3} parent=0 // pred_fallthru
    _

// kernel: crosscode2vec_lack_atten.2
$region0: #{crosscode2vec_lack_atten.2}
  #allocation0 [shape = 'u32[]', space=smem, size = 0x4, offset = 0x4, fixed_abs, tag = 'smem constant byte address 0x4 - core index']
  #allocation1 [shape = 'u32[144,128]{1,0:T(1,128)}', space=vmem, size = 0x12000, scoped, tag = 'internal scratch']
  #allocation2 [shape = 'f32[256,128]{1,0:T(8,128)}', space=vmem, size = 0x20000, scoped, tag = 'scratch operand']
  #allocation3 [shape = 'f32[256,128]{1,0:T(8,128)}', space=vmem, size = 0x20000, scoped, tag = 'scratch operand']
  %s0 = inlined_call_operand.vmem [shape: bf16[32,8,16], index: 0, kind: input, shape index: {}]
  %s1 = inlined_call_operand.vmem [shape: bf16[16,128], index: 1, kind: input, shape index: {}]
  %s2 = inlined_call_operand.vmem [shape: bf16[16,128], index: 2, kind: input, shape index: {}]
  %s3 = inlined_call_operand.vmem [shape: f32[1,128], index: 3, kind: input, shape index: {}]
  %s4 = inlined_call_operand.vmem [shape: f32[1,128], index: 4, kind: input, shape index: {}]
  %s5 = inlined_call_operand.vmem [shape: bf16[32,128], index: 5, kind: input, shape index: {}]
  %s6 = inlined_call_operand.vmem [shape: bf16[32,128], index: 6, kind: input, shape index: {}]
  %s7 = inlined_call_operand.vmem [shape: bf16[32,64,128], index: 7, kind: input, shape index: {}]
  %s8 = inlined_call_operand.vmem [shape: f32[1,128], index: 8, kind: input, shape index: {}]
  %s9 = inlined_call_operand.vmem [shape: bf16[8,128], index: 9, kind: output, shape index: {}]
  %s10 = sld [smem:[#allocation0]]
  $region53: #{crosscode2vec_lack_atten.2} parent=0
    _
  %s12 = ssub.s32 1, %s10
  %s13 = scalar_select 0, %s12, %s10
  // Predicated region
  $region2: #{crosscode2vec_lack_atten.2} parent=0 // pred_check
    _
  $region3: #{crosscode2vec_lack_atten.2} parent=0 // pred_check_branch
    %15 = sbr.rel (0) target = $region5
  $region4: #{crosscode2vec_lack_atten.2} parent=0 // pred_region
    _
  $region5: #{crosscode2vec_lack_atten.2} parent=0 // pred_fallthru
    _
  // Predicated region
  $region6: #{crosscode2vec_lack_atten.2} parent=0 // pred_check
    _
  $region7: #{crosscode2vec_lack_atten.2} parent=0 // pred_check_branch
    %17 = sbr.rel (0) target = $region9
  $region8: #{crosscode2vec_lack_atten.2} parent=0 // pred_region
    _
  $region9: #{crosscode2vec_lack_atten.2} parent=0 // pred_fallthru
    _
  // Predicated region
  $region10: #{crosscode2vec_lack_atten.2} parent=0 // pred_check
    _
  $region11: #{crosscode2vec_lack_atten.2} parent=0 // pred_check_branch
    %19 = sbr.rel (0) target = $region13
  $region12: #{crosscode2vec_lack_atten.2} parent=0 // pred_region
    _
  $region13: #{crosscode2vec_lack_atten.2} parent=0 // pred_fallthru
    _
  // Predicated region
  $region14: #{crosscode2vec_lack_atten.2} parent=0 // pred_check
    _
  $region15: #{crosscode2vec_lack_atten.2} parent=0 // pred_check_branch
    %21 = sbr.rel (0) target = $region17
  $region16: #{crosscode2vec_lack_atten.2} parent=0 // pred_region
    _
  $region17: #{crosscode2vec_lack_atten.2} parent=0 // pred_fallthru
    _
  // Predicated region
  $region18: #{crosscode2vec_lack_atten.2} parent=0 // pred_check
    _
  $region19: #{crosscode2vec_lack_atten.2} parent=0 // pred_check_branch
    %23 = sbr.rel (0) target = $region21
  $region20: #{crosscode2vec_lack_atten.2} parent=0 // pred_region
    _
  $region21: #{crosscode2vec_lack_atten.2} parent=0 // pred_fallthru
    _
  // Predicated region
  $region22: #{crosscode2vec_lack_atten.2} parent=0 // pred_check
    _
  $region23: #{crosscode2vec_lack_atten.2} parent=0 // pred_check_branch
    %25 = sbr.rel (0) target = $region25
  $region24: #{crosscode2vec_lack_atten.2} parent=0 // pred_region
    _
  $region25: #{crosscode2vec_lack_atten.2} parent=0 // pred_fallthru
    _
  // Predicated region
  $region26: #{crosscode2vec_lack_atten.2} parent=0 // pred_check
    _
  $region27: #{crosscode2vec_lack_atten.2} parent=0 // pred_check_branch
    %27 = sbr.rel (0) target = $region29
  $region28: #{crosscode2vec_lack_atten.2} parent=0 // pred_region
    _
  $region29: #{crosscode2vec_lack_atten.2} parent=0 // pred_fallthru
    _
  // Predicated region
  $region30: #{crosscode2vec_lack_atten.2} parent=0 // pred_check
    _
  $region31: #{crosscode2vec_lack_atten.2} parent=0 // pred_check_branch
    %29 = sbr.rel (0) target = $region33
  $region32: #{crosscode2vec_lack_atten.2} parent=0 // pred_region
    _
  $region33: #{crosscode2vec_lack_atten.2} parent=0 // pred_fallthru
    _
  // Predicated region
  $region34: #{crosscode2vec_lack_atten.2} parent=0 // pred_check
    _
  $region35: #{crosscode2vec_lack_atten.2} parent=0 // pred_check_branch
    %31 = sbr.rel (0) target = $region37
  $region36: #{crosscode2vec_lack_atten.2} parent=0 // pred_region
    _
  $region37: #{crosscode2vec_lack_atten.2} parent=0 // pred_fallthru
    _
  %v33 = vld [vmem:[%s0] sm:$0xf]
  %v34 = vld [vmem:[%s0 + $0x4] sm:$0xf]
  %v35 = vld [vmem:[%s0 + $0x8] sm:$0xf]
  %v36 = vld [vmem:[%s0 + $0xc] sm:$0xf]
  %v37 = vld [vmem:[%s0 + $0x10] sm:$0xf]
  %v38 = vld [vmem:[%s0 + $0x14] sm:$0xf]
  %v39 = vld [vmem:[%s0 + $0x18] sm:$0xf]
  %v40 = vld [vmem:[%s0 + $0x1c] sm:$0xf]
  %v41 = vld [vmem:[%s0 + $0x20] sm:$0xf]
  %v42 = vld [vmem:[%s0 + $0x24] sm:$0xf]
  %v43 = vld [vmem:[%s0 + $0x28] sm:$0xf]
  %v44 = vld [vmem:[%s0 + $0x2c] sm:$0xf]
  %v45 = vld [vmem:[%s0 + $0x30] sm:$0xf]
  %v46 = vld [vmem:[%s0 + $0x34] sm:$0xf]
  %v47 = vld [vmem:[%s0 + $0x38] sm:$0xf]
  %v48 = vld [vmem:[%s0 + $0x3c] sm:$0xf]
  %v49 = vld [vmem:[%s0 + $0x40] sm:$0xf]
  %v50 = vld [vmem:[%s0 + $0x44] sm:$0xf]
  %v51 = vld [vmem:[%s0 + $0x48] sm:$0xf]
  %v52 = vld [vmem:[%s0 + $0x4c] sm:$0xf]
  %v53 = vld [vmem:[%s0 + $0x50] sm:$0xf]
  %v54 = vld [vmem:[%s0 + $0x54] sm:$0xf]
  %v55 = vld [vmem:[%s0 + $0x58] sm:$0xf]
  %v56 = vld [vmem:[%s0 + $0x5c] sm:$0xf]
  %v57 = vld [vmem:[%s0 + $0x60] sm:$0xf]
  %v58 = vld [vmem:[%s0 + $0x64] sm:$0xf]
  %v59 = vld [vmem:[%s0 + $0x68] sm:$0xf]
  %v60 = vld [vmem:[%s0 + $0x6c] sm:$0xf]
  %v61 = vld [vmem:[%s0 + $0x70] sm:$0xf]
  %v62 = vld [vmem:[%s0 + $0x74] sm:$0xf]
  %v63 = vld [vmem:[%s0 + $0x78] sm:$0xf]
  %v64 = vld [vmem:[%s0 + $0x7c] sm:$0xf]
  %v65 = vld [vmem:[%s1] sm:$0xf]
  %v66 = vld [vmem:[%s1 + $0x4] sm:$0xf]
  %v67 = vld [vmem:[%s3] sm:$0x1]
  %v69 = vlaneseq
  %v70 = vshrl.u32 %v69, 7
  %v71 = vsub.s32 0, %v70
  %v72 = vrot.slane %v67, %v71
  %v106 = vunpack.c.l.b16 %v33
  %v107 = vunpack.c.l.b16 %v34
  %v108 = vunpack.c.l.b16 %v35
  %v109 = vunpack.c.l.b16 %v36
  %v110 = vunpack.c.l.b16 %v37
  %v111 = vunpack.c.l.b16 %v38
  %v112 = vunpack.c.l.b16 %v39
  %v113 = vunpack.c.l.b16 %v40
  %v114 = vunpack.c.l.b16 %v41
  %v115 = vunpack.c.l.b16 %v42
  %v116 = vunpack.c.l.b16 %v43
  %v117 = vunpack.c.l.b16 %v44
  %v118 = vunpack.c.l.b16 %v45
  %v119 = vunpack.c.l.b16 %v46
  %v120 = vunpack.c.l.b16 %v47
  %v121 = vunpack.c.l.b16 %v48
  %v122 = vunpack.c.l.b16 %v49
  %v123 = vunpack.c.l.b16 %v50
  %v124 = vunpack.c.l.b16 %v51
  %v125 = vunpack.c.l.b16 %v52
  %v126 = vunpack.c.l.b16 %v53
  %v127 = vunpack.c.l.b16 %v54
  %v128 = vunpack.c.l.b16 %v55
  %v129 = vunpack.c.l.b16 %v56
  %v130 = vunpack.c.l.b16 %v57
  %v131 = vunpack.c.l.b16 %v58
  %v132 = vunpack.c.l.b16 %v59
  %v133 = vunpack.c.l.b16 %v60
  %v134 = vunpack.c.l.b16 %v61
  %v135 = vunpack.c.l.b16 %v62
  %v136 = vunpack.c.l.b16 %v63
  %v137 = vunpack.c.l.b16 %v64
  %v138 = vpack.c.b16 %v107, %v106
  %v139 = vpack.c.b16 %v109, %v108
  %v140 = vpack.c.b16 %v111, %v110
  %v141 = vpack.c.b16 %v113, %v112
  %v142 = vpack.c.b16 %v115, %v114
  %v143 = vpack.c.b16 %v117, %v116
  %v144 = vpack.c.b16 %v119, %v118
  %v145 = vpack.c.b16 %v121, %v120
  %v146 = vpack.c.b16 %v123, %v122
  %v147 = vpack.c.b16 %v125, %v124
  %v148 = vpack.c.b16 %v127, %v126
  %v149 = vpack.c.b16 %v129, %v128
  %v150 = vpack.c.b16 %v131, %v130
  %v151 = vpack.c.b16 %v133, %v132
  %v152 = vpack.c.b16 %v135, %v134
  %v153 = vpack.c.b16 %v137, %v136
  %v156 = vunpack.c.l.b16 %v65
  %v157 = vunpack.c.l.b16 %v66
  %v158 = vpack.c.b16 %v157, %v156
  %vm160 = vcmask 130048
  %v162 = vsel %vm160, %v138, 0
  %v165 = vsel %vm160, %v139, 0
  %v168 = vsel %vm160, %v140, 0
  %v171 = vsel %vm160, %v141, 0
  %v174 = vsel %vm160, %v142, 0
  %v177 = vsel %vm160, %v143, 0
  %v180 = vsel %vm160, %v144, 0
  %v183 = vsel %vm160, %v145, 0
  %v186 = vsel %vm160, %v146, 0
  %v189 = vsel %vm160, %v147, 0
  %v192 = vsel %vm160, %v148, 0
  %v195 = vsel %vm160, %v149, 0
  %v198 = vsel %vm160, %v150, 0
  %v201 = vsel %vm160, %v151, 0
  %v204 = vsel %vm160, %v152, 0
  %v207 = vsel %vm160, %v153, 0
  %209 = vmatprep.subr.bf16.mxu0 0
  %210 = vmatpush1.bf16.msra.mxu0 0
  %211 = vmatprep.subr.bf16.mxu0 0
  %212 = vmatpush1.bf16.msra.mxu0 0
  %213 = vmatprep.subr.bf16.mxu0 0
  %214 = vmatpush1.bf16.msra.mxu0 0
  %215 = vmatprep.subr.bf16.mxu0 0
  %216 = vmatpush1.bf16.msra.mxu0 0
  %217 = vmatprep.subr.bf16.mxu0 0
  %218 = vmatpush1.bf16.msra.mxu0 0
  %219 = vmatprep.subr.bf16.mxu0 0
  %220 = vmatpush1.bf16.msra.mxu0 0
  %221 = vmatprep.subr.bf16.mxu0 0
  %222 = vmatpush1.bf16.msra.mxu0 0
  %223 = vmatprep.subr.bf16.mxu0 0
  %224 = vmatpush1.bf16.msra.mxu0 %v158
  %225 = vmatprep.subr.bf16.mxu0 0
  %226 = vmatpush2.bf16.msra.mxu0 0
  %227 = vmatprep.subr.bf16.mxu0 0
  %228 = vmatpush2.bf16.msra.mxu0 0
  %229 = vmatprep.subr.bf16.mxu0 0
  %230 = vmatpush2.bf16.msra.mxu0 0
  %231 = vmatprep.subr.bf16.mxu0 0
  %232 = vmatpush2.bf16.msra.mxu0 0
  %233 = vmatprep.subr.bf16.mxu0 0
  %234 = vmatpush2.bf16.msra.mxu0 0
  %235 = vmatprep.subr.bf16.mxu0 0
  %236 = vmatpush2.bf16.msra.mxu0 0
  %237 = vmatprep.subr.bf16.mxu0 0
  %238 = vmatpush2.bf16.msra.mxu0 0
  %239 = vmatprep.subr.bf16.mxu0 0
  %240 = vmatpush2.bf16.msra.mxu0 0
  %241 = vmatprep.mubr.bf16.mxu0 0
  %242 = vmatmul.mubr.bf16.gmra.mxu0 %v162
  %v243 = vpop.f32.mrf.mxu0
  %v244 = vadd.f32 %v72, %v243
  %v245 = vpop.f32.mrf.mxu0
  %v246 = vpop.f32.mrf.mxu0
  %v247 = vadd.f32 %v72, %v246
  %v248 = vpop.f32.mrf.mxu0
  %249 = vmatprep.mubr.bf16.mxu0 0
  %250 = vmatmul.mubr.bf16.gmra.mxu0 %v165
  %v251 = vpop.f32.mrf.mxu0
  %v252 = vadd.f32 %v72, %v251
  %v253 = vpop.f32.mrf.mxu0
  %v254 = vpop.f32.mrf.mxu0
  %v255 = vadd.f32 %v72, %v254
  %v256 = vpop.f32.mrf.mxu0
  %257 = vmatprep.mubr.bf16.mxu0 0
  %258 = vmatmul.mubr.bf16.gmra.mxu0 %v168
  %v259 = vpop.f32.mrf.mxu0
  %v260 = vadd.f32 %v72, %v259
  %v261 = vpop.f32.mrf.mxu0
  %v262 = vpop.f32.mrf.mxu0
  %v263 = vadd.f32 %v72, %v262
  %v264 = vpop.f32.mrf.mxu0
  %265 = vmatprep.mubr.bf16.mxu0 0
  %266 = vmatmul.mubr.bf16.gmra.mxu0 %v171
  %v267 = vpop.f32.mrf.mxu0
  %v268 = vadd.f32 %v72, %v267
  %v269 = vpop.f32.mrf.mxu0
  %v270 = vpop.f32.mrf.mxu0
  %v271 = vadd.f32 %v72, %v270
  %v272 = vpop.f32.mrf.mxu0
  %273 = vmatprep.mubr.bf16.mxu0 0
  %274 = vmatmul.mubr.bf16.gmra.mxu0 %v174
  %v275 = vpop.f32.mrf.mxu0
  %v276 = vadd.f32 %v72, %v275
  %v277 = vpop.f32.mrf.mxu0
  %v278 = vpop.f32.mrf.mxu0
  %v279 = vadd.f32 %v72, %v278
  %v280 = vpop.f32.mrf.mxu0
  %281 = vmatprep.mubr.bf16.mxu0 0
  %282 = vmatmul.mubr.bf16.gmra.mxu0 %v177
  %v283 = vpop.f32.mrf.mxu0
  %v284 = vadd.f32 %v72, %v283
  %v285 = vpop.f32.mrf.mxu0
  %v286 = vpop.f32.mrf.mxu0
  %v287 = vadd.f32 %v72, %v286
  %v288 = vpop.f32.mrf.mxu0
  %289 = vmatprep.mubr.bf16.mxu0 0
  %290 = vmatmul.mubr.bf16.gmra.mxu0 %v180
  %v291 = vpop.f32.mrf.mxu0
  %v292 = vadd.f32 %v72, %v291
  %v293 = vpop.f32.mrf.mxu0
  %v294 = vpop.f32.mrf.mxu0
  %v295 = vadd.f32 %v72, %v294
  %v296 = vpop.f32.mrf.mxu0
  %297 = vmatprep.mubr.bf16.mxu0 0
  %298 = vmatmul.mubr.bf16.gmra.mxu0 %v183
  %v299 = vpop.f32.mrf.mxu0
  %v300 = vadd.f32 %v72, %v299
  %v301 = vpop.f32.mrf.mxu0
  %v302 = vpop.f32.mrf.mxu0
  %v303 = vadd.f32 %v72, %v302
  %v304 = vpop.f32.mrf.mxu0
  %305 = vmatprep.mubr.bf16.mxu0 0
  %306 = vmatmul.mubr.bf16.gmra.mxu0 %v186
  %v307 = vpop.f32.mrf.mxu0
  %v308 = vadd.f32 %v72, %v307
  %v309 = vpop.f32.mrf.mxu0
  %v310 = vpop.f32.mrf.mxu0
  %v311 = vadd.f32 %v72, %v310
  %v312 = vpop.f32.mrf.mxu0
  %313 = vmatprep.mubr.bf16.mxu0 0
  %314 = vmatmul.mubr.bf16.gmra.mxu0 %v189
  %v315 = vpop.f32.mrf.mxu0
  %v316 = vadd.f32 %v72, %v315
  %v317 = vpop.f32.mrf.mxu0
  %v318 = vpop.f32.mrf.mxu0
  %v319 = vadd.f32 %v72, %v318
  %v320 = vpop.f32.mrf.mxu0
  %321 = vmatprep.mubr.bf16.mxu0 0
  %322 = vmatmul.mubr.bf16.gmra.mxu0 %v192
  %v323 = vpop.f32.mrf.mxu0
  %v324 = vadd.f32 %v72, %v323
  %v325 = vpop.f32.mrf.mxu0
  %v326 = vpop.f32.mrf.mxu0
  %v327 = vadd.f32 %v72, %v326
  %v328 = vpop.f32.mrf.mxu0
  %329 = vmatprep.mubr.bf16.mxu0 0
  %330 = vmatmul.mubr.bf16.gmra.mxu0 %v195
  %v331 = vpop.f32.mrf.mxu0
  %v332 = vadd.f32 %v72, %v331
  %v333 = vpop.f32.mrf.mxu0
  %v334 = vpop.f32.mrf.mxu0
  %v335 = vadd.f32 %v72, %v334
  %v336 = vpop.f32.mrf.mxu0
  %337 = vmatprep.mubr.bf16.mxu0 0
  %338 = vmatmul.mubr.bf16.gmra.mxu0 %v198
  %v339 = vpop.f32.mrf.mxu0
  %v340 = vadd.f32 %v72, %v339
  %v341 = vpop.f32.mrf.mxu0
  %v342 = vpop.f32.mrf.mxu0
  %v343 = vadd.f32 %v72, %v342
  %v344 = vpop.f32.mrf.mxu0
  %345 = vmatprep.mubr.bf16.mxu0 0
  %346 = vmatmul.mubr.bf16.gmra.mxu0 %v201
  %v347 = vpop.f32.mrf.mxu0
  %v348 = vadd.f32 %v72, %v347
  %v349 = vpop.f32.mrf.mxu0
  %v350 = vpop.f32.mrf.mxu0
  %v351 = vadd.f32 %v72, %v350
  %v352 = vpop.f32.mrf.mxu0
  %353 = vmatprep.mubr.bf16.mxu0 0
  %354 = vmatmul.mubr.bf16.gmra.mxu0 %v204
  %v355 = vpop.f32.mrf.mxu0
  %v356 = vadd.f32 %v72, %v355
  %v357 = vpop.f32.mrf.mxu0
  %v358 = vpop.f32.mrf.mxu0
  %v359 = vadd.f32 %v72, %v358
  %v360 = vpop.f32.mrf.mxu0
  %361 = vmatprep.mubr.bf16.mxu0 0
  %362 = vmatmul.mubr.bf16.gmra.mxu0 %v207
  %v363 = vpop.f32.mrf.mxu0
  %v364 = vadd.f32 %v72, %v363
  %v365 = vpop.f32.mrf.mxu0
  %v366 = vpop.f32.mrf.mxu0
  %v367 = vadd.f32 %v72, %v366
  %v368 = vpop.f32.mrf.mxu0
  %369 = vdwg.mxu0
  %370 = vst [vmem:[#allocation2] sm:$0xff] %v244
  %371 = vst [vmem:[#allocation2 + $0x8] sm:$0xff] %v247
  %372 = vst [vmem:[#allocation2 + $0x10] sm:$0xff] %v252
  %373 = vst [vmem:[#allocation2 + $0x18] sm:$0xff] %v255
  %374 = vst [vmem:[#allocation2 + $0x20] sm:$0xff] %v260
  %375 = vst [vmem:[#allocation2 + $0x28] sm:$0xff] %v263
  %376 = vst [vmem:[#allocation2 + $0x30] sm:$0xff] %v268
  %377 = vst [vmem:[#allocation2 + $0x38] sm:$0xff] %v271
  %378 = vst [vmem:[#allocation2 + $0x40] sm:$0xff] %v276
  %379 = vst [vmem:[#allocation2 + $0x48] sm:$0xff] %v279
  %380 = vst [vmem:[#allocation2 + $0x50] sm:$0xff] %v284
  %381 = vst [vmem:[#allocation2 + $0x58] sm:$0xff] %v287
  %382 = vst [vmem:[#allocation2 + $0x60] sm:$0xff] %v292
  %383 = vst [vmem:[#allocation2 + $0x68] sm:$0xff] %v295
  %384 = vst [vmem:[#allocation2 + $0x70] sm:$0xff] %v300
  %385 = vst [vmem:[#allocation2 + $0x78] sm:$0xff] %v303
  %386 = vst [vmem:[#allocation2 + $0x80] sm:$0xff] %v308
  %387 = vst [vmem:[#allocation2 + $0x88] sm:$0xff] %v311
  %388 = vst [vmem:[#allocation2 + $0x90] sm:$0xff] %v316
  %389 = vst [vmem:[#allocation2 + $0x98] sm:$0xff] %v319
  %390 = vst [vmem:[#allocation2 + $0xa0] sm:$0xff] %v324
  %391 = vst [vmem:[#allocation2 + $0xa8] sm:$0xff] %v327
  %392 = vst [vmem:[#allocation2 + $0xb0] sm:$0xff] %v332
  %393 = vst [vmem:[#allocation2 + $0xb8] sm:$0xff] %v335
  %394 = vst [vmem:[#allocation2 + $0xc0] sm:$0xff] %v340
  %395 = vst [vmem:[#allocation2 + $0xc8] sm:$0xff] %v343
  %396 = vst [vmem:[#allocation2 + $0xd0] sm:$0xff] %v348
  %397 = vst [vmem:[#allocation2 + $0xd8] sm:$0xff] %v351
  %398 = vst [vmem:[#allocation2 + $0xe0] sm:$0xff] %v356
  %399 = vst [vmem:[#allocation2 + $0xe8] sm:$0xff] %v359
  %400 = vst [vmem:[#allocation2 + $0xf0] sm:$0xff] %v364
  %401 = vst [vmem:[#allocation2 + $0xf8] sm:$0xff] %v367
  %v402 = vld [vmem:[%s2] sm:$0xf]
  %v403 = vld [vmem:[%s2 + $0x4] sm:$0xf]
  %v404 = vld [vmem:[%s4] sm:$0x1]
  %v406 = vlaneseq
  %v407 = vshrl.u32 %v406, 7
  %v408 = vsub.s32 0, %v407
  %v409 = vrot.slane %v404, %v408
  %v413 = vunpack.c.l.b16 %v402
  %v414 = vunpack.c.l.b16 %v403
  %v415 = vpack.c.b16 %v414, %v413
  %417 = vmatprep.subr.bf16.mxu0 0
  %418 = vmatpush1.bf16.msra.mxu0 0
  %419 = vmatprep.subr.bf16.mxu0 0
  %420 = vmatpush1.bf16.msra.mxu0 0
  %421 = vmatprep.subr.bf16.mxu0 0
  %422 = vmatpush1.bf16.msra.mxu0 0
  %423 = vmatprep.subr.bf16.mxu0 0
  %424 = vmatpush1.bf16.msra.mxu0 0
  %425 = vmatprep.subr.bf16.mxu0 0
  %426 = vmatpush1.bf16.msra.mxu0 0
  %427 = vmatprep.subr.bf16.mxu0 0
  %428 = vmatpush1.bf16.msra.mxu0 0
  %429 = vmatprep.subr.bf16.mxu0 0
  %430 = vmatpush1.bf16.msra.mxu0 0
  %431 = vmatprep.subr.bf16.mxu0 0
  %432 = vmatpush1.bf16.msra.mxu0 %v415
  %433 = vmatprep.subr.bf16.mxu0 0
  %434 = vmatpush2.bf16.msra.mxu0 0
  %435 = vmatprep.subr.bf16.mxu0 0
  %436 = vmatpush2.bf16.msra.mxu0 0
  %437 = vmatprep.subr.bf16.mxu0 0
  %438 = vmatpush2.bf16.msra.mxu0 0
  %439 = vmatprep.subr.bf16.mxu0 0
  %440 = vmatpush2.bf16.msra.mxu0 0
  %441 = vmatprep.subr.bf16.mxu0 0
  %442 = vmatpush2.bf16.msra.mxu0 0
  %443 = vmatprep.subr.bf16.mxu0 0
  %444 = vmatpush2.bf16.msra.mxu0 0
  %445 = vmatprep.subr.bf16.mxu0 0
  %446 = vmatpush2.bf16.msra.mxu0 0
  %447 = vmatprep.subr.bf16.mxu0 0
  %448 = vmatpush2.bf16.msra.mxu0 0
  %449 = vmatprep.mubr.bf16.mxu0 0
  %450 = vmatmul.mubr.bf16.gmra.mxu0 %v162
  %v451 = vpop.f32.mrf.mxu0
  %v452 = vadd.f32 %v409, %v451
  %v453 = vpop.f32.mrf.mxu0
  %v454 = vpop.f32.mrf.mxu0
  %v455 = vadd.f32 %v409, %v454
  %v456 = vpop.f32.mrf.mxu0
  %457 = vmatprep.mubr.bf16.mxu0 0
  %458 = vmatmul.mubr.bf16.gmra.mxu0 %v165
  %v459 = vpop.f32.mrf.mxu0
  %v460 = vadd.f32 %v409, %v459
  %v461 = vpop.f32.mrf.mxu0
  %v462 = vpop.f32.mrf.mxu0
  %v463 = vadd.f32 %v409, %v462
  %v464 = vpop.f32.mrf.mxu0
  %465 = vmatprep.mubr.bf16.mxu0 0
  %466 = vmatmul.mubr.bf16.gmra.mxu0 %v168
  %v467 = vpop.f32.mrf.mxu0
  %v468 = vadd.f32 %v409, %v467
  %v469 = vpop.f32.mrf.mxu0
  %v470 = vpop.f32.mrf.mxu0
  %v471 = vadd.f32 %v409, %v470
  %v472 = vpop.f32.mrf.mxu0
  %473 = vmatprep.mubr.bf16.mxu0 0
  %474 = vmatmul.mubr.bf16.gmra.mxu0 %v171
  %v475 = vpop.f32.mrf.mxu0
  %v476 = vadd.f32 %v409, %v475
  %v477 = vpop.f32.mrf.mxu0
  %v478 = vpop.f32.mrf.mxu0
  %v479 = vadd.f32 %v409, %v478
  %v480 = vpop.f32.mrf.mxu0
  %481 = vmatprep.mubr.bf16.mxu0 0
  %482 = vmatmul.mubr.bf16.gmra.mxu0 %v174
  %v483 = vpop.f32.mrf.mxu0
  %v484 = vadd.f32 %v409, %v483
  %v485 = vpop.f32.mrf.mxu0
  %v486 = vpop.f32.mrf.mxu0
  %v487 = vadd.f32 %v409, %v486
  %v488 = vpop.f32.mrf.mxu0
  %489 = vmatprep.mubr.bf16.mxu0 0
  %490 = vmatmul.mubr.bf16.gmra.mxu0 %v177
  %v491 = vpop.f32.mrf.mxu0
  %v492 = vadd.f32 %v409, %v491
  %v493 = vpop.f32.mrf.mxu0
  %v494 = vpop.f32.mrf.mxu0
  %v495 = vadd.f32 %v409, %v494
  %v496 = vpop.f32.mrf.mxu0
  %497 = vmatprep.mubr.bf16.mxu0 0
  %498 = vmatmul.mubr.bf16.gmra.mxu0 %v180
  %v499 = vpop.f32.mrf.mxu0
  %v500 = vadd.f32 %v409, %v499
  %v501 = vpop.f32.mrf.mxu0
  %v502 = vpop.f32.mrf.mxu0
  %v503 = vadd.f32 %v409, %v502
  %v504 = vpop.f32.mrf.mxu0
  %505 = vmatprep.mubr.bf16.mxu0 0
  %506 = vmatmul.mubr.bf16.gmra.mxu0 %v183
  %v507 = vpop.f32.mrf.mxu0
  %v508 = vadd.f32 %v409, %v507
  %v509 = vpop.f32.mrf.mxu0
  %v510 = vpop.f32.mrf.mxu0
  %v511 = vadd.f32 %v409, %v510
  %v512 = vpop.f32.mrf.mxu0
  %513 = vmatprep.mubr.bf16.mxu0 0
  %514 = vmatmul.mubr.bf16.gmra.mxu0 %v186
  %v515 = vpop.f32.mrf.mxu0
  %v516 = vadd.f32 %v409, %v515
  %v517 = vpop.f32.mrf.mxu0
  %v518 = vpop.f32.mrf.mxu0
  %v519 = vadd.f32 %v409, %v518
  %v520 = vpop.f32.mrf.mxu0
  %521 = vmatprep.mubr.bf16.mxu0 0
  %522 = vmatmul.mubr.bf16.gmra.mxu0 %v189
  %v523 = vpop.f32.mrf.mxu0
  %v524 = vadd.f32 %v409, %v523
  %v525 = vpop.f32.mrf.mxu0
  %v526 = vpop.f32.mrf.mxu0
  %v527 = vadd.f32 %v409, %v526
  %v528 = vpop.f32.mrf.mxu0
  %529 = vmatprep.mubr.bf16.mxu0 0
  %530 = vmatmul.mubr.bf16.gmra.mxu0 %v192
  %v531 = vpop.f32.mrf.mxu0
  %v532 = vadd.f32 %v409, %v531
  %v533 = vpop.f32.mrf.mxu0
  %v534 = vpop.f32.mrf.mxu0
  %v535 = vadd.f32 %v409, %v534
  %v536 = vpop.f32.mrf.mxu0
  %537 = vmatprep.mubr.bf16.mxu0 0
  %538 = vmatmul.mubr.bf16.gmra.mxu0 %v195
  %v539 = vpop.f32.mrf.mxu0
  %v540 = vadd.f32 %v409, %v539
  %v541 = vpop.f32.mrf.mxu0
  %v542 = vpop.f32.mrf.mxu0
  %v543 = vadd.f32 %v409, %v542
  %v544 = vpop.f32.mrf.mxu0
  %545 = vmatprep.mubr.bf16.mxu0 0
  %546 = vmatmul.mubr.bf16.gmra.mxu0 %v198
  %v547 = vpop.f32.mrf.mxu0
  %v548 = vadd.f32 %v409, %v547
  %v549 = vpop.f32.mrf.mxu0
  %v550 = vpop.f32.mrf.mxu0
  %v551 = vadd.f32 %v409, %v550
  %v552 = vpop.f32.mrf.mxu0
  %553 = vmatprep.mubr.bf16.mxu0 0
  %554 = vmatmul.mubr.bf16.gmra.mxu0 %v201
  %v555 = vpop.f32.mrf.mxu0
  %v556 = vadd.f32 %v409, %v555
  %v557 = vpop.f32.mrf.mxu0
  %v558 = vpop.f32.mrf.mxu0
  %v559 = vadd.f32 %v409, %v558
  %v560 = vpop.f32.mrf.mxu0
  %561 = vmatprep.mubr.bf16.mxu0 0
  %562 = vmatmul.mubr.bf16.gmra.mxu0 %v204
  %v563 = vpop.f32.mrf.mxu0
  %v564 = vadd.f32 %v409, %v563
  %v565 = vpop.f32.mrf.mxu0
  %v566 = vpop.f32.mrf.mxu0
  %v567 = vadd.f32 %v409, %v566
  %v568 = vpop.f32.mrf.mxu0
  %569 = vmatprep.mubr.bf16.mxu0 0
  %570 = vmatmul.mubr.bf16.gmra.mxu0 %v207
  %v571 = vpop.f32.mrf.mxu0
  %v572 = vadd.f32 %v409, %v571
  %v573 = vpop.f32.mrf.mxu0
  %v574 = vpop.f32.mrf.mxu0
  %v575 = vadd.f32 %v409, %v574
  %v576 = vpop.f32.mrf.mxu0
  %577 = vdwg.mxu0
  %578 = vst [vmem:[#allocation3] sm:$0xff] %v452
  %579 = vst [vmem:[#allocation3 + $0x8] sm:$0xff] %v455
  %580 = vst [vmem:[#allocation3 + $0x10] sm:$0xff] %v460
  %581 = vst [vmem:[#allocation3 + $0x18] sm:$0xff] %v463
  %582 = vst [vmem:[#allocation3 + $0x20] sm:$0xff] %v468
  %583 = vst [vmem:[#allocation3 + $0x28] sm:$0xff] %v471
  %584 = vst [vmem:[#allocation3 + $0x30] sm:$0xff] %v476
  %585 = vst [vmem:[#allocation3 + $0x38] sm:$0xff] %v479
  %586 = vst [vmem:[#allocation3 + $0x40] sm:$0xff] %v484
  %587 = vst [vmem:[#allocation3 + $0x48] sm:$0xff] %v487
  %588 = vst [vmem:[#allocation3 + $0x50] sm:$0xff] %v492
  %589 = vst [vmem:[#allocation3 + $0x58] sm:$0xff] %v495
  %590 = vst [vmem:[#allocation3 + $0x60] sm:$0xff] %v500
  %591 = vst [vmem:[#allocation3 + $0x68] sm:$0xff] %v503
  %592 = vst [vmem:[#allocation3 + $0x70] sm:$0xff] %v508
  %593 = vst [vmem:[#allocation3 + $0x78] sm:$0xff] %v511
  %594 = vst [vmem:[#allocation3 + $0x80] sm:$0xff] %v516
  %595 = vst [vmem:[#allocation3 + $0x88] sm:$0xff] %v519
  %596 = vst [vmem:[#allocation3 + $0x90] sm:$0xff] %v524
  %597 = vst [vmem:[#allocation3 + $0x98] sm:$0xff] %v527
  %598 = vst [vmem:[#allocation3 + $0xa0] sm:$0xff] %v532
  %599 = vst [vmem:[#allocation3 + $0xa8] sm:$0xff] %v535
  %600 = vst [vmem:[#allocation3 + $0xb0] sm:$0xff] %v540
  %601 = vst [vmem:[#allocation3 + $0xb8] sm:$0xff] %v543
  %602 = vst [vmem:[#allocation3 + $0xc0] sm:$0xff] %v548
  %603 = vst [vmem:[#allocation3 + $0xc8] sm:$0xff] %v551
  %604 = vst [vmem:[#allocation3 + $0xd0] sm:$0xff] %v556
  %605 = vst [vmem:[#allocation3 + $0xd8] sm:$0xff] %v559
  %606 = vst [vmem:[#allocation3 + $0xe0] sm:$0xff] %v564
  %607 = vst [vmem:[#allocation3 + $0xe8] sm:$0xff] %v567
  %608 = vst [vmem:[#allocation3 + $0xf0] sm:$0xff] %v572
  %609 = vst [vmem:[#allocation3 + $0xf8] sm:$0xff] %v575
  %v610 = vld [vmem:[%s5] sm:$0xf]
  %v611 = vld [vmem:[%s5 + $0x4] sm:$0xf]
  %v612 = vld [vmem:[%s5 + $0x8] sm:$0xf]
  %v613 = vld [vmem:[%s5 + $0xc] sm:$0xf]
  %v614 = vld [vmem:[%s6] sm:$0xf]
  %v615 = vld [vmem:[%s6 + $0x4] sm:$0xf]
  %v616 = vld [vmem:[%s6 + $0x8] sm:$0xf]
  %v617 = vld [vmem:[%s6 + $0xc] sm:$0xf]
  loop: start=0, step=1, limit=4
  $region38: #{crosscode2vec_lack_atten.2} parent=0 // loop_pre_header
    _
  $region39: #{crosscode2vec_lack_atten.2} parent=0 // loop_header
    %s619 = sphi 0, %s623
    %p620 = scmp.ge.s32.totalorder %s619, 4
    %v624 = vphi 0.0, %v2463
    %v625 = vphi 0.0, %v2457
    %v626 = vphi 0.0, %v2487
    %v627 = vphi 0.0, %v2481
    %v628 = vphi 0.0, %v2575
  $region40: #{crosscode2vec_lack_atten.2} parent=0 // loop_header_branch
    %622 = sbr.rel (%p620) target = $region44
  $region41: #{crosscode2vec_lack_atten.2} parent=0 // loop_body
    %s629 = smul.u32 %s619, 8
    %s630 = ssub.s32 31, %s629
    %s631 = smul.u32 %s619, 64
    %s632 = scalar_lea.vmem [#allocation2], %s631
    %v633 = vld [vmem:[%s632] sm:$0xff]
    %s634 = smul.u32 %s630, 8
    %s635 = scalar_lea.vmem [#allocation3], %s634
    %v636 = vld [vmem:[%s635] sm:$0xff]
    %v637 = vpack.c.bf16 %v624, %v624
    %639 = vrot.lane.b32.xlu0 %v637, 32
    %v640 = vpop.permute.xlu0 %639
    %v645 = vunpack.c.l.b16 %v610
    %v646 = vunpack.c.l.b16 %v611
    %v647 = vunpack.c.l.b16 %v612
    %v648 = vunpack.c.l.b16 %v613
    %v649 = vpack.c.b16 %v646, %v645
    %v650 = vpack.c.b16 %v648, %v647
    %vm653 = vcmask 261120
    %v655 = vsel %vm653, %v640, 0
    %657 = vmatprep.subr.bf16.mxu0 0
    %658 = vmatpush1.bf16.msra.mxu0 0
    %659 = vmatprep.subr.bf16.mxu0 0
    %660 = vmatpush1.bf16.msra.mxu0 0
    %661 = vmatprep.subr.bf16.mxu0 0
    %662 = vmatpush1.bf16.msra.mxu0 0
    %663 = vmatprep.subr.bf16.mxu0 0
    %664 = vmatpush1.bf16.msra.mxu0 0
    %665 = vmatprep.subr.bf16.mxu0 0
    %666 = vmatpush1.bf16.msra.mxu0 0
    %667 = vmatprep.subr.bf16.mxu0 0
    %668 = vmatpush1.bf16.msra.mxu0 0
    %669 = vmatprep.subr.bf16.mxu0 0
    %670 = vmatpush1.bf16.msra.mxu0 %v650
    %671 = vmatprep.subr.bf16.mxu0 0
    %672 = vmatpush1.bf16.msra.mxu0 %v649
    %673 = vmatprep.subr.bf16.mxu0 0
    %674 = vmatpush2.bf16.msra.mxu0 0
    %675 = vmatprep.subr.bf16.mxu0 0
    %676 = vmatpush2.bf16.msra.mxu0 0
    %677 = vmatprep.subr.bf16.mxu0 0
    %678 = vmatpush2.bf16.msra.mxu0 0
    %679 = vmatprep.subr.bf16.mxu0 0
    %680 = vmatpush2.bf16.msra.mxu0 0
    %681 = vmatprep.subr.bf16.mxu0 0
    %682 = vmatpush2.bf16.msra.mxu0 0
    %683 = vmatprep.subr.bf16.mxu0 0
    %684 = vmatpush2.bf16.msra.mxu0 0
    %685 = vmatprep.subr.bf16.mxu0 0
    %686 = vmatpush2.bf16.msra.mxu0 0
    %687 = vmatprep.subr.bf16.mxu0 0
    %688 = vmatpush2.bf16.msra.mxu0 0
    %689 = vmatprep.mubr.bf16.mxu0 0
    %690 = vmatmul.mubr.bf16.gmra.mxu0 %v655
    %v691 = vpop.f32.mrf.mxu0
    %v692 = vadd.f32 0.0, %v691
    %v693 = vpop.f32.mrf.mxu0
    %v694 = vpop.f32.mrf.mxu0
    %v695 = vpop.f32.mrf.mxu0
    %696 = vdwg.mxu0
    %v697 = vadd.f32 %v633, %v692
    %v698 = vpack.c.bf16 %v626, %v626
    %700 = vrot.lane.b32.xlu0 %v698, 32
    %v701 = vpop.permute.xlu0 %700
    %v706 = vunpack.c.l.b16 %v614
    %v707 = vunpack.c.l.b16 %v615
    %v708 = vunpack.c.l.b16 %v616
    %v709 = vunpack.c.l.b16 %v617
    %v710 = vpack.c.b16 %v707, %v706
    %v711 = vpack.c.b16 %v709, %v708
    %v715 = vsel %vm653, %v701, 0
    %717 = vmatprep.subr.bf16.mxu0 0
    %718 = vmatpush1.bf16.msra.mxu0 0
    %719 = vmatprep.subr.bf16.mxu0 0
    %720 = vmatpush1.bf16.msra.mxu0 0
    %721 = vmatprep.subr.bf16.mxu0 0
    %722 = vmatpush1.bf16.msra.mxu0 0
    %723 = vmatprep.subr.bf16.mxu0 0
    %724 = vmatpush1.bf16.msra.mxu0 0
    %725 = vmatprep.subr.bf16.mxu0 0
    %726 = vmatpush1.bf16.msra.mxu0 0
    %727 = vmatprep.subr.bf16.mxu0 0
    %728 = vmatpush1.bf16.msra.mxu0 0
    %729 = vmatprep.subr.bf16.mxu0 0
    %730 = vmatpush1.bf16.msra.mxu0 %v711
    %731 = vmatprep.subr.bf16.mxu0 0
    %732 = vmatpush1.bf16.msra.mxu0 %v710
    %733 = vmatprep.subr.bf16.mxu0 0
    %734 = vmatpush2.bf16.msra.mxu0 0
    %735 = vmatprep.subr.bf16.mxu0 0
    %736 = vmatpush2.bf16.msra.mxu0 0
    %737 = vmatprep.subr.bf16.mxu0 0
    %738 = vmatpush2.bf16.msra.mxu0 0
    %739 = vmatprep.subr.bf16.mxu0 0
    %740 = vmatpush2.bf16.msra.mxu0 0
    %741 = vmatprep.subr.bf16.mxu0 0
    %742 = vmatpush2.bf16.msra.mxu0 0
    %743 = vmatprep.subr.bf16.mxu0 0
    %744 = vmatpush2.bf16.msra.mxu0 0
    %745 = vmatprep.subr.bf16.mxu0 0
    %746 = vmatpush2.bf16.msra.mxu0 0
    %747 = vmatprep.subr.bf16.mxu0 0
    %748 = vmatpush2.bf16.msra.mxu0 0
    %749 = vmatprep.mubr.bf16.mxu0 0
    %750 = vmatmul.mubr.bf16.gmra.mxu0 %v715
    %v751 = vpop.f32.mrf.mxu0
    %v752 = vadd.f32 0.0, %v751
    %v753 = vpop.f32.mrf.mxu0
    %v754 = vpop.f32.mrf.mxu0
    %v755 = vpop.f32.mrf.mxu0
    %756 = vdwg.mxu0
    %v757 = vadd.f32 %v636, %v752
    %v758 = vxor.u32 %v697, 2147483648
    %v759 = vmul.f32 %v758, 1.442695
    %v760 = vpow.pop %v759
    %v761 = vadd.f32 %v760, 1.0
    %v762 = vrcp.pop %v761
    %v763 = vmul.f32 1.0, %v762
    %v764 = vtanh.pop %v697
    %v765 = vmul.f32 %v763, %v625
    %767 = vrot.lane.b32.xlu0 %v764, 64
    %v768 = vpop.permute.xlu0 %767
    %v770 = vmul.f32 %v763, %v768
    %772 = vrot.lane.b32.xlu0 %v770, 32
    %v773 = vpop.permute.xlu0 %772
    %v775 = vadd.f32 %v765, %v773
    %v776 = vtanh.pop %v775
    %778 = vrot.lane.b32.xlu0 %v776, 64
    %v779 = vpop.permute.xlu0 %778
    %v781 = vmul.f32 %v763, %v779
    %v782 = vxor.u32 %v757, 2147483648
    %v783 = vmul.f32 %v782, 1.442695
    %v784 = vpow.pop %v783
    %v785 = vadd.f32 %v784, 1.0
    %v786 = vrcp.pop %v785
    %v787 = vmul.f32 1.0, %v786
    %v788 = vtanh.pop %v757
    %v789 = vmul.f32 %v787, %v627
    %791 = vrot.lane.b32.xlu0 %v788, 64
    %v792 = vpop.permute.xlu0 %791
    %v794 = vmul.f32 %v787, %v792
    %796 = vrot.lane.b32.xlu0 %v794, 32
    %v797 = vpop.permute.xlu0 %796
    %v799 = vadd.f32 %v789, %v797
    %v800 = vtanh.pop %v799
    %802 = vrot.lane.b32.xlu0 %v800, 64
    %v803 = vpop.permute.xlu0 %802
    %v805 = vmul.f32 %v787, %v803
    %807 = vrot.lane.b32.xlu0 %v781, 32
    %v808 = vpop.permute.xlu0 %807
    %811 = vrot.lane.b32.xlu0 %v805, 64
    %v812 = vpop.permute.xlu0 %811
    %v814 = vsel %vm653, %v808, %v812
    %v815 = vpack.c.bf16 %v814, %v814
    %s816 = smul.u32 %s629, 8
    %s817 = smul.addr %s816, 4
    %s818 = scalar_lea.vmem %s7, %s817
    %v819 = vld [vmem:[%s818] sm:$0xf]
    %v820 = vld [vmem:[%s818 + $0x4] sm:$0xf]
    %v821 = vld [vmem:[%s818 + $0x8] sm:$0xf]
    %v822 = vld [vmem:[%s818 + $0xc] sm:$0xf]
    %v823 = vld [vmem:[%s818 + $0x10] sm:$0xf]
    %v824 = vld [vmem:[%s818 + $0x14] sm:$0xf]
    %v825 = vld [vmem:[%s818 + $0x18] sm:$0xf]
    %v826 = vld [vmem:[%s818 + $0x1c] sm:$0xf]
    %v835 = vunpack.c.l.b16 %v819
    %v836 = vunpack.c.l.b16 %v820
    %v837 = vunpack.c.l.b16 %v821
    %v838 = vunpack.c.l.b16 %v822
    %v839 = vunpack.c.l.b16 %v823
    %v840 = vunpack.c.l.b16 %v824
    %v841 = vunpack.c.l.b16 %v825
    %v842 = vunpack.c.l.b16 %v826
    %v843 = vpack.c.b16 %v836, %v835
    %v844 = vpack.c.b16 %v838, %v837
    %v845 = vpack.c.b16 %v840, %v839
    %v846 = vpack.c.b16 %v842, %v841
    %vm851 = vcmask 523264
    %v853 = vsel %vm851, %v815, 0
    %855 = vmatprep.subr.bf16.mxu0 0
    %856 = vmatpush1.bf16.msra.mxu0 0
    %857 = vmatprep.subr.bf16.mxu0 0
    %858 = vmatpush1.bf16.msra.mxu0 0
    %859 = vmatprep.subr.bf16.mxu0 0
    %860 = vmatpush1.bf16.msra.mxu0 0
    %861 = vmatprep.subr.bf16.mxu0 0
    %862 = vmatpush1.bf16.msra.mxu0 0
    %863 = vmatprep.subr.bf16.mxu0 0
    %864 = vmatpush1.bf16.msra.mxu0 %v846
    %865 = vmatprep.subr.bf16.mxu0 0
    %866 = vmatpush1.bf16.msra.mxu0 %v845
    %867 = vmatprep.subr.bf16.mxu0 0
    %868 = vmatpush1.bf16.msra.mxu0 %v844
    %869 = vmatprep.subr.bf16.mxu0 0
    %870 = vmatpush1.bf16.msra.mxu0 %v843
    %871 = vmatprep.subr.bf16.mxu0 0
    %872 = vmatpush2.bf16.msra.mxu0 0
    %873 = vmatprep.subr.bf16.mxu0 0
    %874 = vmatpush2.bf16.msra.mxu0 0
    %875 = vmatprep.subr.bf16.mxu0 0
    %876 = vmatpush2.bf16.msra.mxu0 0
    %877 = vmatprep.subr.bf16.mxu0 0
    %878 = vmatpush2.bf16.msra.mxu0 0
    %879 = vmatprep.subr.bf16.mxu0 0
    %880 = vmatpush2.bf16.msra.mxu0 0
    %881 = vmatprep.subr.bf16.mxu0 0
    %882 = vmatpush2.bf16.msra.mxu0 0
    %883 = vmatprep.subr.bf16.mxu0 0
    %884 = vmatpush2.bf16.msra.mxu0 0
    %885 = vmatprep.subr.bf16.mxu0 0
    %886 = vmatpush2.bf16.msra.mxu0 0
    %887 = vmatprep.mubr.bf16.mxu0 0
    %888 = vmatmul.mubr.bf16.gmra.mxu0 %v853
    %v889 = vpop.f32.mrf.mxu0
    %v890 = vadd.f32 0.0, %v889
    %v891 = vpop.f32.mrf.mxu0
    %v892 = vpop.f32.mrf.mxu0
    %v893 = vpop.f32.mrf.mxu0
    %894 = vdwg.mxu0
    %v895 = vadd.f32 %v628, %v890
    %s896 = sadd.s32 %s629, 1
    %s897 = ssub.s32 30, %s629
    %s898 = smul.u32 %s896, 8
    %s899 = scalar_lea.vmem [#allocation2], %s898
    %v900 = vld [vmem:[%s899] sm:$0xff]
    %s901 = smul.u32 %s897, 8
    %s902 = scalar_lea.vmem [#allocation3], %s901
    %v903 = vld [vmem:[%s902] sm:$0xff]
    %v904 = vpack.c.bf16 %v781, %v781
    %906 = vrot.lane.b32.xlu0 %v904, 32
    %v907 = vpop.permute.xlu0 %906
    %v909 = vsel %vm653, %v907, 0
    %911 = vmatprep.subr.bf16.mxu0 0
    %912 = vmatpush1.bf16.msra.mxu0 0
    %913 = vmatprep.subr.bf16.mxu0 0
    %914 = vmatpush1.bf16.msra.mxu0 0
    %915 = vmatprep.subr.bf16.mxu0 0
    %916 = vmatpush1.bf16.msra.mxu0 0
    %917 = vmatprep.subr.bf16.mxu0 0
    %918 = vmatpush1.bf16.msra.mxu0 0
    %919 = vmatprep.subr.bf16.mxu0 0
    %920 = vmatpush1.bf16.msra.mxu0 0
    %921 = vmatprep.subr.bf16.mxu0 0
    %922 = vmatpush1.bf16.msra.mxu0 0
    %923 = vmatprep.subr.bf16.mxu0 0
    %924 = vmatpush1.bf16.msra.mxu0 %v650
    %925 = vmatprep.subr.bf16.mxu0 0
    %926 = vmatpush1.bf16.msra.mxu0 %v649
    %927 = vmatprep.subr.bf16.mxu0 0
    %928 = vmatpush2.bf16.msra.mxu0 0
    %929 = vmatprep.subr.bf16.mxu0 0
    %930 = vmatpush2.bf16.msra.mxu0 0
    %931 = vmatprep.subr.bf16.mxu0 0
    %932 = vmatpush2.bf16.msra.mxu0 0
    %933 = vmatprep.subr.bf16.mxu0 0
    %934 = vmatpush2.bf16.msra.mxu0 0
    %935 = vmatprep.subr.bf16.mxu0 0
    %936 = vmatpush2.bf16.msra.mxu0 0
    %937 = vmatprep.subr.bf16.mxu0 0
    %938 = vmatpush2.bf16.msra.mxu0 0
    %939 = vmatprep.subr.bf16.mxu0 0
    %940 = vmatpush2.bf16.msra.mxu0 0
    %941 = vmatprep.subr.bf16.mxu0 0
    %942 = vmatpush2.bf16.msra.mxu0 0
    %943 = vmatprep.mubr.bf16.mxu0 0
    %944 = vmatmul.mubr.bf16.gmra.mxu0 %v909
    %v945 = vpop.f32.mrf.mxu0
    %v946 = vadd.f32 0.0, %v945
    %v947 = vpop.f32.mrf.mxu0
    %v948 = vpop.f32.mrf.mxu0
    %v949 = vpop.f32.mrf.mxu0
    %950 = vdwg.mxu0
    %v951 = vadd.f32 %v900, %v946
    %v952 = vpack.c.bf16 %v805, %v805
    %954 = vrot.lane.b32.xlu0 %v952, 32
    %v955 = vpop.permute.xlu0 %954
    %v957 = vsel %vm653, %v955, 0
    %959 = vmatprep.subr.bf16.mxu0 0
    %960 = vmatpush1.bf16.msra.mxu0 0
    %961 = vmatprep.subr.bf16.mxu0 0
    %962 = vmatpush1.bf16.msra.mxu0 0
    %963 = vmatprep.subr.bf16.mxu0 0
    %964 = vmatpush1.bf16.msra.mxu0 0
    %965 = vmatprep.subr.bf16.mxu0 0
    %966 = vmatpush1.bf16.msra.mxu0 0
    %967 = vmatprep.subr.bf16.mxu0 0
    %968 = vmatpush1.bf16.msra.mxu0 0
    %969 = vmatprep.subr.bf16.mxu0 0
    %970 = vmatpush1.bf16.msra.mxu0 0
    %971 = vmatprep.subr.bf16.mxu0 0
    %972 = vmatpush1.bf16.msra.mxu0 %v711
    %973 = vmatprep.subr.bf16.mxu0 0
    %974 = vmatpush1.bf16.msra.mxu0 %v710
    %975 = vmatprep.subr.bf16.mxu0 0
    %976 = vmatpush2.bf16.msra.mxu0 0
    %977 = vmatprep.subr.bf16.mxu0 0
    %978 = vmatpush2.bf16.msra.mxu0 0
    %979 = vmatprep.subr.bf16.mxu0 0
    %980 = vmatpush2.bf16.msra.mxu0 0
    %981 = vmatprep.subr.bf16.mxu0 0
    %982 = vmatpush2.bf16.msra.mxu0 0
    %983 = vmatprep.subr.bf16.mxu0 0
    %984 = vmatpush2.bf16.msra.mxu0 0
    %985 = vmatprep.subr.bf16.mxu0 0
    %986 = vmatpush2.bf16.msra.mxu0 0
    %987 = vmatprep.subr.bf16.mxu0 0
    %988 = vmatpush2.bf16.msra.mxu0 0
    %989 = vmatprep.subr.bf16.mxu0 0
    %990 = vmatpush2.bf16.msra.mxu0 0
    %991 = vmatprep.mubr.bf16.mxu0 0
    %992 = vmatmul.mubr.bf16.gmra.mxu0 %v957
    %v993 = vpop.f32.mrf.mxu0
    %v994 = vadd.f32 0.0, %v993
    %v995 = vpop.f32.mrf.mxu0
    %v996 = vpop.f32.mrf.mxu0
    %v997 = vpop.f32.mrf.mxu0
    %998 = vdwg.mxu0
    %v999 = vadd.f32 %v903, %v994
    %v1000 = vxor.u32 %v951, 2147483648
    %v1001 = vmul.f32 %v1000, 1.442695
    %v1002 = vpow.pop %v1001
    %v1003 = vadd.f32 %v1002, 1.0
    %v1004 = vrcp.pop %v1003
    %v1005 = vmul.f32 1.0, %v1004
    %v1006 = vtanh.pop %v951
    %v1007 = vmul.f32 %v1005, %v775
    %1009 = vrot.lane.b32.xlu0 %v1006, 64
    %v1010 = vpop.permute.xlu0 %1009
    %v1012 = vmul.f32 %v1005, %v1010
    %1014 = vrot.lane.b32.xlu0 %v1012, 32
    %v1015 = vpop.permute.xlu0 %1014
    %v1017 = vadd.f32 %v1007, %v1015
    %v1018 = vtanh.pop %v1017
    %1020 = vrot.lane.b32.xlu0 %v1018, 64
    %v1021 = vpop.permute.xlu0 %1020
    %v1023 = vmul.f32 %v1005, %v1021
    %v1024 = vxor.u32 %v999, 2147483648
    %v1025 = vmul.f32 %v1024, 1.442695
    %v1026 = vpow.pop %v1025
    %v1027 = vadd.f32 %v1026, 1.0
    %v1028 = vrcp.pop %v1027
    %v1029 = vmul.f32 1.0, %v1028
    %v1030 = vtanh.pop %v999
    %v1031 = vmul.f32 %v1029, %v799
    %1033 = vrot.lane.b32.xlu0 %v1030, 64
    %v1034 = vpop.permute.xlu0 %1033
    %v1036 = vmul.f32 %v1029, %v1034
    %1038 = vrot.lane.b32.xlu0 %v1036, 32
    %v1039 = vpop.permute.xlu0 %1038
    %v1041 = vadd.f32 %v1031, %v1039
    %v1042 = vtanh.pop %v1041
    %1044 = vrot.lane.b32.xlu0 %v1042, 64
    %v1045 = vpop.permute.xlu0 %1044
    %v1047 = vmul.f32 %v1029, %v1045
    %1049 = vrot.lane.b32.xlu0 %v1023, 32
    %v1050 = vpop.permute.xlu0 %1049
    %1053 = vrot.lane.b32.xlu0 %v1047, 64
    %v1054 = vpop.permute.xlu0 %1053
    %v1056 = vsel %vm653, %v1050, %v1054
    %v1057 = vpack.c.bf16 %v1056, %v1056
    %s1058 = smul.addr %s898, 4
    %s1059 = scalar_lea.vmem %s7, %s1058
    %v1060 = vld [vmem:[%s1059] sm:$0xf]
    %v1061 = vld [vmem:[%s1059 + $0x4] sm:$0xf]
    %v1062 = vld [vmem:[%s1059 + $0x8] sm:$0xf]
    %v1063 = vld [vmem:[%s1059 + $0xc] sm:$0xf]
    %v1064 = vld [vmem:[%s1059 + $0x10] sm:$0xf]
    %v1065 = vld [vmem:[%s1059 + $0x14] sm:$0xf]
    %v1066 = vld [vmem:[%s1059 + $0x18] sm:$0xf]
    %v1067 = vld [vmem:[%s1059 + $0x1c] sm:$0xf]
    %v1076 = vunpack.c.l.b16 %v1060
    %v1077 = vunpack.c.l.b16 %v1061
    %v1078 = vunpack.c.l.b16 %v1062
    %v1079 = vunpack.c.l.b16 %v1063
    %v1080 = vunpack.c.l.b16 %v1064
    %v1081 = vunpack.c.l.b16 %v1065
    %v1082 = vunpack.c.l.b16 %v1066
    %v1083 = vunpack.c.l.b16 %v1067
    %v1084 = vpack.c.b16 %v1077, %v1076
    %v1085 = vpack.c.b16 %v1079, %v1078
    %v1086 = vpack.c.b16 %v1081, %v1080
    %v1087 = vpack.c.b16 %v1083, %v1082
    %v1093 = vsel %vm851, %v1057, 0
    %1095 = vmatprep.subr.bf16.mxu0 0
    %1096 = vmatpush1.bf16.msra.mxu0 0
    %1097 = vmatprep.subr.bf16.mxu0 0
    %1098 = vmatpush1.bf16.msra.mxu0 0
    %1099 = vmatprep.subr.bf16.mxu0 0
    %1100 = vmatpush1.bf16.msra.mxu0 0
    %1101 = vmatprep.subr.bf16.mxu0 0
    %1102 = vmatpush1.bf16.msra.mxu0 0
    %1103 = vmatprep.subr.bf16.mxu0 0
    %1104 = vmatpush1.bf16.msra.mxu0 %v1087
    %1105 = vmatprep.subr.bf16.mxu0 0
    %1106 = vmatpush1.bf16.msra.mxu0 %v1086
    %1107 = vmatprep.subr.bf16.mxu0 0
    %1108 = vmatpush1.bf16.msra.mxu0 %v1085
    %1109 = vmatprep.subr.bf16.mxu0 0
    %1110 = vmatpush1.bf16.msra.mxu0 %v1084
    %1111 = vmatprep.subr.bf16.mxu0 0
    %1112 = vmatpush2.bf16.msra.mxu0 0
    %1113 = vmatprep.subr.bf16.mxu0 0
    %1114 = vmatpush2.bf16.msra.mxu0 0
    %1115 = vmatprep.subr.bf16.mxu0 0
    %1116 = vmatpush2.bf16.msra.mxu0 0
    %1117 = vmatprep.subr.bf16.mxu0 0
    %1118 = vmatpush2.bf16.msra.mxu0 0
    %1119 = vmatprep.subr.bf16.mxu0 0
    %1120 = vmatpush2.bf16.msra.mxu0 0
    %1121 = vmatprep.subr.bf16.mxu0 0
    %1122 = vmatpush2.bf16.msra.mxu0 0
    %1123 = vmatprep.subr.bf16.mxu0 0
    %1124 = vmatpush2.bf16.msra.mxu0 0
    %1125 = vmatprep.subr.bf16.mxu0 0
    %1126 = vmatpush2.bf16.msra.mxu0 0
    %1127 = vmatprep.mubr.bf16.mxu0 0
    %1128 = vmatmul.mubr.bf16.gmra.mxu0 %v1093
    %v1129 = vpop.f32.mrf.mxu0
    %v1130 = vadd.f32 0.0, %v1129
    %v1131 = vpop.f32.mrf.mxu0
    %v1132 = vpop.f32.mrf.mxu0
    %v1133 = vpop.f32.mrf.mxu0
    %1134 = vdwg.mxu0
    %v1135 = vadd.f32 %v895, %v1130
    %s1136 = sadd.s32 %s629, 2
    %s1137 = ssub.s32 29, %s629
    %s1138 = smul.u32 %s1136, 8
    %s1139 = scalar_lea.vmem [#allocation2], %s1138
    %v1140 = vld [vmem:[%s1139] sm:$0xff]
    %s1141 = smul.u32 %s1137, 8
    %s1142 = scalar_lea.vmem [#allocation3], %s1141
    %v1143 = vld [vmem:[%s1142] sm:$0xff]
    %v1144 = vpack.c.bf16 %v1023, %v1023
    %1146 = vrot.lane.b32.xlu0 %v1144, 32
    %v1147 = vpop.permute.xlu0 %1146
    %v1149 = vsel %vm653, %v1147, 0
    %1151 = vmatprep.subr.bf16.mxu0 0
    %1152 = vmatpush1.bf16.msra.mxu0 0
    %1153 = vmatprep.subr.bf16.mxu0 0
    %1154 = vmatpush1.bf16.msra.mxu0 0
    %1155 = vmatprep.subr.bf16.mxu0 0
    %1156 = vmatpush1.bf16.msra.mxu0 0
    %1157 = vmatprep.subr.bf16.mxu0 0
    %1158 = vmatpush1.bf16.msra.mxu0 0
    %1159 = vmatprep.subr.bf16.mxu0 0
    %1160 = vmatpush1.bf16.msra.mxu0 0
    %1161 = vmatprep.subr.bf16.mxu0 0
    %1162 = vmatpush1.bf16.msra.mxu0 0
    %1163 = vmatprep.subr.bf16.mxu0 0
    %1164 = vmatpush1.bf16.msra.mxu0 %v650
    %1165 = vmatprep.subr.bf16.mxu0 0
    %1166 = vmatpush1.bf16.msra.mxu0 %v649
    %1167 = vmatprep.subr.bf16.mxu0 0
    %1168 = vmatpush2.bf16.msra.mxu0 0
    %1169 = vmatprep.subr.bf16.mxu0 0
    %1170 = vmatpush2.bf16.msra.mxu0 0
    %1171 = vmatprep.subr.bf16.mxu0 0
    %1172 = vmatpush2.bf16.msra.mxu0 0
    %1173 = vmatprep.subr.bf16.mxu0 0
    %1174 = vmatpush2.bf16.msra.mxu0 0
    %1175 = vmatprep.subr.bf16.mxu0 0
    %1176 = vmatpush2.bf16.msra.mxu0 0
    %1177 = vmatprep.subr.bf16.mxu0 0
    %1178 = vmatpush2.bf16.msra.mxu0 0
    %1179 = vmatprep.subr.bf16.mxu0 0
    %1180 = vmatpush2.bf16.msra.mxu0 0
    %1181 = vmatprep.subr.bf16.mxu0 0
    %1182 = vmatpush2.bf16.msra.mxu0 0
    %1183 = vmatprep.mubr.bf16.mxu0 0
    %1184 = vmatmul.mubr.bf16.gmra.mxu0 %v1149
    %v1185 = vpop.f32.mrf.mxu0
    %v1186 = vadd.f32 0.0, %v1185
    %v1187 = vpop.f32.mrf.mxu0
    %v1188 = vpop.f32.mrf.mxu0
    %v1189 = vpop.f32.mrf.mxu0
    %1190 = vdwg.mxu0
    %v1191 = vadd.f32 %v1140, %v1186
    %v1192 = vpack.c.bf16 %v1047, %v1047
    %1194 = vrot.lane.b32.xlu0 %v1192, 32
    %v1195 = vpop.permute.xlu0 %1194
    %v1197 = vsel %vm653, %v1195, 0
    %1199 = vmatprep.subr.bf16.mxu0 0
    %1200 = vmatpush1.bf16.msra.mxu0 0
    %1201 = vmatprep.subr.bf16.mxu0 0
    %1202 = vmatpush1.bf16.msra.mxu0 0
    %1203 = vmatprep.subr.bf16.mxu0 0
    %1204 = vmatpush1.bf16.msra.mxu0 0
    %1205 = vmatprep.subr.bf16.mxu0 0
    %1206 = vmatpush1.bf16.msra.mxu0 0
    %1207 = vmatprep.subr.bf16.mxu0 0
    %1208 = vmatpush1.bf16.msra.mxu0 0
    %1209 = vmatprep.subr.bf16.mxu0 0
    %1210 = vmatpush1.bf16.msra.mxu0 0
    %1211 = vmatprep.subr.bf16.mxu0 0
    %1212 = vmatpush1.bf16.msra.mxu0 %v711
    %1213 = vmatprep.subr.bf16.mxu0 0
    %1214 = vmatpush1.bf16.msra.mxu0 %v710
    %1215 = vmatprep.subr.bf16.mxu0 0
    %1216 = vmatpush2.bf16.msra.mxu0 0
    %1217 = vmatprep.subr.bf16.mxu0 0
    %1218 = vmatpush2.bf16.msra.mxu0 0
    %1219 = vmatprep.subr.bf16.mxu0 0
    %1220 = vmatpush2.bf16.msra.mxu0 0
    %1221 = vmatprep.subr.bf16.mxu0 0
    %1222 = vmatpush2.bf16.msra.mxu0 0
    %1223 = vmatprep.subr.bf16.mxu0 0
    %1224 = vmatpush2.bf16.msra.mxu0 0
    %1225 = vmatprep.subr.bf16.mxu0 0
    %1226 = vmatpush2.bf16.msra.mxu0 0
    %1227 = vmatprep.subr.bf16.mxu0 0
    %1228 = vmatpush2.bf16.msra.mxu0 0
    %1229 = vmatprep.subr.bf16.mxu0 0
    %1230 = vmatpush2.bf16.msra.mxu0 0
    %1231 = vmatprep.mubr.bf16.mxu0 0
    %1232 = vmatmul.mubr.bf16.gmra.mxu0 %v1197
    %v1233 = vpop.f32.mrf.mxu0
    %v1234 = vadd.f32 0.0, %v1233
    %v1235 = vpop.f32.mrf.mxu0
    %v1236 = vpop.f32.mrf.mxu0
    %v1237 = vpop.f32.mrf.mxu0
    %1238 = vdwg.mxu0
    %v1239 = vadd.f32 %v1143, %v1234
    %v1240 = vxor.u32 %v1191, 2147483648
    %v1241 = vmul.f32 %v1240, 1.442695
    %v1242 = vpow.pop %v1241
    %v1243 = vadd.f32 %v1242, 1.0
    %v1244 = vrcp.pop %v1243
    %v1245 = vmul.f32 1.0, %v1244
    %v1246 = vtanh.pop %v1191
    %v1247 = vmul.f32 %v1245, %v1017
    %1249 = vrot.lane.b32.xlu0 %v1246, 64
    %v1250 = vpop.permute.xlu0 %1249
    %v1252 = vmul.f32 %v1245, %v1250
    %1254 = vrot.lane.b32.xlu0 %v1252, 32
    %v1255 = vpop.permute.xlu0 %1254
    %v1257 = vadd.f32 %v1247, %v1255
    %v1258 = vtanh.pop %v1257
    %1260 = vrot.lane.b32.xlu0 %v1258, 64
    %v1261 = vpop.permute.xlu0 %1260
    %v1263 = vmul.f32 %v1245, %v1261
    %v1264 = vxor.u32 %v1239, 2147483648
    %v1265 = vmul.f32 %v1264, 1.442695
    %v1266 = vpow.pop %v1265
    %v1267 = vadd.f32 %v1266, 1.0
    %v1268 = vrcp.pop %v1267
    %v1269 = vmul.f32 1.0, %v1268
    %v1270 = vtanh.pop %v1239
    %v1271 = vmul.f32 %v1269, %v1041
    %1273 = vrot.lane.b32.xlu0 %v1270, 64
    %v1274 = vpop.permute.xlu0 %1273
    %v1276 = vmul.f32 %v1269, %v1274
    %1278 = vrot.lane.b32.xlu0 %v1276, 32
    %v1279 = vpop.permute.xlu0 %1278
    %v1281 = vadd.f32 %v1271, %v1279
    %v1282 = vtanh.pop %v1281
    %1284 = vrot.lane.b32.xlu0 %v1282, 64
    %v1285 = vpop.permute.xlu0 %1284
    %v1287 = vmul.f32 %v1269, %v1285
    %1289 = vrot.lane.b32.xlu0 %v1263, 32
    %v1290 = vpop.permute.xlu0 %1289
    %1293 = vrot.lane.b32.xlu0 %v1287, 64
    %v1294 = vpop.permute.xlu0 %1293
    %v1296 = vsel %vm653, %v1290, %v1294
    %v1297 = vpack.c.bf16 %v1296, %v1296
    %s1298 = smul.addr %s1138, 4
    %s1299 = scalar_lea.vmem %s7, %s1298
    %v1300 = vld [vmem:[%s1299] sm:$0xf]
    %v1301 = vld [vmem:[%s1299 + $0x4] sm:$0xf]
    %v1302 = vld [vmem:[%s1299 + $0x8] sm:$0xf]
    %v1303 = vld [vmem:[%s1299 + $0xc] sm:$0xf]
    %v1304 = vld [vmem:[%s1299 + $0x10] sm:$0xf]
    %v1305 = vld [vmem:[%s1299 + $0x14] sm:$0xf]
    %v1306 = vld [vmem:[%s1299 + $0x18] sm:$0xf]
    %v1307 = vld [vmem:[%s1299 + $0x1c] sm:$0xf]
    %v1316 = vunpack.c.l.b16 %v1300
    %v1317 = vunpack.c.l.b16 %v1301
    %v1318 = vunpack.c.l.b16 %v1302
    %v1319 = vunpack.c.l.b16 %v1303
    %v1320 = vunpack.c.l.b16 %v1304
    %v1321 = vunpack.c.l.b16 %v1305
    %v1322 = vunpack.c.l.b16 %v1306
    %v1323 = vunpack.c.l.b16 %v1307
    %v1324 = vpack.c.b16 %v1317, %v1316
    %v1325 = vpack.c.b16 %v1319, %v1318
    %v1326 = vpack.c.b16 %v1321, %v1320
    %v1327 = vpack.c.b16 %v1323, %v1322
    %v1333 = vsel %vm851, %v1297, 0
    %1335 = vmatprep.subr.bf16.mxu0 0
    %1336 = vmatpush1.bf16.msra.mxu0 0
    %1337 = vmatprep.subr.bf16.mxu0 0
    %1338 = vmatpush1.bf16.msra.mxu0 0
    %1339 = vmatprep.subr.bf16.mxu0 0
    %1340 = vmatpush1.bf16.msra.mxu0 0
    %1341 = vmatprep.subr.bf16.mxu0 0
    %1342 = vmatpush1.bf16.msra.mxu0 0
    %1343 = vmatprep.subr.bf16.mxu0 0
    %1344 = vmatpush1.bf16.msra.mxu0 %v1327
    %1345 = vmatprep.subr.bf16.mxu0 0
    %1346 = vmatpush1.bf16.msra.mxu0 %v1326
    %1347 = vmatprep.subr.bf16.mxu0 0
    %1348 = vmatpush1.bf16.msra.mxu0 %v1325
    %1349 = vmatprep.subr.bf16.mxu0 0
    %1350 = vmatpush1.bf16.msra.mxu0 %v1324
    %1351 = vmatprep.subr.bf16.mxu0 0
    %1352 = vmatpush2.bf16.msra.mxu0 0
    %1353 = vmatprep.subr.bf16.mxu0 0
    %1354 = vmatpush2.bf16.msra.mxu0 0
    %1355 = vmatprep.subr.bf16.mxu0 0
    %1356 = vmatpush2.bf16.msra.mxu0 0
    %1357 = vmatprep.subr.bf16.mxu0 0
    %1358 = vmatpush2.bf16.msra.mxu0 0
    %1359 = vmatprep.subr.bf16.mxu0 0
    %1360 = vmatpush2.bf16.msra.mxu0 0
    %1361 = vmatprep.subr.bf16.mxu0 0
    %1362 = vmatpush2.bf16.msra.mxu0 0
    %1363 = vmatprep.subr.bf16.mxu0 0
    %1364 = vmatpush2.bf16.msra.mxu0 0
    %1365 = vmatprep.subr.bf16.mxu0 0
    %1366 = vmatpush2.bf16.msra.mxu0 0
    %1367 = vmatprep.mubr.bf16.mxu0 0
    %1368 = vmatmul.mubr.bf16.gmra.mxu0 %v1333
    %v1369 = vpop.f32.mrf.mxu0
    %v1370 = vadd.f32 0.0, %v1369
    %v1371 = vpop.f32.mrf.mxu0
    %v1372 = vpop.f32.mrf.mxu0
    %v1373 = vpop.f32.mrf.mxu0
    %1374 = vdwg.mxu0
    %v1375 = vadd.f32 %v1135, %v1370
    %s1376 = sadd.s32 %s629, 3
    %s1377 = ssub.s32 28, %s629
    %s1378 = smul.u32 %s1376, 8
    %s1379 = scalar_lea.vmem [#allocation2], %s1378
    %v1380 = vld [vmem:[%s1379] sm:$0xff]
    %s1381 = smul.u32 %s1377, 8
    %s1382 = scalar_lea.vmem [#allocation3], %s1381
    %v1383 = vld [vmem:[%s1382] sm:$0xff]
    %v1384 = vpack.c.bf16 %v1263, %v1263
    %1386 = vrot.lane.b32.xlu0 %v1384, 32
    %v1387 = vpop.permute.xlu0 %1386
    %v1389 = vsel %vm653, %v1387, 0
    %1391 = vmatprep.subr.bf16.mxu0 0
    %1392 = vmatpush1.bf16.msra.mxu0 0
    %1393 = vmatprep.subr.bf16.mxu0 0
    %1394 = vmatpush1.bf16.msra.mxu0 0
    %1395 = vmatprep.subr.bf16.mxu0 0
    %1396 = vmatpush1.bf16.msra.mxu0 0
    %1397 = vmatprep.subr.bf16.mxu0 0
    %1398 = vmatpush1.bf16.msra.mxu0 0
    %1399 = vmatprep.subr.bf16.mxu0 0
    %1400 = vmatpush1.bf16.msra.mxu0 0
    %1401 = vmatprep.subr.bf16.mxu0 0
    %1402 = vmatpush1.bf16.msra.mxu0 0
    %1403 = vmatprep.subr.bf16.mxu0 0
    %1404 = vmatpush1.bf16.msra.mxu0 %v650
    %1405 = vmatprep.subr.bf16.mxu0 0
    %1406 = vmatpush1.bf16.msra.mxu0 %v649
    %1407 = vmatprep.subr.bf16.mxu0 0
    %1408 = vmatpush2.bf16.msra.mxu0 0
    %1409 = vmatprep.subr.bf16.mxu0 0
    %1410 = vmatpush2.bf16.msra.mxu0 0
    %1411 = vmatprep.subr.bf16.mxu0 0
    %1412 = vmatpush2.bf16.msra.mxu0 0
    %1413 = vmatprep.subr.bf16.mxu0 0
    %1414 = vmatpush2.bf16.msra.mxu0 0
    %1415 = vmatprep.subr.bf16.mxu0 0
    %1416 = vmatpush2.bf16.msra.mxu0 0
    %1417 = vmatprep.subr.bf16.mxu0 0
    %1418 = vmatpush2.bf16.msra.mxu0 0
    %1419 = vmatprep.subr.bf16.mxu0 0
    %1420 = vmatpush2.bf16.msra.mxu0 0
    %1421 = vmatprep.subr.bf16.mxu0 0
    %1422 = vmatpush2.bf16.msra.mxu0 0
    %1423 = vmatprep.mubr.bf16.mxu0 0
    %1424 = vmatmul.mubr.bf16.gmra.mxu0 %v1389
    %v1425 = vpop.f32.mrf.mxu0
    %v1426 = vadd.f32 0.0, %v1425
    %v1427 = vpop.f32.mrf.mxu0
    %v1428 = vpop.f32.mrf.mxu0
    %v1429 = vpop.f32.mrf.mxu0
    %1430 = vdwg.mxu0
    %v1431 = vadd.f32 %v1380, %v1426
    %v1432 = vpack.c.bf16 %v1287, %v1287
    %1434 = vrot.lane.b32.xlu0 %v1432, 32
    %v1435 = vpop.permute.xlu0 %1434
    %v1437 = vsel %vm653, %v1435, 0
    %1439 = vmatprep.subr.bf16.mxu0 0
    %1440 = vmatpush1.bf16.msra.mxu0 0
    %1441 = vmatprep.subr.bf16.mxu0 0
    %1442 = vmatpush1.bf16.msra.mxu0 0
    %1443 = vmatprep.subr.bf16.mxu0 0
    %1444 = vmatpush1.bf16.msra.mxu0 0
    %1445 = vmatprep.subr.bf16.mxu0 0
    %1446 = vmatpush1.bf16.msra.mxu0 0
    %1447 = vmatprep.subr.bf16.mxu0 0
    %1448 = vmatpush1.bf16.msra.mxu0 0
    %1449 = vmatprep.subr.bf16.mxu0 0
    %1450 = vmatpush1.bf16.msra.mxu0 0
    %1451 = vmatprep.subr.bf16.mxu0 0
    %1452 = vmatpush1.bf16.msra.mxu0 %v711
    %1453 = vmatprep.subr.bf16.mxu0 0
    %1454 = vmatpush1.bf16.msra.mxu0 %v710
    %1455 = vmatprep.subr.bf16.mxu0 0
    %1456 = vmatpush2.bf16.msra.mxu0 0
    %1457 = vmatprep.subr.bf16.mxu0 0
    %1458 = vmatpush2.bf16.msra.mxu0 0
    %1459 = vmatprep.subr.bf16.mxu0 0
    %1460 = vmatpush2.bf16.msra.mxu0 0
    %1461 = vmatprep.subr.bf16.mxu0 0
    %1462 = vmatpush2.bf16.msra.mxu0 0
    %1463 = vmatprep.subr.bf16.mxu0 0
    %1464 = vmatpush2.bf16.msra.mxu0 0
    %1465 = vmatprep.subr.bf16.mxu0 0
    %1466 = vmatpush2.bf16.msra.mxu0 0
    %1467 = vmatprep.subr.bf16.mxu0 0
    %1468 = vmatpush2.bf16.msra.mxu0 0
    %1469 = vmatprep.subr.bf16.mxu0 0
    %1470 = vmatpush2.bf16.msra.mxu0 0
    %1471 = vmatprep.mubr.bf16.mxu0 0
    %1472 = vmatmul.mubr.bf16.gmra.mxu0 %v1437
    %v1473 = vpop.f32.mrf.mxu0
    %v1474 = vadd.f32 0.0, %v1473
    %v1475 = vpop.f32.mrf.mxu0
    %v1476 = vpop.f32.mrf.mxu0
    %v1477 = vpop.f32.mrf.mxu0
    %1478 = vdwg.mxu0
    %v1479 = vadd.f32 %v1383, %v1474
    %v1480 = vxor.u32 %v1431, 2147483648
    %v1481 = vmul.f32 %v1480, 1.442695
    %v1482 = vpow.pop %v1481
    %v1483 = vadd.f32 %v1482, 1.0
    %v1484 = vrcp.pop %v1483
    %v1485 = vmul.f32 1.0, %v1484
    %v1486 = vtanh.pop %v1431
    %v1487 = vmul.f32 %v1485, %v1257
    %1489 = vrot.lane.b32.xlu0 %v1486, 64
    %v1490 = vpop.permute.xlu0 %1489
    %v1492 = vmul.f32 %v1485, %v1490
    %1494 = vrot.lane.b32.xlu0 %v1492, 32
    %v1495 = vpop.permute.xlu0 %1494
    %v1497 = vadd.f32 %v1487, %v1495
    %v1498 = vtanh.pop %v1497
    %1500 = vrot.lane.b32.xlu0 %v1498, 64
    %v1501 = vpop.permute.xlu0 %1500
    %v1503 = vmul.f32 %v1485, %v1501
    %v1504 = vxor.u32 %v1479, 2147483648
    %v1505 = vmul.f32 %v1504, 1.442695
    %v1506 = vpow.pop %v1505
    %v1507 = vadd.f32 %v1506, 1.0
    %v1508 = vrcp.pop %v1507
    %v1509 = vmul.f32 1.0, %v1508
    %v1510 = vtanh.pop %v1479
    %v1511 = vmul.f32 %v1509, %v1281
    %1513 = vrot.lane.b32.xlu0 %v1510, 64
    %v1514 = vpop.permute.xlu0 %1513
    %v1516 = vmul.f32 %v1509, %v1514
    %1518 = vrot.lane.b32.xlu0 %v1516, 32
    %v1519 = vpop.permute.xlu0 %1518
    %v1521 = vadd.f32 %v1511, %v1519
    %v1522 = vtanh.pop %v1521
    %1524 = vrot.lane.b32.xlu0 %v1522, 64
    %v1525 = vpop.permute.xlu0 %1524
    %v1527 = vmul.f32 %v1509, %v1525
    %1529 = vrot.lane.b32.xlu0 %v1503, 32
    %v1530 = vpop.permute.xlu0 %1529
    %1533 = vrot.lane.b32.xlu0 %v1527, 64
    %v1534 = vpop.permute.xlu0 %1533
    %v1536 = vsel %vm653, %v1530, %v1534
    %v1537 = vpack.c.bf16 %v1536, %v1536
    %s1538 = smul.addr %s1378, 4
    %s1539 = scalar_lea.vmem %s7, %s1538
    %v1540 = vld [vmem:[%s1539] sm:$0xf]
    %v1541 = vld [vmem:[%s1539 + $0x4] sm:$0xf]
    %v1542 = vld [vmem:[%s1539 + $0x8] sm:$0xf]
    %v1543 = vld [vmem:[%s1539 + $0xc] sm:$0xf]
    %v1544 = vld [vmem:[%s1539 + $0x10] sm:$0xf]
    %v1545 = vld [vmem:[%s1539 + $0x14] sm:$0xf]
    %v1546 = vld [vmem:[%s1539 + $0x18] sm:$0xf]
    %v1547 = vld [vmem:[%s1539 + $0x1c] sm:$0xf]
    %v1556 = vunpack.c.l.b16 %v1540
    %v1557 = vunpack.c.l.b16 %v1541
    %v1558 = vunpack.c.l.b16 %v1542
    %v1559 = vunpack.c.l.b16 %v1543
    %v1560 = vunpack.c.l.b16 %v1544
    %v1561 = vunpack.c.l.b16 %v1545
    %v1562 = vunpack.c.l.b16 %v1546
    %v1563 = vunpack.c.l.b16 %v1547
    %v1564 = vpack.c.b16 %v1557, %v1556
    %v1565 = vpack.c.b16 %v1559, %v1558
    %v1566 = vpack.c.b16 %v1561, %v1560
    %v1567 = vpack.c.b16 %v1563, %v1562
    %v1573 = vsel %vm851, %v1537, 0
    %1575 = vmatprep.subr.bf16.mxu0 0
    %1576 = vmatpush1.bf16.msra.mxu0 0
    %1577 = vmatprep.subr.bf16.mxu0 0
    %1578 = vmatpush1.bf16.msra.mxu0 0
    %1579 = vmatprep.subr.bf16.mxu0 0
    %1580 = vmatpush1.bf16.msra.mxu0 0
    %1581 = vmatprep.subr.bf16.mxu0 0
    %1582 = vmatpush1.bf16.msra.mxu0 0
    %1583 = vmatprep.subr.bf16.mxu0 0
    %1584 = vmatpush1.bf16.msra.mxu0 %v1567
    %1585 = vmatprep.subr.bf16.mxu0 0
    %1586 = vmatpush1.bf16.msra.mxu0 %v1566
    %1587 = vmatprep.subr.bf16.mxu0 0
    %1588 = vmatpush1.bf16.msra.mxu0 %v1565
    %1589 = vmatprep.subr.bf16.mxu0 0
    %1590 = vmatpush1.bf16.msra.mxu0 %v1564
    %1591 = vmatprep.subr.bf16.mxu0 0
    %1592 = vmatpush2.bf16.msra.mxu0 0
    %1593 = vmatprep.subr.bf16.mxu0 0
    %1594 = vmatpush2.bf16.msra.mxu0 0
    %1595 = vmatprep.subr.bf16.mxu0 0
    %1596 = vmatpush2.bf16.msra.mxu0 0
    %1597 = vmatprep.subr.bf16.mxu0 0
    %1598 = vmatpush2.bf16.msra.mxu0 0
    %1599 = vmatprep.subr.bf16.mxu0 0
    %1600 = vmatpush2.bf16.msra.mxu0 0
    %1601 = vmatprep.subr.bf16.mxu0 0
    %1602 = vmatpush2.bf16.msra.mxu0 0
    %1603 = vmatprep.subr.bf16.mxu0 0
    %1604 = vmatpush2.bf16.msra.mxu0 0
    %1605 = vmatprep.subr.bf16.mxu0 0
    %1606 = vmatpush2.bf16.msra.mxu0 0
    %1607 = vmatprep.mubr.bf16.mxu0 0
    %1608 = vmatmul.mubr.bf16.gmra.mxu0 %v1573
    %v1609 = vpop.f32.mrf.mxu0
    %v1610 = vadd.f32 0.0, %v1609
    %v1611 = vpop.f32.mrf.mxu0
    %v1612 = vpop.f32.mrf.mxu0
    %v1613 = vpop.f32.mrf.mxu0
    %1614 = vdwg.mxu0
    %v1615 = vadd.f32 %v1375, %v1610
    %s1616 = sadd.s32 %s629, 4
    %s1617 = ssub.s32 27, %s629
    %s1618 = smul.u32 %s1616, 8
    %s1619 = scalar_lea.vmem [#allocation2], %s1618
    %v1620 = vld [vmem:[%s1619] sm:$0xff]
    %s1621 = smul.u32 %s1617, 8
    %s1622 = scalar_lea.vmem [#allocation3], %s1621
    %v1623 = vld [vmem:[%s1622] sm:$0xff]
    %v1624 = vpack.c.bf16 %v1503, %v1503
    %1626 = vrot.lane.b32.xlu0 %v1624, 32
    %v1627 = vpop.permute.xlu0 %1626
    %v1629 = vsel %vm653, %v1627, 0
    %1631 = vmatprep.subr.bf16.mxu0 0
    %1632 = vmatpush1.bf16.msra.mxu0 0
    %1633 = vmatprep.subr.bf16.mxu0 0
    %1634 = vmatpush1.bf16.msra.mxu0 0
    %1635 = vmatprep.subr.bf16.mxu0 0
    %1636 = vmatpush1.bf16.msra.mxu0 0
    %1637 = vmatprep.subr.bf16.mxu0 0
    %1638 = vmatpush1.bf16.msra.mxu0 0
    %1639 = vmatprep.subr.bf16.mxu0 0
    %1640 = vmatpush1.bf16.msra.mxu0 0
    %1641 = vmatprep.subr.bf16.mxu0 0
    %1642 = vmatpush1.bf16.msra.mxu0 0
    %1643 = vmatprep.subr.bf16.mxu0 0
    %1644 = vmatpush1.bf16.msra.mxu0 %v650
    %1645 = vmatprep.subr.bf16.mxu0 0
    %1646 = vmatpush1.bf16.msra.mxu0 %v649
    %1647 = vmatprep.subr.bf16.mxu0 0
    %1648 = vmatpush2.bf16.msra.mxu0 0
    %1649 = vmatprep.subr.bf16.mxu0 0
    %1650 = vmatpush2.bf16.msra.mxu0 0
    %1651 = vmatprep.subr.bf16.mxu0 0
    %1652 = vmatpush2.bf16.msra.mxu0 0
    %1653 = vmatprep.subr.bf16.mxu0 0
    %1654 = vmatpush2.bf16.msra.mxu0 0
    %1655 = vmatprep.subr.bf16.mxu0 0
    %1656 = vmatpush2.bf16.msra.mxu0 0
    %1657 = vmatprep.subr.bf16.mxu0 0
    %1658 = vmatpush2.bf16.msra.mxu0 0
    %1659 = vmatprep.subr.bf16.mxu0 0
    %1660 = vmatpush2.bf16.msra.mxu0 0
    %1661 = vmatprep.subr.bf16.mxu0 0
    %1662 = vmatpush2.bf16.msra.mxu0 0
    %1663 = vmatprep.mubr.bf16.mxu0 0
    %1664 = vmatmul.mubr.bf16.gmra.mxu0 %v1629
    %v1665 = vpop.f32.mrf.mxu0
    %v1666 = vadd.f32 0.0, %v1665
    %v1667 = vpop.f32.mrf.mxu0
    %v1668 = vpop.f32.mrf.mxu0
    %v1669 = vpop.f32.mrf.mxu0
    %1670 = vdwg.mxu0
    %v1671 = vadd.f32 %v1620, %v1666
    %v1672 = vpack.c.bf16 %v1527, %v1527
    %1674 = vrot.lane.b32.xlu0 %v1672, 32
    %v1675 = vpop.permute.xlu0 %1674
    %v1677 = vsel %vm653, %v1675, 0
    %1679 = vmatprep.subr.bf16.mxu0 0
    %1680 = vmatpush1.bf16.msra.mxu0 0
    %1681 = vmatprep.subr.bf16.mxu0 0
    %1682 = vmatpush1.bf16.msra.mxu0 0
    %1683 = vmatprep.subr.bf16.mxu0 0
    %1684 = vmatpush1.bf16.msra.mxu0 0
    %1685 = vmatprep.subr.bf16.mxu0 0
    %1686 = vmatpush1.bf16.msra.mxu0 0
    %1687 = vmatprep.subr.bf16.mxu0 0
    %1688 = vmatpush1.bf16.msra.mxu0 0
    %1689 = vmatprep.subr.bf16.mxu0 0
    %1690 = vmatpush1.bf16.msra.mxu0 0
    %1691 = vmatprep.subr.bf16.mxu0 0
    %1692 = vmatpush1.bf16.msra.mxu0 %v711
    %1693 = vmatprep.subr.bf16.mxu0 0
    %1694 = vmatpush1.bf16.msra.mxu0 %v710
    %1695 = vmatprep.subr.bf16.mxu0 0
    %1696 = vmatpush2.bf16.msra.mxu0 0
    %1697 = vmatprep.subr.bf16.mxu0 0
    %1698 = vmatpush2.bf16.msra.mxu0 0
    %1699 = vmatprep.subr.bf16.mxu0 0
    %1700 = vmatpush2.bf16.msra.mxu0 0
    %1701 = vmatprep.subr.bf16.mxu0 0
    %1702 = vmatpush2.bf16.msra.mxu0 0
    %1703 = vmatprep.subr.bf16.mxu0 0
    %1704 = vmatpush2.bf16.msra.mxu0 0
    %1705 = vmatprep.subr.bf16.mxu0 0
    %1706 = vmatpush2.bf16.msra.mxu0 0
    %1707 = vmatprep.subr.bf16.mxu0 0
    %1708 = vmatpush2.bf16.msra.mxu0 0
    %1709 = vmatprep.subr.bf16.mxu0 0
    %1710 = vmatpush2.bf16.msra.mxu0 0
    %1711 = vmatprep.mubr.bf16.mxu0 0
    %1712 = vmatmul.mubr.bf16.gmra.mxu0 %v1677
    %v1713 = vpop.f32.mrf.mxu0
    %v1714 = vadd.f32 0.0, %v1713
    %v1715 = vpop.f32.mrf.mxu0
    %v1716 = vpop.f32.mrf.mxu0
    %v1717 = vpop.f32.mrf.mxu0
    %1718 = vdwg.mxu0
    %v1719 = vadd.f32 %v1623, %v1714
    %v1720 = vxor.u32 %v1671, 2147483648
    %v1721 = vmul.f32 %v1720, 1.442695
    %v1722 = vpow.pop %v1721
    %v1723 = vadd.f32 %v1722, 1.0
    %v1724 = vrcp.pop %v1723
    %v1725 = vmul.f32 1.0, %v1724
    %v1726 = vtanh.pop %v1671
    %v1727 = vmul.f32 %v1725, %v1497
    %1729 = vrot.lane.b32.xlu0 %v1726, 64
    %v1730 = vpop.permute.xlu0 %1729
    %v1732 = vmul.f32 %v1725, %v1730
    %1734 = vrot.lane.b32.xlu0 %v1732, 32
    %v1735 = vpop.permute.xlu0 %1734
    %v1737 = vadd.f32 %v1727, %v1735
    %v1738 = vtanh.pop %v1737
    %1740 = vrot.lane.b32.xlu0 %v1738, 64
    %v1741 = vpop.permute.xlu0 %1740
    %v1743 = vmul.f32 %v1725, %v1741
    %v1744 = vxor.u32 %v1719, 2147483648
    %v1745 = vmul.f32 %v1744, 1.442695
    %v1746 = vpow.pop %v1745
    %v1747 = vadd.f32 %v1746, 1.0
    %v1748 = vrcp.pop %v1747
    %v1749 = vmul.f32 1.0, %v1748
    %v1750 = vtanh.pop %v1719
    %v1751 = vmul.f32 %v1749, %v1521
    %1753 = vrot.lane.b32.xlu0 %v1750, 64
    %v1754 = vpop.permute.xlu0 %1753
    %v1756 = vmul.f32 %v1749, %v1754
    %1758 = vrot.lane.b32.xlu0 %v1756, 32
    %v1759 = vpop.permute.xlu0 %1758
    %v1761 = vadd.f32 %v1751, %v1759
    %v1762 = vtanh.pop %v1761
    %1764 = vrot.lane.b32.xlu0 %v1762, 64
    %v1765 = vpop.permute.xlu0 %1764
    %v1767 = vmul.f32 %v1749, %v1765
    %1769 = vrot.lane.b32.xlu0 %v1743, 32
    %v1770 = vpop.permute.xlu0 %1769
    %1773 = vrot.lane.b32.xlu0 %v1767, 64
    %v1774 = vpop.permute.xlu0 %1773
    %v1776 = vsel %vm653, %v1770, %v1774
    %v1777 = vpack.c.bf16 %v1776, %v1776
    %s1778 = smul.addr %s1618, 4
    %s1779 = scalar_lea.vmem %s7, %s1778
    %v1780 = vld [vmem:[%s1779] sm:$0xf]
    %v1781 = vld [vmem:[%s1779 + $0x4] sm:$0xf]
    %v1782 = vld [vmem:[%s1779 + $0x8] sm:$0xf]
    %v1783 = vld [vmem:[%s1779 + $0xc] sm:$0xf]
    %v1784 = vld [vmem:[%s1779 + $0x10] sm:$0xf]
    %v1785 = vld [vmem:[%s1779 + $0x14] sm:$0xf]
    %v1786 = vld [vmem:[%s1779 + $0x18] sm:$0xf]
    %v1787 = vld [vmem:[%s1779 + $0x1c] sm:$0xf]
    %v1796 = vunpack.c.l.b16 %v1780
    %v1797 = vunpack.c.l.b16 %v1781
    %v1798 = vunpack.c.l.b16 %v1782
    %v1799 = vunpack.c.l.b16 %v1783
    %v1800 = vunpack.c.l.b16 %v1784
    %v1801 = vunpack.c.l.b16 %v1785
    %v1802 = vunpack.c.l.b16 %v1786
    %v1803 = vunpack.c.l.b16 %v1787
    %v1804 = vpack.c.b16 %v1797, %v1796
    %v1805 = vpack.c.b16 %v1799, %v1798
    %v1806 = vpack.c.b16 %v1801, %v1800
    %v1807 = vpack.c.b16 %v1803, %v1802
    %v1813 = vsel %vm851, %v1777, 0
    %1815 = vmatprep.subr.bf16.mxu0 0
    %1816 = vmatpush1.bf16.msra.mxu0 0
    %1817 = vmatprep.subr.bf16.mxu0 0
    %1818 = vmatpush1.bf16.msra.mxu0 0
    %1819 = vmatprep.subr.bf16.mxu0 0
    %1820 = vmatpush1.bf16.msra.mxu0 0
    %1821 = vmatprep.subr.bf16.mxu0 0
    %1822 = vmatpush1.bf16.msra.mxu0 0
    %1823 = vmatprep.subr.bf16.mxu0 0
    %1824 = vmatpush1.bf16.msra.mxu0 %v1807
    %1825 = vmatprep.subr.bf16.mxu0 0
    %1826 = vmatpush1.bf16.msra.mxu0 %v1806
    %1827 = vmatprep.subr.bf16.mxu0 0
    %1828 = vmatpush1.bf16.msra.mxu0 %v1805
    %1829 = vmatprep.subr.bf16.mxu0 0
    %1830 = vmatpush1.bf16.msra.mxu0 %v1804
    %1831 = vmatprep.subr.bf16.mxu0 0
    %1832 = vmatpush2.bf16.msra.mxu0 0
    %1833 = vmatprep.subr.bf16.mxu0 0
    %1834 = vmatpush2.bf16.msra.mxu0 0
    %1835 = vmatprep.subr.bf16.mxu0 0
    %1836 = vmatpush2.bf16.msra.mxu0 0
    %1837 = vmatprep.subr.bf16.mxu0 0
    %1838 = vmatpush2.bf16.msra.mxu0 0
    %1839 = vmatprep.subr.bf16.mxu0 0
    %1840 = vmatpush2.bf16.msra.mxu0 0
    %1841 = vmatprep.subr.bf16.mxu0 0
    %1842 = vmatpush2.bf16.msra.mxu0 0
    %1843 = vmatprep.subr.bf16.mxu0 0
    %1844 = vmatpush2.bf16.msra.mxu0 0
    %1845 = vmatprep.subr.bf16.mxu0 0
    %1846 = vmatpush2.bf16.msra.mxu0 0
    %1847 = vmatprep.mubr.bf16.mxu0 0
    %1848 = vmatmul.mubr.bf16.gmra.mxu0 %v1813
    %v1849 = vpop.f32.mrf.mxu0
    %v1850 = vadd.f32 0.0, %v1849
    %v1851 = vpop.f32.mrf.mxu0
    %v1852 = vpop.f32.mrf.mxu0
    %v1853 = vpop.f32.mrf.mxu0
    %1854 = vdwg.mxu0
    %v1855 = vadd.f32 %v1615, %v1850
    %s1856 = sadd.s32 %s629, 5
    %s1857 = ssub.s32 26, %s629
    %s1858 = smul.u32 %s1856, 8
    %s1859 = scalar_lea.vmem [#allocation2], %s1858
    %v1860 = vld [vmem:[%s1859] sm:$0xff]
    %s1861 = smul.u32 %s1857, 8
    %s1862 = scalar_lea.vmem [#allocation3], %s1861
    %v1863 = vld [vmem:[%s1862] sm:$0xff]
    %v1864 = vpack.c.bf16 %v1743, %v1743
    %1866 = vrot.lane.b32.xlu0 %v1864, 32
    %v1867 = vpop.permute.xlu0 %1866
    %v1869 = vsel %vm653, %v1867, 0
    %1871 = vmatprep.subr.bf16.mxu0 0
    %1872 = vmatpush1.bf16.msra.mxu0 0
    %1873 = vmatprep.subr.bf16.mxu0 0
    %1874 = vmatpush1.bf16.msra.mxu0 0
    %1875 = vmatprep.subr.bf16.mxu0 0
    %1876 = vmatpush1.bf16.msra.mxu0 0
    %1877 = vmatprep.subr.bf16.mxu0 0
    %1878 = vmatpush1.bf16.msra.mxu0 0
    %1879 = vmatprep.subr.bf16.mxu0 0
    %1880 = vmatpush1.bf16.msra.mxu0 0
    %1881 = vmatprep.subr.bf16.mxu0 0
    %1882 = vmatpush1.bf16.msra.mxu0 0
    %1883 = vmatprep.subr.bf16.mxu0 0
    %1884 = vmatpush1.bf16.msra.mxu0 %v650
    %1885 = vmatprep.subr.bf16.mxu0 0
    %1886 = vmatpush1.bf16.msra.mxu0 %v649
    %1887 = vmatprep.subr.bf16.mxu0 0
    %1888 = vmatpush2.bf16.msra.mxu0 0
    %1889 = vmatprep.subr.bf16.mxu0 0
    %1890 = vmatpush2.bf16.msra.mxu0 0
    %1891 = vmatprep.subr.bf16.mxu0 0
    %1892 = vmatpush2.bf16.msra.mxu0 0
    %1893 = vmatprep.subr.bf16.mxu0 0
    %1894 = vmatpush2.bf16.msra.mxu0 0
    %1895 = vmatprep.subr.bf16.mxu0 0
    %1896 = vmatpush2.bf16.msra.mxu0 0
    %1897 = vmatprep.subr.bf16.mxu0 0
    %1898 = vmatpush2.bf16.msra.mxu0 0
    %1899 = vmatprep.subr.bf16.mxu0 0
    %1900 = vmatpush2.bf16.msra.mxu0 0
    %1901 = vmatprep.subr.bf16.mxu0 0
    %1902 = vmatpush2.bf16.msra.mxu0 0
    %1903 = vmatprep.mubr.bf16.mxu0 0
    %1904 = vmatmul.mubr.bf16.gmra.mxu0 %v1869
    %v1905 = vpop.f32.mrf.mxu0
    %v1906 = vadd.f32 0.0, %v1905
    %v1907 = vpop.f32.mrf.mxu0
    %v1908 = vpop.f32.mrf.mxu0
    %v1909 = vpop.f32.mrf.mxu0
    %1910 = vdwg.mxu0
    %v1911 = vadd.f32 %v1860, %v1906
    %v1912 = vpack.c.bf16 %v1767, %v1767
    %1914 = vrot.lane.b32.xlu0 %v1912, 32
    %v1915 = vpop.permute.xlu0 %1914
    %v1917 = vsel %vm653, %v1915, 0
    %1919 = vmatprep.subr.bf16.mxu0 0
    %1920 = vmatpush1.bf16.msra.mxu0 0
    %1921 = vmatprep.subr.bf16.mxu0 0
    %1922 = vmatpush1.bf16.msra.mxu0 0
    %1923 = vmatprep.subr.bf16.mxu0 0
    %1924 = vmatpush1.bf16.msra.mxu0 0
    %1925 = vmatprep.subr.bf16.mxu0 0
    %1926 = vmatpush1.bf16.msra.mxu0 0
    %1927 = vmatprep.subr.bf16.mxu0 0
    %1928 = vmatpush1.bf16.msra.mxu0 0
    %1929 = vmatprep.subr.bf16.mxu0 0
    %1930 = vmatpush1.bf16.msra.mxu0 0
    %1931 = vmatprep.subr.bf16.mxu0 0
    %1932 = vmatpush1.bf16.msra.mxu0 %v711
    %1933 = vmatprep.subr.bf16.mxu0 0
    %1934 = vmatpush1.bf16.msra.mxu0 %v710
    %1935 = vmatprep.subr.bf16.mxu0 0
    %1936 = vmatpush2.bf16.msra.mxu0 0
    %1937 = vmatprep.subr.bf16.mxu0 0
    %1938 = vmatpush2.bf16.msra.mxu0 0
    %1939 = vmatprep.subr.bf16.mxu0 0
    %1940 = vmatpush2.bf16.msra.mxu0 0
    %1941 = vmatprep.subr.bf16.mxu0 0
    %1942 = vmatpush2.bf16.msra.mxu0 0
    %1943 = vmatprep.subr.bf16.mxu0 0
    %1944 = vmatpush2.bf16.msra.mxu0 0
    %1945 = vmatprep.subr.bf16.mxu0 0
    %1946 = vmatpush2.bf16.msra.mxu0 0
    %1947 = vmatprep.subr.bf16.mxu0 0
    %1948 = vmatpush2.bf16.msra.mxu0 0
    %1949 = vmatprep.subr.bf16.mxu0 0
    %1950 = vmatpush2.bf16.msra.mxu0 0
    %1951 = vmatprep.mubr.bf16.mxu0 0
    %1952 = vmatmul.mubr.bf16.gmra.mxu0 %v1917
    %v1953 = vpop.f32.mrf.mxu0
    %v1954 = vadd.f32 0.0, %v1953
    %v1955 = vpop.f32.mrf.mxu0
    %v1956 = vpop.f32.mrf.mxu0
    %v1957 = vpop.f32.mrf.mxu0
    %1958 = vdwg.mxu0
    %v1959 = vadd.f32 %v1863, %v1954
    %v1960 = vxor.u32 %v1911, 2147483648
    %v1961 = vmul.f32 %v1960, 1.442695
    %v1962 = vpow.pop %v1961
    %v1963 = vadd.f32 %v1962, 1.0
    %v1964 = vrcp.pop %v1963
    %v1965 = vmul.f32 1.0, %v1964
    %v1966 = vtanh.pop %v1911
    %v1967 = vmul.f32 %v1965, %v1737
    %1969 = vrot.lane.b32.xlu0 %v1966, 64
    %v1970 = vpop.permute.xlu0 %1969
    %v1972 = vmul.f32 %v1965, %v1970
    %1974 = vrot.lane.b32.xlu0 %v1972, 32
    %v1975 = vpop.permute.xlu0 %1974
    %v1977 = vadd.f32 %v1967, %v1975
    %v1978 = vtanh.pop %v1977
    %1980 = vrot.lane.b32.xlu0 %v1978, 64
    %v1981 = vpop.permute.xlu0 %1980
    %v1983 = vmul.f32 %v1965, %v1981
    %v1984 = vxor.u32 %v1959, 2147483648
    %v1985 = vmul.f32 %v1984, 1.442695
    %v1986 = vpow.pop %v1985
    %v1987 = vadd.f32 %v1986, 1.0
    %v1988 = vrcp.pop %v1987
    %v1989 = vmul.f32 1.0, %v1988
    %v1990 = vtanh.pop %v1959
    %v1991 = vmul.f32 %v1989, %v1761
    %1993 = vrot.lane.b32.xlu0 %v1990, 64
    %v1994 = vpop.permute.xlu0 %1993
    %v1996 = vmul.f32 %v1989, %v1994
    %1998 = vrot.lane.b32.xlu0 %v1996, 32
    %v1999 = vpop.permute.xlu0 %1998
    %v2001 = vadd.f32 %v1991, %v1999
    %v2002 = vtanh.pop %v2001
    %2004 = vrot.lane.b32.xlu0 %v2002, 64
    %v2005 = vpop.permute.xlu0 %2004
    %v2007 = vmul.f32 %v1989, %v2005
    %2009 = vrot.lane.b32.xlu0 %v1983, 32
    %v2010 = vpop.permute.xlu0 %2009
    %2013 = vrot.lane.b32.xlu0 %v2007, 64
    %v2014 = vpop.permute.xlu0 %2013
    %v2016 = vsel %vm653, %v2010, %v2014
    %v2017 = vpack.c.bf16 %v2016, %v2016
    %s2018 = smul.addr %s1858, 4
    %s2019 = scalar_lea.vmem %s7, %s2018
    %v2020 = vld [vmem:[%s2019] sm:$0xf]
    %v2021 = vld [vmem:[%s2019 + $0x4] sm:$0xf]
    %v2022 = vld [vmem:[%s2019 + $0x8] sm:$0xf]
    %v2023 = vld [vmem:[%s2019 + $0xc] sm:$0xf]
    %v2024 = vld [vmem:[%s2019 + $0x10] sm:$0xf]
    %v2025 = vld [vmem:[%s2019 + $0x14] sm:$0xf]
    %v2026 = vld [vmem:[%s2019 + $0x18] sm:$0xf]
    %v2027 = vld [vmem:[%s2019 + $0x1c] sm:$0xf]
    %v2036 = vunpack.c.l.b16 %v2020
    %v2037 = vunpack.c.l.b16 %v2021
    %v2038 = vunpack.c.l.b16 %v2022
    %v2039 = vunpack.c.l.b16 %v2023
    %v2040 = vunpack.c.l.b16 %v2024
    %v2041 = vunpack.c.l.b16 %v2025
    %v2042 = vunpack.c.l.b16 %v2026
    %v2043 = vunpack.c.l.b16 %v2027
    %v2044 = vpack.c.b16 %v2037, %v2036
    %v2045 = vpack.c.b16 %v2039, %v2038
    %v2046 = vpack.c.b16 %v2041, %v2040
    %v2047 = vpack.c.b16 %v2043, %v2042
    %v2053 = vsel %vm851, %v2017, 0
    %2055 = vmatprep.subr.bf16.mxu0 0
    %2056 = vmatpush1.bf16.msra.mxu0 0
    %2057 = vmatprep.subr.bf16.mxu0 0
    %2058 = vmatpush1.bf16.msra.mxu0 0
    %2059 = vmatprep.subr.bf16.mxu0 0
    %2060 = vmatpush1.bf16.msra.mxu0 0
    %2061 = vmatprep.subr.bf16.mxu0 0
    %2062 = vmatpush1.bf16.msra.mxu0 0
    %2063 = vmatprep.subr.bf16.mxu0 0
    %2064 = vmatpush1.bf16.msra.mxu0 %v2047
    %2065 = vmatprep.subr.bf16.mxu0 0
    %2066 = vmatpush1.bf16.msra.mxu0 %v2046
    %2067 = vmatprep.subr.bf16.mxu0 0
    %2068 = vmatpush1.bf16.msra.mxu0 %v2045
    %2069 = vmatprep.subr.bf16.mxu0 0
    %2070 = vmatpush1.bf16.msra.mxu0 %v2044
    %2071 = vmatprep.subr.bf16.mxu0 0
    %2072 = vmatpush2.bf16.msra.mxu0 0
    %2073 = vmatprep.subr.bf16.mxu0 0
    %2074 = vmatpush2.bf16.msra.mxu0 0
    %2075 = vmatprep.subr.bf16.mxu0 0
    %2076 = vmatpush2.bf16.msra.mxu0 0
    %2077 = vmatprep.subr.bf16.mxu0 0
    %2078 = vmatpush2.bf16.msra.mxu0 0
    %2079 = vmatprep.subr.bf16.mxu0 0
    %2080 = vmatpush2.bf16.msra.mxu0 0
    %2081 = vmatprep.subr.bf16.mxu0 0
    %2082 = vmatpush2.bf16.msra.mxu0 0
    %2083 = vmatprep.subr.bf16.mxu0 0
    %2084 = vmatpush2.bf16.msra.mxu0 0
    %2085 = vmatprep.subr.bf16.mxu0 0
    %2086 = vmatpush2.bf16.msra.mxu0 0
    %2087 = vmatprep.mubr.bf16.mxu0 0
    %2088 = vmatmul.mubr.bf16.gmra.mxu0 %v2053
    %v2089 = vpop.f32.mrf.mxu0
    %v2090 = vadd.f32 0.0, %v2089
    %v2091 = vpop.f32.mrf.mxu0
    %v2092 = vpop.f32.mrf.mxu0
    %v2093 = vpop.f32.mrf.mxu0
    %2094 = vdwg.mxu0
    %v2095 = vadd.f32 %v1855, %v2090
    %s2096 = sadd.s32 %s629, 6
    %s2097 = ssub.s32 25, %s629
    %s2098 = smul.u32 %s2096, 8
    %s2099 = scalar_lea.vmem [#allocation2], %s2098
    %v2100 = vld [vmem:[%s2099] sm:$0xff]
    %s2101 = smul.u32 %s2097, 8
    %s2102 = scalar_lea.vmem [#allocation3], %s2101
    %v2103 = vld [vmem:[%s2102] sm:$0xff]
    %v2104 = vpack.c.bf16 %v1983, %v1983
    %2106 = vrot.lane.b32.xlu0 %v2104, 32
    %v2107 = vpop.permute.xlu0 %2106
    %v2109 = vsel %vm653, %v2107, 0
    %2111 = vmatprep.subr.bf16.mxu0 0
    %2112 = vmatpush1.bf16.msra.mxu0 0
    %2113 = vmatprep.subr.bf16.mxu0 0
    %2114 = vmatpush1.bf16.msra.mxu0 0
    %2115 = vmatprep.subr.bf16.mxu0 0
    %2116 = vmatpush1.bf16.msra.mxu0 0
    %2117 = vmatprep.subr.bf16.mxu0 0
    %2118 = vmatpush1.bf16.msra.mxu0 0
    %2119 = vmatprep.subr.bf16.mxu0 0
    %2120 = vmatpush1.bf16.msra.mxu0 0
    %2121 = vmatprep.subr.bf16.mxu0 0
    %2122 = vmatpush1.bf16.msra.mxu0 0
    %2123 = vmatprep.subr.bf16.mxu0 0
    %2124 = vmatpush1.bf16.msra.mxu0 %v650
    %2125 = vmatprep.subr.bf16.mxu0 0
    %2126 = vmatpush1.bf16.msra.mxu0 %v649
    %2127 = vmatprep.subr.bf16.mxu0 0
    %2128 = vmatpush2.bf16.msra.mxu0 0
    %2129 = vmatprep.subr.bf16.mxu0 0
    %2130 = vmatpush2.bf16.msra.mxu0 0
    %2131 = vmatprep.subr.bf16.mxu0 0
    %2132 = vmatpush2.bf16.msra.mxu0 0
    %2133 = vmatprep.subr.bf16.mxu0 0
    %2134 = vmatpush2.bf16.msra.mxu0 0
    %2135 = vmatprep.subr.bf16.mxu0 0
    %2136 = vmatpush2.bf16.msra.mxu0 0
    %2137 = vmatprep.subr.bf16.mxu0 0
    %2138 = vmatpush2.bf16.msra.mxu0 0
    %2139 = vmatprep.subr.bf16.mxu0 0
    %2140 = vmatpush2.bf16.msra.mxu0 0
    %2141 = vmatprep.subr.bf16.mxu0 0
    %2142 = vmatpush2.bf16.msra.mxu0 0
    %2143 = vmatprep.mubr.bf16.mxu0 0
    %2144 = vmatmul.mubr.bf16.gmra.mxu0 %v2109
    %v2145 = vpop.f32.mrf.mxu0
    %v2146 = vadd.f32 0.0, %v2145
    %v2147 = vpop.f32.mrf.mxu0
    %v2148 = vpop.f32.mrf.mxu0
    %v2149 = vpop.f32.mrf.mxu0
    %2150 = vdwg.mxu0
    %v2151 = vadd.f32 %v2100, %v2146
    %v2152 = vpack.c.bf16 %v2007, %v2007
    %2154 = vrot.lane.b32.xlu0 %v2152, 32
    %v2155 = vpop.permute.xlu0 %2154
    %v2157 = vsel %vm653, %v2155, 0
    %2159 = vmatprep.subr.bf16.mxu0 0
    %2160 = vmatpush1.bf16.msra.mxu0 0
    %2161 = vmatprep.subr.bf16.mxu0 0
    %2162 = vmatpush1.bf16.msra.mxu0 0
    %2163 = vmatprep.subr.bf16.mxu0 0
    %2164 = vmatpush1.bf16.msra.mxu0 0
    %2165 = vmatprep.subr.bf16.mxu0 0
    %2166 = vmatpush1.bf16.msra.mxu0 0
    %2167 = vmatprep.subr.bf16.mxu0 0
    %2168 = vmatpush1.bf16.msra.mxu0 0
    %2169 = vmatprep.subr.bf16.mxu0 0
    %2170 = vmatpush1.bf16.msra.mxu0 0
    %2171 = vmatprep.subr.bf16.mxu0 0
    %2172 = vmatpush1.bf16.msra.mxu0 %v711
    %2173 = vmatprep.subr.bf16.mxu0 0
    %2174 = vmatpush1.bf16.msra.mxu0 %v710
    %2175 = vmatprep.subr.bf16.mxu0 0
    %2176 = vmatpush2.bf16.msra.mxu0 0
    %2177 = vmatprep.subr.bf16.mxu0 0
    %2178 = vmatpush2.bf16.msra.mxu0 0
    %2179 = vmatprep.subr.bf16.mxu0 0
    %2180 = vmatpush2.bf16.msra.mxu0 0
    %2181 = vmatprep.subr.bf16.mxu0 0
    %2182 = vmatpush2.bf16.msra.mxu0 0
    %2183 = vmatprep.subr.bf16.mxu0 0
    %2184 = vmatpush2.bf16.msra.mxu0 0
    %2185 = vmatprep.subr.bf16.mxu0 0
    %2186 = vmatpush2.bf16.msra.mxu0 0
    %2187 = vmatprep.subr.bf16.mxu0 0
    %2188 = vmatpush2.bf16.msra.mxu0 0
    %2189 = vmatprep.subr.bf16.mxu0 0
    %2190 = vmatpush2.bf16.msra.mxu0 0
    %2191 = vmatprep.mubr.bf16.mxu0 0
    %2192 = vmatmul.mubr.bf16.gmra.mxu0 %v2157
    %v2193 = vpop.f32.mrf.mxu0
    %v2194 = vadd.f32 0.0, %v2193
    %v2195 = vpop.f32.mrf.mxu0
    %v2196 = vpop.f32.mrf.mxu0
    %v2197 = vpop.f32.mrf.mxu0
    %2198 = vdwg.mxu0
    %v2199 = vadd.f32 %v2103, %v2194
    %v2200 = vxor.u32 %v2151, 2147483648
    %v2201 = vmul.f32 %v2200, 1.442695
    %v2202 = vpow.pop %v2201
    %v2203 = vadd.f32 %v2202, 1.0
    %v2204 = vrcp.pop %v2203
    %v2205 = vmul.f32 1.0, %v2204
    %v2206 = vtanh.pop %v2151
    %v2207 = vmul.f32 %v2205, %v1977
    %2209 = vrot.lane.b32.xlu0 %v2206, 64
    %v2210 = vpop.permute.xlu0 %2209
    %v2212 = vmul.f32 %v2205, %v2210
    %2214 = vrot.lane.b32.xlu0 %v2212, 32
    %v2215 = vpop.permute.xlu0 %2214
    %v2217 = vadd.f32 %v2207, %v2215
    %v2218 = vtanh.pop %v2217
    %2220 = vrot.lane.b32.xlu0 %v2218, 64
    %v2221 = vpop.permute.xlu0 %2220
    %v2223 = vmul.f32 %v2205, %v2221
    %v2224 = vxor.u32 %v2199, 2147483648
    %v2225 = vmul.f32 %v2224, 1.442695
    %v2226 = vpow.pop %v2225
    %v2227 = vadd.f32 %v2226, 1.0
    %v2228 = vrcp.pop %v2227
    %v2229 = vmul.f32 1.0, %v2228
    %v2230 = vtanh.pop %v2199
    %v2231 = vmul.f32 %v2229, %v2001
    %2233 = vrot.lane.b32.xlu0 %v2230, 64
    %v2234 = vpop.permute.xlu0 %2233
    %v2236 = vmul.f32 %v2229, %v2234
    %2238 = vrot.lane.b32.xlu0 %v2236, 32
    %v2239 = vpop.permute.xlu0 %2238
    %v2241 = vadd.f32 %v2231, %v2239
    %v2242 = vtanh.pop %v2241
    %2244 = vrot.lane.b32.xlu0 %v2242, 64
    %v2245 = vpop.permute.xlu0 %2244
    %v2247 = vmul.f32 %v2229, %v2245
    %2249 = vrot.lane.b32.xlu0 %v2223, 32
    %v2250 = vpop.permute.xlu0 %2249
    %2253 = vrot.lane.b32.xlu0 %v2247, 64
    %v2254 = vpop.permute.xlu0 %2253
    %v2256 = vsel %vm653, %v2250, %v2254
    %v2257 = vpack.c.bf16 %v2256, %v2256
    %s2258 = smul.addr %s2098, 4
    %s2259 = scalar_lea.vmem %s7, %s2258
    %v2260 = vld [vmem:[%s2259] sm:$0xf]
    %v2261 = vld [vmem:[%s2259 + $0x4] sm:$0xf]
    %v2262 = vld [vmem:[%s2259 + $0x8] sm:$0xf]
    %v2263 = vld [vmem:[%s2259 + $0xc] sm:$0xf]
    %v2264 = vld [vmem:[%s2259 + $0x10] sm:$0xf]
    %v2265 = vld [vmem:[%s2259 + $0x14] sm:$0xf]
    %v2266 = vld [vmem:[%s2259 + $0x18] sm:$0xf]
    %v2267 = vld [vmem:[%s2259 + $0x1c] sm:$0xf]
    %v2276 = vunpack.c.l.b16 %v2260
    %v2277 = vunpack.c.l.b16 %v2261
    %v2278 = vunpack.c.l.b16 %v2262
    %v2279 = vunpack.c.l.b16 %v2263
    %v2280 = vunpack.c.l.b16 %v2264
    %v2281 = vunpack.c.l.b16 %v2265
    %v2282 = vunpack.c.l.b16 %v2266
    %v2283 = vunpack.c.l.b16 %v2267
    %v2284 = vpack.c.b16 %v2277, %v2276
    %v2285 = vpack.c.b16 %v2279, %v2278
    %v2286 = vpack.c.b16 %v2281, %v2280
    %v2287 = vpack.c.b16 %v2283, %v2282
    %v2293 = vsel %vm851, %v2257, 0
    %2295 = vmatprep.subr.bf16.mxu0 0
    %2296 = vmatpush1.bf16.msra.mxu0 0
    %2297 = vmatprep.subr.bf16.mxu0 0
    %2298 = vmatpush1.bf16.msra.mxu0 0
    %2299 = vmatprep.subr.bf16.mxu0 0
    %2300 = vmatpush1.bf16.msra.mxu0 0
    %2301 = vmatprep.subr.bf16.mxu0 0
    %2302 = vmatpush1.bf16.msra.mxu0 0
    %2303 = vmatprep.subr.bf16.mxu0 0
    %2304 = vmatpush1.bf16.msra.mxu0 %v2287
    %2305 = vmatprep.subr.bf16.mxu0 0
    %2306 = vmatpush1.bf16.msra.mxu0 %v2286
    %2307 = vmatprep.subr.bf16.mxu0 0
    %2308 = vmatpush1.bf16.msra.mxu0 %v2285
    %2309 = vmatprep.subr.bf16.mxu0 0
    %2310 = vmatpush1.bf16.msra.mxu0 %v2284
    %2311 = vmatprep.subr.bf16.mxu0 0
    %2312 = vmatpush2.bf16.msra.mxu0 0
    %2313 = vmatprep.subr.bf16.mxu0 0
    %2314 = vmatpush2.bf16.msra.mxu0 0
    %2315 = vmatprep.subr.bf16.mxu0 0
    %2316 = vmatpush2.bf16.msra.mxu0 0
    %2317 = vmatprep.subr.bf16.mxu0 0
    %2318 = vmatpush2.bf16.msra.mxu0 0
    %2319 = vmatprep.subr.bf16.mxu0 0
    %2320 = vmatpush2.bf16.msra.mxu0 0
    %2321 = vmatprep.subr.bf16.mxu0 0
    %2322 = vmatpush2.bf16.msra.mxu0 0
    %2323 = vmatprep.subr.bf16.mxu0 0
    %2324 = vmatpush2.bf16.msra.mxu0 0
    %2325 = vmatprep.subr.bf16.mxu0 0
    %2326 = vmatpush2.bf16.msra.mxu0 0
    %2327 = vmatprep.mubr.bf16.mxu0 0
    %2328 = vmatmul.mubr.bf16.gmra.mxu0 %v2293
    %v2329 = vpop.f32.mrf.mxu0
    %v2330 = vadd.f32 0.0, %v2329
    %v2331 = vpop.f32.mrf.mxu0
    %v2332 = vpop.f32.mrf.mxu0
    %v2333 = vpop.f32.mrf.mxu0
    %2334 = vdwg.mxu0
    %v2335 = vadd.f32 %v2095, %v2330
    %s2336 = sadd.s32 %s629, 7
    %s2337 = ssub.s32 24, %s629
    %s2338 = smul.u32 %s2336, 8
    %s2339 = scalar_lea.vmem [#allocation2], %s2338
    %v2340 = vld [vmem:[%s2339] sm:$0xff]
    %s2341 = smul.u32 %s2337, 8
    %s2342 = scalar_lea.vmem [#allocation3], %s2341
    %v2343 = vld [vmem:[%s2342] sm:$0xff]
    %v2344 = vpack.c.bf16 %v2223, %v2223
    %2346 = vrot.lane.b32.xlu0 %v2344, 32
    %v2347 = vpop.permute.xlu0 %2346
    %v2349 = vsel %vm653, %v2347, 0
    %2351 = vmatprep.subr.bf16.mxu0 0
    %2352 = vmatpush1.bf16.msra.mxu0 0
    %2353 = vmatprep.subr.bf16.mxu0 0
    %2354 = vmatpush1.bf16.msra.mxu0 0
    %2355 = vmatprep.subr.bf16.mxu0 0
    %2356 = vmatpush1.bf16.msra.mxu0 0
    %2357 = vmatprep.subr.bf16.mxu0 0
    %2358 = vmatpush1.bf16.msra.mxu0 0
    %2359 = vmatprep.subr.bf16.mxu0 0
    %2360 = vmatpush1.bf16.msra.mxu0 0
    %2361 = vmatprep.subr.bf16.mxu0 0
    %2362 = vmatpush1.bf16.msra.mxu0 0
    %2363 = vmatprep.subr.bf16.mxu0 0
    %2364 = vmatpush1.bf16.msra.mxu0 %v650
    %2365 = vmatprep.subr.bf16.mxu0 0
    %2366 = vmatpush1.bf16.msra.mxu0 %v649
    %2367 = vmatprep.subr.bf16.mxu0 0
    %2368 = vmatpush2.bf16.msra.mxu0 0
    %2369 = vmatprep.subr.bf16.mxu0 0
    %2370 = vmatpush2.bf16.msra.mxu0 0
    %2371 = vmatprep.subr.bf16.mxu0 0
    %2372 = vmatpush2.bf16.msra.mxu0 0
    %2373 = vmatprep.subr.bf16.mxu0 0
    %2374 = vmatpush2.bf16.msra.mxu0 0
    %2375 = vmatprep.subr.bf16.mxu0 0
    %2376 = vmatpush2.bf16.msra.mxu0 0
    %2377 = vmatprep.subr.bf16.mxu0 0
    %2378 = vmatpush2.bf16.msra.mxu0 0
    %2379 = vmatprep.subr.bf16.mxu0 0
    %2380 = vmatpush2.bf16.msra.mxu0 0
    %2381 = vmatprep.subr.bf16.mxu0 0
    %2382 = vmatpush2.bf16.msra.mxu0 0
    %2383 = vmatprep.mubr.bf16.mxu0 0
    %2384 = vmatmul.mubr.bf16.gmra.mxu0 %v2349
    %v2385 = vpop.f32.mrf.mxu0
    %v2386 = vadd.f32 0.0, %v2385
    %v2387 = vpop.f32.mrf.mxu0
    %v2388 = vpop.f32.mrf.mxu0
    %v2389 = vpop.f32.mrf.mxu0
    %2390 = vdwg.mxu0
    %v2391 = vadd.f32 %v2340, %v2386
    %v2392 = vpack.c.bf16 %v2247, %v2247
    %2394 = vrot.lane.b32.xlu0 %v2392, 32
    %v2395 = vpop.permute.xlu0 %2394
    %v2397 = vsel %vm653, %v2395, 0
    %2399 = vmatprep.subr.bf16.mxu0 0
    %2400 = vmatpush1.bf16.msra.mxu0 0
    %2401 = vmatprep.subr.bf16.mxu0 0
    %2402 = vmatpush1.bf16.msra.mxu0 0
    %2403 = vmatprep.subr.bf16.mxu0 0
    %2404 = vmatpush1.bf16.msra.mxu0 0
    %2405 = vmatprep.subr.bf16.mxu0 0
    %2406 = vmatpush1.bf16.msra.mxu0 0
    %2407 = vmatprep.subr.bf16.mxu0 0
    %2408 = vmatpush1.bf16.msra.mxu0 0
    %2409 = vmatprep.subr.bf16.mxu0 0
    %2410 = vmatpush1.bf16.msra.mxu0 0
    %2411 = vmatprep.subr.bf16.mxu0 0
    %2412 = vmatpush1.bf16.msra.mxu0 %v711
    %2413 = vmatprep.subr.bf16.mxu0 0
    %2414 = vmatpush1.bf16.msra.mxu0 %v710
    %2415 = vmatprep.subr.bf16.mxu0 0
    %2416 = vmatpush2.bf16.msra.mxu0 0
    %2417 = vmatprep.subr.bf16.mxu0 0
    %2418 = vmatpush2.bf16.msra.mxu0 0
    %2419 = vmatprep.subr.bf16.mxu0 0
    %2420 = vmatpush2.bf16.msra.mxu0 0
    %2421 = vmatprep.subr.bf16.mxu0 0
    %2422 = vmatpush2.bf16.msra.mxu0 0
    %2423 = vmatprep.subr.bf16.mxu0 0
    %2424 = vmatpush2.bf16.msra.mxu0 0
    %2425 = vmatprep.subr.bf16.mxu0 0
    %2426 = vmatpush2.bf16.msra.mxu0 0
    %2427 = vmatprep.subr.bf16.mxu0 0
    %2428 = vmatpush2.bf16.msra.mxu0 0
    %2429 = vmatprep.subr.bf16.mxu0 0
    %2430 = vmatpush2.bf16.msra.mxu0 0
    %2431 = vmatprep.mubr.bf16.mxu0 0
    %2432 = vmatmul.mubr.bf16.gmra.mxu0 %v2397
    %v2433 = vpop.f32.mrf.mxu0
    %v2434 = vadd.f32 0.0, %v2433
    %v2435 = vpop.f32.mrf.mxu0
    %v2436 = vpop.f32.mrf.mxu0
    %v2437 = vpop.f32.mrf.mxu0
    %2438 = vdwg.mxu0
    %v2439 = vadd.f32 %v2343, %v2434
    %v2440 = vxor.u32 %v2391, 2147483648
    %v2441 = vmul.f32 %v2440, 1.442695
    %v2442 = vpow.pop %v2441
    %v2443 = vadd.f32 %v2442, 1.0
    %v2444 = vrcp.pop %v2443
    %v2445 = vmul.f32 1.0, %v2444
    %v2446 = vtanh.pop %v2391
    %v2447 = vmul.f32 %v2445, %v2217
    %2449 = vrot.lane.b32.xlu0 %v2446, 64
    %v2450 = vpop.permute.xlu0 %2449
    %v2452 = vmul.f32 %v2445, %v2450
    %2454 = vrot.lane.b32.xlu0 %v2452, 32
    %v2455 = vpop.permute.xlu0 %2454
    %v2457 = vadd.f32 %v2447, %v2455
    %v2458 = vtanh.pop %v2457
    %2460 = vrot.lane.b32.xlu0 %v2458, 64
    %v2461 = vpop.permute.xlu0 %2460
    %v2463 = vmul.f32 %v2445, %v2461
    %v2464 = vxor.u32 %v2439, 2147483648
    %v2465 = vmul.f32 %v2464, 1.442695
    %v2466 = vpow.pop %v2465
    %v2467 = vadd.f32 %v2466, 1.0
    %v2468 = vrcp.pop %v2467
    %v2469 = vmul.f32 1.0, %v2468
    %v2470 = vtanh.pop %v2439
    %v2471 = vmul.f32 %v2469, %v2241
    %2473 = vrot.lane.b32.xlu0 %v2470, 64
    %v2474 = vpop.permute.xlu0 %2473
    %v2476 = vmul.f32 %v2469, %v2474
    %2478 = vrot.lane.b32.xlu0 %v2476, 32
    %v2479 = vpop.permute.xlu0 %2478
    %v2481 = vadd.f32 %v2471, %v2479
    %v2482 = vtanh.pop %v2481
    %2484 = vrot.lane.b32.xlu0 %v2482, 64
    %v2485 = vpop.permute.xlu0 %2484
    %v2487 = vmul.f32 %v2469, %v2485
    %2489 = vrot.lane.b32.xlu0 %v2463, 32
    %v2490 = vpop.permute.xlu0 %2489
    %2493 = vrot.lane.b32.xlu0 %v2487, 64
    %v2494 = vpop.permute.xlu0 %2493
    %v2496 = vsel %vm653, %v2490, %v2494
    %v2497 = vpack.c.bf16 %v2496, %v2496
    %s2498 = smul.addr %s2338, 4
    %s2499 = scalar_lea.vmem %s7, %s2498
    %v2500 = vld [vmem:[%s2499] sm:$0xf]
    %v2501 = vld [vmem:[%s2499 + $0x4] sm:$0xf]
    %v2502 = vld [vmem:[%s2499 + $0x8] sm:$0xf]
    %v2503 = vld [vmem:[%s2499 + $0xc] sm:$0xf]
    %v2504 = vld [vmem:[%s2499 + $0x10] sm:$0xf]
    %v2505 = vld [vmem:[%s2499 + $0x14] sm:$0xf]
    %v2506 = vld [vmem:[%s2499 + $0x18] sm:$0xf]
    %v2507 = vld [vmem:[%s2499 + $0x1c] sm:$0xf]
    %v2516 = vunpack.c.l.b16 %v2500
    %v2517 = vunpack.c.l.b16 %v2501
    %v2518 = vunpack.c.l.b16 %v2502
    %v2519 = vunpack.c.l.b16 %v2503
    %v2520 = vunpack.c.l.b16 %v2504
    %v2521 = vunpack.c.l.b16 %v2505
    %v2522 = vunpack.c.l.b16 %v2506
    %v2523 = vunpack.c.l.b16 %v2507
    %v2524 = vpack.c.b16 %v2517, %v2516
    %v2525 = vpack.c.b16 %v2519, %v2518
    %v2526 = vpack.c.b16 %v2521, %v2520
    %v2527 = vpack.c.b16 %v2523, %v2522
    %v2533 = vsel %vm851, %v2497, 0
    %2535 = vmatprep.subr.bf16.mxu0 0
    %2536 = vmatpush1.bf16.msra.mxu0 0
    %2537 = vmatprep.subr.bf16.mxu0 0
    %2538 = vmatpush1.bf16.msra.mxu0 0
    %2539 = vmatprep.subr.bf16.mxu0 0
    %2540 = vmatpush1.bf16.msra.mxu0 0
    %2541 = vmatprep.subr.bf16.mxu0 0
    %2542 = vmatpush1.bf16.msra.mxu0 0
    %2543 = vmatprep.subr.bf16.mxu0 0
    %2544 = vmatpush1.bf16.msra.mxu0 %v2527
    %2545 = vmatprep.subr.bf16.mxu0 0
    %2546 = vmatpush1.bf16.msra.mxu0 %v2526
    %2547 = vmatprep.subr.bf16.mxu0 0
    %2548 = vmatpush1.bf16.msra.mxu0 %v2525
    %2549 = vmatprep.subr.bf16.mxu0 0
    %2550 = vmatpush1.bf16.msra.mxu0 %v2524
    %2551 = vmatprep.subr.bf16.mxu0 0
    %2552 = vmatpush2.bf16.msra.mxu0 0
    %2553 = vmatprep.subr.bf16.mxu0 0
    %2554 = vmatpush2.bf16.msra.mxu0 0
    %2555 = vmatprep.subr.bf16.mxu0 0
    %2556 = vmatpush2.bf16.msra.mxu0 0
    %2557 = vmatprep.subr.bf16.mxu0 0
    %2558 = vmatpush2.bf16.msra.mxu0 0
    %2559 = vmatprep.subr.bf16.mxu0 0
    %2560 = vmatpush2.bf16.msra.mxu0 0
    %2561 = vmatprep.subr.bf16.mxu0 0
    %2562 = vmatpush2.bf16.msra.mxu0 0
    %2563 = vmatprep.subr.bf16.mxu0 0
    %2564 = vmatpush2.bf16.msra.mxu0 0
    %2565 = vmatprep.subr.bf16.mxu0 0
    %2566 = vmatpush2.bf16.msra.mxu0 0
    %2567 = vmatprep.mubr.bf16.mxu0 0
    %2568 = vmatmul.mubr.bf16.gmra.mxu0 %v2533
    %v2569 = vpop.f32.mrf.mxu0
    %v2570 = vadd.f32 0.0, %v2569
    %v2571 = vpop.f32.mrf.mxu0
    %v2572 = vpop.f32.mrf.mxu0
    %v2573 = vpop.f32.mrf.mxu0
    %2574 = vdwg.mxu0
    %v2575 = vadd.f32 %v2335, %v2570
  $region42: #{crosscode2vec_lack_atten.2} parent=0 // loop_footer
    %s623 = sadd.s32 1, %s619
  $region43: #{crosscode2vec_lack_atten.2} parent=0 // loop_footer_branch
    %618 = sbr.rel target = $region39
  $region44: #{crosscode2vec_lack_atten.2} parent=0 // loop_exit
    _
  %v2576 = vld [vmem:[%s8] sm:$0x1]
  %v2578 = vlaneseq
  %v2579 = vshrl.u32 %v2578, 7
  %v2580 = vsub.s32 0, %v2579
  %v2581 = vrot.slane %v2576, %v2580
  %v2583 = vadd.f32 %v628, %v2581
  %v2584 = vpack.c.bf16 %v2583, %v2583
  %2585 = vst [vmem:[%s9] sm:$0xf] %v2584
  // Predicated region
  $region45: #{crosscode2vec_lack_atten.2} parent=0 // pred_check
    _
  $region46: #{crosscode2vec_lack_atten.2} parent=0 // pred_check_branch
    %2587 = sbr.rel (0) target = $region48
  $region47: #{crosscode2vec_lack_atten.2} parent=0 // pred_region
    _
  $region48: #{crosscode2vec_lack_atten.2} parent=0 // pred_fallthru
    _
  // Predicated region
  $region49: #{crosscode2vec_lack_atten.2} parent=0 // pred_check
    _
  $region50: #{crosscode2vec_lack_atten.2} parent=0 // pred_check_branch
    %2589 = sbr.rel (0) target = $region52
  $region51: #{crosscode2vec_lack_atten.2} parent=0 // pred_region
    _
  $region52: #{crosscode2vec_lack_atten.2} parent=0 // pred_fallthru
    _

</llo_original>
